<compile_context>
chip_gen: v6e
topology: v6e:2x2x1
jax: 0.10.0
libtpu: 0.0.40
codegen_flags: <defaults>
</compile_context>

<pallas_src>
import functools
import math

import jax
import jax.numpy as jnp
import numpy as np
from jax import lax
from jax.experimental import pallas as pl
from jax.experimental.pallas import tpu as pltpu


# ---------------------------------------------------------------------------
# Pallas kernel: one grid step == one (LSTM -> TransformerEncoderLayer) layer.
# ---------------------------------------------------------------------------
def _attn_a2c_kernel(
        # data (constant across the layer grid, DMA'd once)
        x0_ref, act_ref, actn_ref,
        # per-layer stacked backbone weights (leading layer dim squeezed by BlockSpec)
        wih_ref, whh_ref, lstmb_ref,
        inw_ref, inb_ref, outw_ref, vecs_ref,
        ffw1_ref, ffb1_ref, ffw2_ref,
        # fused head weights (constant across the grid)
        aw1_ref, aw2_ref, aw3_ref, cw1_ref, cw2_ref, cw3_ref, hb_ref,
        # outputs
        mu_ref, q_ref,
        # scratch: backbone activations carried across grid steps, (S*N, E)
        x_scr,
        *, nhead):
    l = pl.program_id(0)
    n_layers = pl.num_programs(0)

    SN, E = x0_ref.shape
    S, A = act_ref.shape
    N = SN // S
    H = E                                    # hidden_size == input_size in the module
    hd = E // nhead
    q_scale = 1.0 / math.sqrt(hd)
    eps = 1e-5

    leaky = lambda v: jnp.maximum(v, 0.01 * v)
    relu = lambda v: jnp.maximum(v, 0.0)

    def mm(a, b):
        return jnp.dot(a, b, preferred_element_type=jnp.float32)

    def layer_norm(v, g, b):
        m = jnp.mean(v, axis=-1, keepdims=True)
        d = v - m
        var = jnp.mean(d * d, axis=-1, keepdims=True)
        return d * lax.rsqrt(var + eps) * g + b

    # ------------------------- load this layer's input ---------------------
    @pl.when(l == 0)
    def _():
        x_scr[...] = x0_ref[...]

    x = x_scr[...]                           # (S*N, E), rows ordered s*N + n

    # -------------------------------- LSTM ----------------------------------
    wih = wih_ref[...]                       # (E, 4H)
    whh = whh_ref[...]                       # (H, 4H)
    xg = mm(x, wih) + lstmb_ref[...]         # input proj for ALL steps, (b_ih+b_hh) folded in

    h = jnp.zeros((N, H), jnp.float32)
    c = jnp.zeros((N, H), jnp.float32)
    for s in range(S):                       # short static recurrence: fully unrolled
        g = xg[s * N:(s + 1) * N, :] + mm(h, whh)      # ONE MXU op per step (4H = 128 lanes)
        gi = jax.nn.sigmoid(g[:, 0 * H:1 * H])
        gf = jax.nn.sigmoid(g[:, 1 * H:2 * H])
        gg = jnp.tanh(g[:, 2 * H:3 * H])
        go = jax.nn.sigmoid(g[:, 3 * H:4 * H])
        c = gf * c + gi * gg
        h = go * jnp.tanh(c)
        x_scr[s * N:(s + 1) * N, :] = h      # step output straight into the scratch (no concat)
    x = x_scr[...]                           # (S*N, H) LSTM outputs

    # ----------------- TransformerEncoderLayer (post-norm, eval) -----------
    vecs = vecs_ref[...]                     # (6, E) packed per-layer vectors
    out_b, ln1_g, ln1_b = vecs[0:1, :], vecs[1:2, :], vecs[2:3, :]
    ff_b2, ln2_g, ln2_b = vecs[3:4, :], vecs[4:5, :], vecs[5:6, :]

    qkv = mm(x, inw_ref[...]) + inb_ref[...]              # (S*N, 3E)
    q_all = qkv[:, 0:E] * q_scale
    k_all = qkv[:, E:2 * E]
    v_all = qkv[:, 2 * E:3 * E]

    # keys/values of source position t tiled over all S query blocks -> (S*N, E)
    k_t = [jnp.concatenate([k_all[t * N:(t + 1) * N, :]] * S, axis=0) for t in range(S)]
    v_t = [jnp.concatenate([v_all[t * N:(t + 1) * N, :]] * S, axis=0) for t in range(S)]

    head_outs = []
    for hx in range(nhead):
        lo = hx * hd
        qh = q_all[:, lo:lo + hd]
        # all scores of this head as ONE (S*N, S) tensor -> batched max/exp/sum softmax
        sc = jnp.concatenate(
            [jnp.sum(qh * k_t[t][:, lo:lo + hd], axis=-1, keepdims=True) for t in range(S)],
            axis=1)
        mxs = jnp.max(sc, axis=-1, keepdims=True)
        es = jnp.exp(sc - mxs)
        w = es / jnp.sum(es, axis=-1, keepdims=True)
        o = w[:, 0:1] * v_t[0][:, lo:lo + hd]
        for t in range(1, S):
            o = o + w[:, t:t + 1] * v_t[t][:, lo:lo + hd]
        head_outs.append(o)                                # (S*N, hd)
    att = jnp.concatenate(head_outs, axis=1)               # (S*N, E)
    att = mm(att, outw_ref[...]) + out_b

    y = layer_norm(x + att, ln1_g, ln1_b)
    w1 = ffw1_ref[...].astype(jnp.float32)                 # (E, F)  (may be stored in bf16)
    w2 = ffw2_ref[...].astype(jnp.float32)                 # (F, E)
    ff = mm(relu(mm(y, w1) + ffb1_ref[...]), w2) + ff_b2
    x_out = layer_norm(y + ff, ln2_g, ln2_b)
    x_scr[...] = x_out                                     # carry to next layer / heads

    # -------------------------------- heads ---------------------------------
    @pl.when(l == n_layers - 1)
    def _():
        # attn_out[:, -1, :] under batch_first=False == keep batch column N-1 at every seq
        # position; done with one tiny selection matmul (no per-row slices + concat).
        rsel = lax.broadcasted_iota(jnp.int32, (S, SN), 0)
        csel = lax.broadcasted_iota(jnp.int32, (S, SN), 1)
        sel = (csel == rsel * N + (N - 1)).astype(jnp.float32)
        feats = mm(sel, x_out)                             # (S, E)

        act = act_ref[...]
        actn = actn_ref[...]
        hb = hb_ref[...]                                   # (6, >=128) packed head biases
        aw1 = aw1_ref[...]; aw2 = aw2_ref[...]; aw3 = aw3_ref[...]
        cw1 = cw1_ref[...]; cw2 = cw2_ref[...]; cw3 = cw3_ref[...]
        a_b1 = hb[0:1, 0:aw1.shape[1]]
        a_b2 = hb[1:2, 0:aw2.shape[1]]
        a_b3 = hb[2:3, 0:aw3.shape[1]]
        c_b1 = hb[3:4, 0:cw1.shape[1]]
        c_b2 = hb[4:5, 0:cw2.shape[1]]
        c_b3 = hb[5:6, 0:cw3.shape[1]]

        # fused actor: tan / sig branches share the matmuls (block-diagonal weights; exact)
        h1 = leaky(mm(feats, aw1) + a_b1)                  # (S, 128): [tan1 | sig1]
        h2 = leaky(mm(h1, aw2) + a_b2)                     # (S, 32) : [tan2 | sig2]
        h3 = mm(h2, aw3) + a_b3                            # (S, 2A) : [tan3 | sig3]
        tan_mu = jnp.tanh(h3[:, 0:A])
        sig_mu = jax.nn.sigmoid(h3[:, A:2 * A])
        logits = tan_mu * (1.0 - sig_mu) + sig_mu * act
        mmax = jnp.max(logits, axis=1, keepdims=True)
        ev = jnp.exp(logits - mmax)
        mu_ref[...] = ev / jnp.sum(ev, axis=1, keepdims=True)      # softmax(dim=1)

        # critic: ONE matmul over the concatenated operand
        cat = jnp.concatenate([feats, act, actn], axis=1)  # (S, E + 2A)
        qv = leaky(mm(cat, cw1) + c_b1)
        qv = leaky(mm(qv, cw2) + c_b2)
        q_ref[...] = mm(qv, cw3) + c_b3


# ---------------------------------------------------------------------------
# One-time parameter re-layout / packing (cached; not redone per forward call).
# ---------------------------------------------------------------------------
def prepare_params(p, *, ffn_weight_dtype=jnp.float32):
    """ffn_weight_dtype=jnp.bfloat16 halves the dominant FFN weight DMA (v5e win);
    re-validate tolerances before enabling."""
    f32 = jnp.float32

    def wT(w):
        return jnp.asarray(w, f32).T

    def row(b):
        return jnp.asarray(b, f32).reshape(1, -1)

    def block_diag(a, b):
        out = jnp.zeros((a.shape[0] + b.shape[0], a.shape[1] + b.shape[1]), f32)
        return out.at[:a.shape[0], :a.shape[1]].set(a).at[a.shape[0]:, a.shape[1]:].set(b)

    layers = (1, 2, 3)
    # stacked per-layer backbone weights
    w_ih = jnp.stack([wT(p[f"lstm{i}_w_ih"]) for i in layers])                       # (3, E, 4H)
    w_hh = jnp.stack([wT(p[f"lstm{i}_w_hh"]) for i in layers])                       # (3, H, 4H)
    lstm_b = jnp.stack([row(p[f"lstm{i}_b_ih"] + p[f"lstm{i}_b_hh"]) for i in layers])  # (3,1,4H)
    in_w = jnp.stack([wT(p[f"attn{i}_in_w"]) for i in layers])                       # (3, E, 3E)
    in_b = jnp.stack([row(p[f"attn{i}_in_b"]) for i in layers])                      # (3, 1, 3E)
    out_w = jnp.stack([wT(p[f"attn{i}_out_w"]) for i in layers])                     # (3, E, E)
    vecs = jnp.stack([jnp.stack([
        jnp.asarray(p[f"attn{i}_out_b"], f32),
        jnp.asarray(p[f"ln{i}a_g"], f32),
        jnp.asarray(p[f"ln{i}a_b"], f32),
        jnp.asarray(p[f"ff{i}_b2"], f32),
        jnp.asarray(p[f"ln{i}b_g"], f32),
        jnp.asarray(p[f"ln{i}b_b"], f32)]) for i in layers])                         # (3, 6, E)
    ff_w1 = jnp.stack([wT(p[f"ff{i}_w1"]) for i in layers]).astype(ffn_weight_dtype)  # (3, E, F)
    ff_b1 = jnp.stack([row(p[f"ff{i}_b1"]) for i in layers])                          # (3, 1, F)
    ff_w2 = jnp.stack([wT(p[f"ff{i}_w2"]) for i in layers]).astype(ffn_weight_dtype)  # (3, F, E)

    # fused actor head weights (tan branch | sig branch)
    aw1 = jnp.concatenate([wT(p["tan1_w"]), wT(p["sig1_w"])], axis=1)     # (E, 128)
    aw2 = block_diag(wT(p["tan2_w"]), wT(p["sig2_w"]))                    # (128, 32)
    aw3 = block_diag(wT(p["tan3_w"]), wT(p["sig3_w"]))                    # (32, 2A)
    cw1 = wT(p["q1_w"])                                                   # (E+2A, 64)
    cw2 = wT(p["q2_w"])                                                   # (64, 8)
    cw3 = wT(p["q3_w"])                                                   # (8, 1)

    # all head biases packed into one small 2-D array (one row per bias, zero-padded lanes)
    rows_ = [
        jnp.concatenate([jnp.asarray(p["tan1_b"], f32), jnp.asarray(p["sig1_b"], f32)]),
        jnp.concatenate([jnp.asarray(p["tan2_b"], f32), jnp.asarray(p["sig2_b"], f32)]),
        jnp.concatenate([jnp.asarray(p["tan3_b"], f32), jnp.asarray(p["sig3_b"], f32)]),
        jnp.asarray(p["q1_b"], f32), jnp.asarray(p["q2_b"], f32), jnp.asarray(p["q3_b"], f32)]
    lanes = max(128, int(-(-max(r.shape[0] for r in rows_) // 128) * 128))
    hb = jnp.stack([jnp.pad(r, (0, lanes - r.shape[0])) for r in rows_])  # (6, lanes)

    return (w_ih, w_hh, lstm_b, in_w, in_b, out_w, vecs, ff_w1, ff_b1, ff_w2,
            aw1, aw2, aw3, cw1, cw2, cw3, hb)


# ---------------------------------------------------------------------------
# Forward wrapper: single pallas_call, grid over the 3 backbone layers.
# ---------------------------------------------------------------------------
@functools.partial(jax.jit, static_argnames=("nhead",))
def attn_a2c_forward(prepped, env_state, action_state, action=None, nhead=2):
    S, N, E = env_state.shape
    A = action_state.shape[1]
    assert E % nhead == 0
    if action is None:
        action = jnp.zeros_like(action_state)

    (w_ih, w_hh, lstm_b, in_w, in_b, out_w, vecs, ff_w1, ff_b1, ff_w2,
     aw1, aw2, aw3, cw1, cw2, cw3, hb) = prepped
    L = w_ih.shape[0]

    x0 = env_state.astype(jnp.float32).reshape(S * N, E)     # rows = s*N + n
    act = action_state.astype(jnp.float32)
    actn = action.astype(jnp.float32)

    def L3(a):   # per-layer stacked weight: select layer l, squeeze the layer dim
        return pl.BlockSpec((None,) + a.shape[1:], lambda l: (l, 0, 0))

    def C2(a):   # layer-independent 2-D input: constant block index -> DMA'd once
        return pl.BlockSpec(a.shape, lambda l: (0, 0))

    args = (x0, act, actn, w_ih, w_hh, lstm_b, in_w, in_b, out_w, vecs,
            ff_w1, ff_b1, ff_w2, aw1, aw2, aw3, cw1, cw2, cw3, hb)
    in_specs = [C2(x0), C2(act), C2(actn),
                L3(w_ih), L3(w_hh), L3(lstm_b),
                L3(in_w), L3(in_b), L3(out_w), L3(vecs),
                L3(ff_w1), L3(ff_b1), L3(ff_w2),
                C2(aw1), C2(aw2), C2(aw3), C2(cw1), C2(cw2), C2(cw3), C2(hb)]

    kernel = functools.partial(_attn_a2c_kernel, nhead=nhead)
    mu, q = pl.pallas_call(
        kernel,
        out_shape=(jax.ShapeDtypeStruct((S, A), jnp.float32),
                   jax.ShapeDtypeStruct((S, 1), jnp.float32)),
        grid=(L,),
        in_specs=in_specs,
        out_specs=(pl.BlockSpec((S, A), lambda l: (0, 0)),
                   pl.BlockSpec((S, 1), lambda l: (0, 0))),
        scratch_shapes=[pltpu.VMEM((S * N, E), jnp.float32)],
        compiler_params=pltpu.CompilerParams(dimension_semantics=("arbitrary",)),
    )(*args)
    return mu, q


def attn_a2c_apply(prepped, env_state, action_state, action=None, out_type="actor", nhead=2):
    """Convenience wrapper mirroring the nn.Module call (returns one head)."""
    mu, q = attn_a2c_forward(prepped, env_state, action_state, action, nhead=nhead)
    return mu if out_type == "actor" else q


# ---------------------------------------------------------------------------
# Deterministic parameter construction (shapes from the nn.Module __init__,
# dim_feedforward = PyTorch default 2048, LayerNorm init weight=1 / bias=0)
# ---------------------------------------------------------------------------
def make_params(key, input_size, action_size, ffn=2048):
    E = input_size
    H = E
    A = action_size
    shapes = {}
    for i in (1, 2, 3):
        shapes[f"lstm{i}_w_ih"] = (4 * H, E)
        shapes[f"lstm{i}_w_hh"] = (4 * H, H)
        shapes[f"lstm{i}_b_ih"] = (4 * H,)
        shapes[f"lstm{i}_b_hh"] = (4 * H,)
        shapes[f"attn{i}_in_w"] = (3 * E, E)
        shapes[f"attn{i}_in_b"] = (3 * E,)
        shapes[f"attn{i}_out_w"] = (E, E)
        shapes[f"attn{i}_out_b"] = (E,)
        shapes[f"ff{i}_w1"] = (ffn, E)
        shapes[f"ff{i}_b1"] = (ffn,)
        shapes[f"ff{i}_w2"] = (E, ffn)
        shapes[f"ff{i}_b2"] = (E,)
    shapes.update({
        "tan1_w": (64, E), "tan1_b": (64,),
        "tan2_w": (16, 64), "tan2_b": (16,),
        "tan3_w": (A, 16), "tan3_b": (A,),
        "sig1_w": (64, E), "sig1_b": (64,),
        "sig2_w": (16, 64), "sig2_b": (16,),
        "sig3_w": (A, 16), "sig3_b": (A,),
        "q1_w": (64, E + 2 * A), "q1_b": (64,),
        "q2_w": (8, 64), "q2_b": (8,),
        "q3_w": (1, 8), "q3_b": (1,),
    })
    params = {}
    keys = jax.random.split(key, len(shapes))
    for (name, shape), k in zip(shapes.items(), keys):
        fan_in = shape[-1] if len(shape) > 1 else shape[0]
        scale = 1.0 / math.sqrt(max(fan_in, 1))
        params[name] = jax.random.uniform(k, shape, jnp.float32, -scale, scale)
    for i in (1, 2, 3):
        params[f"ln{i}a_g"] = jnp.ones((E,), jnp.float32)
        params[f"ln{i}a_b"] = jnp.zeros((E,), jnp.float32)
        params[f"ln{i}b_g"] = jnp.ones((E,), jnp.float32)
        params[f"ln{i}b_b"] = jnp.zeros((E,), jnp.float32)
    return params


# ---------------------------------------------------------------------------
# Pure-JAX reference (literal PyTorch semantics, eval mode) for verification
# ---------------------------------------------------------------------------
def reference_forward(p, env_state, action_state, action, nhead=2):
    S, N, E = env_state.shape
    H = E
    hd = E // nhead
    x = env_state.astype(jnp.float32)                    # (S, N, E): seq axis 0, batch axis 1

    def lstm(x, w_ih, w_hh, b_ih, b_hh):
        h = jnp.zeros((N, H), jnp.float32)
        c = jnp.zeros((N, H), jnp.float32)
        outs = []
        for s in range(S):
            g = x[s] @ w_ih.T + h @ w_hh.T + b_ih + b_hh
            i = jax.nn.sigmoid(g[:, :H]); f = jax.nn.sigmoid(g[:, H:2 * H])
            gg = jnp.tanh(g[:, 2 * H:3 * H]); o = jax.nn.sigmoid(g[:, 3 * H:])
            c = f * c + i * gg
            h = o * jnp.tanh(c)
            outs.append(h)
        return jnp.stack(outs, axis=0)

    def layer_norm(v, g, b):
        m = v.mean(-1, keepdims=True)
        var = ((v - m) ** 2).mean(-1, keepdims=True)
        return (v - m) * jax.lax.rsqrt(var + 1e-5) * g + b

    def encoder(x, i):
        qkv = x @ p[f"attn{i}_in_w"].T + p[f"attn{i}_in_b"]      # (S, N, 3E)
        q, k, v = qkv[..., :E], qkv[..., E:2 * E], qkv[..., 2 * E:]

        def split(t):                                            # (S, N, E) -> (N*nh, S, hd)
            t = t.reshape(S, N, nhead, hd)
            return jnp.transpose(t, (1, 2, 0, 3)).reshape(N * nhead, S, hd)

        qh, kh, vh = split(q), split(k), split(v)
        sc = jnp.einsum("bsd,btd->bst", qh, kh) / jnp.sqrt(float(hd))
        w = jax.nn.softmax(sc, axis=-1)
        o = jnp.einsum("bst,btd->bsd", w, vh)
        o = o.reshape(N, nhead, S, hd).transpose(2, 0, 1, 3).reshape(S, N, E)
        o = o @ p[f"attn{i}_out_w"].T + p[f"attn{i}_out_b"]
        x = layer_norm(x + o, p[f"ln{i}a_g"], p[f"ln{i}a_b"])
        ff = jax.nn.relu(x @ p[f"ff{i}_w1"].T + p[f"ff{i}_b1"]) @ p[f"ff{i}_w2"].T + p[f"ff{i}_b2"]
        return layer_norm(x + ff, p[f"ln{i}b_g"], p[f"ln{i}b_b"])

    for i in (1, 2, 3):
        x = lstm(x, p[f"lstm{i}_w_ih"], p[f"lstm{i}_w_hh"],
                 p[f"lstm{i}_b_ih"], p[f"lstm{i}_b_hh"])
        x = encoder(x, i)

    feats = x[:, -1, :]                                           # literal attn_out[:, -1, :]
    leaky = lambda v: jnp.where(v >= 0, v, 0.01 * v)

    t = leaky(feats @ p["tan1_w"].T + p["tan1_b"])
    t = leaky(t @ p["tan2_w"].T + p["tan2_b"])
    tan_mu = jnp.tanh(t @ p["tan3_w"].T + p["tan3_b"])
    s = leaky(feats @ p["sig1_w"].T + p["sig1_b"])
    s = leaky(s @ p["sig2_w"].T + p["sig2_b"])
    sig_mu = jax.nn.sigmoid(s @ p["sig3_w"].T + p["sig3_b"])
    mu = jax.nn.softmax(tan_mu * (1 - sig_mu) + sig_mu * action_state, axis=1)

    cat = jnp.concatenate([feats, action_state, action], axis=1)
    q = leaky(cat @ p["q1_w"].T + p["q1_b"])
    q = leaky(q @ p["q2_w"].T + p["q2_b"])
    q = q @ p["q3_w"].T + p["q3_b"]
    return mu, q


# ---------------------------------------------------------------------------
if __name__ == "__main__":
    INPUT, ACTION, NHEAD = 32, 4, 2
    D0, D1 = 2, 8     # env_state (D0, D1, INPUT): seq len D0, batch D1 (batch_first=False),
                      # heads operate on D0 rows; batch D1=8 fills the f32 sublanes exactly.

    key = jax.random.PRNGKey(0)
    kp, kx, kas, ka = jax.random.split(key, 4)
    params = make_params(kp, INPUT, ACTION)
    prepped = prepare_params(params)          # one-time weight packing / re-layout (cached)

    env_state = jax.random.normal(kx, (D0, D1, INPUT), jnp.float32)
    action_state = jax.random.normal(kas, (D0, ACTION), jnp.float32)
    action = jax.random.normal(ka, (D0, ACTION), jnp.float32)

    # One fused call produces both the actor (mu) and critic (q) outputs.
    mu, q = attn_a2c_forward(prepped, env_state, action_state, action, nhead=NHEAD)
    jax.block_until_ready((mu, q))

    mu_ref, q_ref = reference_forward(params, env_state, action_state, action, nhead=NHEAD)
    np.testing.assert_allclose(np.asarray(mu), np.asarray(mu_ref), rtol=1e-3, atol=1e-4)
    np.testing.assert_allclose(np.asarray(q), np.asarray(q_ref), rtol=1e-3, atol=1e-4)

    print("KERNEL_OK")
</pallas_src>

<mosaic_0001>
module attributes {stable_mosaic.version = 11 : i64} {
  func.func @_attn_a2c_kernel(%arg0: i32, %arg1: memref<16x32xf32, #tpu.memory_space<vmem>>, %arg2: memref<2x4xf32, #tpu.memory_space<vmem>>, %arg3: memref<2x4xf32, #tpu.memory_space<vmem>>, %arg4: memref<1x32x128xf32, #tpu.memory_space<vmem>>, %arg5: memref<1x32x128xf32, #tpu.memory_space<vmem>>, %arg6: memref<1x1x128xf32, #tpu.memory_space<vmem>>, %arg7: memref<1x32x96xf32, #tpu.memory_space<vmem>>, %arg8: memref<1x1x96xf32, #tpu.memory_space<vmem>>, %arg9: memref<1x32x32xf32, #tpu.memory_space<vmem>>, %arg10: memref<1x6x32xf32, #tpu.memory_space<vmem>>, %arg11: memref<1x32x2048xf32, #tpu.memory_space<vmem>>, %arg12: memref<1x1x2048xf32, #tpu.memory_space<vmem>>, %arg13: memref<1x2048x32xf32, #tpu.memory_space<vmem>>, %arg14: memref<32x128xf32, #tpu.memory_space<vmem>>, %arg15: memref<128x32xf32, #tpu.memory_space<vmem>>, %arg16: memref<32x8xf32, #tpu.memory_space<vmem>>, %arg17: memref<40x64xf32, #tpu.memory_space<vmem>>, %arg18: memref<64x8xf32, #tpu.memory_space<vmem>>, %arg19: memref<8x1xf32, #tpu.memory_space<vmem>>, %arg20: memref<6x128xf32, #tpu.memory_space<vmem>>, %arg21: memref<2x4xf32, #tpu.memory_space<vmem>>, %arg22: memref<2x1xf32, #tpu.memory_space<vmem>>, %arg23: memref<16x32xf32, #tpu.memory_space<vmem>>) attributes {dimension_semantics = [#tpu.dimension_semantics<arbitrary>], iteration_bounds = array<i64: 3>, scalar_prefetch = 0 : i64, scratch_operands = 1 : i64, tpu.core_type = #tpu.core_type<tc>, window_params = [{pipeline_mode = #tpu.pipeline_mode<synchronous>, transform_indices = @transform_0, window_bounds = array<i64: 16, 32>}, {pipeline_mode = #tpu.pipeline_mode<synchronous>, transform_indices = @transform_1, window_bounds = array<i64: 2, 4>}, {pipeline_mode = #tpu.pipeline_mode<synchronous>, transform_indices = @transform_2, window_bounds = array<i64: 2, 4>}, {transform_indices = @transform_3, window_bounds = array<i64: 1, 32, 128>}, {transform_indices = @transform_4, window_bounds = array<i64: 1, 32, 128>}, {transform_indices = @transform_5, window_bounds = array<i64: 1, 1, 128>}, {transform_indices = @transform_6, window_bounds = array<i64: 1, 32, 96>}, {transform_indices = @transform_7, window_bounds = array<i64: 1, 1, 96>}, {transform_indices = @transform_8, window_bounds = array<i64: 1, 32, 32>}, {transform_indices = @transform_9, window_bounds = array<i64: 1, 6, 32>}, {transform_indices = @transform_10, window_bounds = array<i64: 1, 32, 2048>}, {transform_indices = @transform_11, window_bounds = array<i64: 1, 1, 2048>}, {transform_indices = @transform_12, window_bounds = array<i64: 1, 2048, 32>}, {pipeline_mode = #tpu.pipeline_mode<synchronous>, transform_indices = @transform_13, window_bounds = array<i64: 32, 128>}, {pipeline_mode = #tpu.pipeline_mode<synchronous>, transform_indices = @transform_14, window_bounds = array<i64: 128, 32>}, {pipeline_mode = #tpu.pipeline_mode<synchronous>, transform_indices = @transform_15, window_bounds = array<i64: 32, 8>}, {pipeline_mode = #tpu.pipeline_mode<synchronous>, transform_indices = @transform_16, window_bounds = array<i64: 40, 64>}, {pipeline_mode = #tpu.pipeline_mode<synchronous>, transform_indices = @transform_17, window_bounds = array<i64: 64, 8>}, {pipeline_mode = #tpu.pipeline_mode<synchronous>, transform_indices = @transform_18, window_bounds = array<i64: 8, 1>}, {pipeline_mode = #tpu.pipeline_mode<synchronous>, transform_indices = @transform_19, window_bounds = array<i64: 6, 128>}, {pipeline_mode = #tpu.pipeline_mode<synchronous>, transform_indices = @transform_20, window_bounds = array<i64: 2, 4>}, {pipeline_mode = #tpu.pipeline_mode<synchronous>, transform_indices = @transform_21, window_bounds = array<i64: 2, 1>}]} {
    %c0_i32 = arith.constant 0 : i32
    %0 = arith.cmpi eq, %arg0, %c0_i32 : i32
    %1 = arith.extui %0 : i1 to i32
    %c0_i32_0 = arith.constant 0 : i32
    %2 = arith.cmpi ne, %1, %c0_i32_0 : i32
    scf.if %2 {
      %c0_74 = arith.constant 0 : index
      %c0_75 = arith.constant 0 : index
      %224 = vector.load %arg1[%c0_74, %c0_75] : memref<16x32xf32, #tpu.memory_space<vmem>>, vector<16x32xf32>
      %c0_76 = arith.constant 0 : index
      %c0_77 = arith.constant 0 : index
      %225 = vector.load %arg23[%c0_76, %c0_77] : memref<16x32xf32, #tpu.memory_space<vmem>>, vector<16x32xf32>
      tpu.vector_store %arg23[%c0_76, %c0_77], %224 {strides = array<i32>} : memref<16x32xf32, #tpu.memory_space<vmem>>, vector<16x32xf32>,
    } else {
    }
    %c0 = arith.constant 0 : index
    %c0_1 = arith.constant 0 : index
    %3 = vector.load %arg23[%c0, %c0_1] : memref<16x32xf32, #tpu.memory_space<vmem>>, vector<16x32xf32>
    %c0_2 = arith.constant 0 : index
    %c0_3 = arith.constant 0 : index
    %c0_4 = arith.constant 0 : index
    %4 = vector.load %arg4[%c0_2, %c0_3, %c0_4] : memref<1x32x128xf32, #tpu.memory_space<vmem>>, vector<1x32x128xf32>
    %5 = vector.shape_cast %4 : vector<1x32x128xf32> to vector<32x128xf32>
    %c0_5 = arith.constant 0 : index
    %c0_6 = arith.constant 0 : index
    %c0_7 = arith.constant 0 : index
    %6 = vector.load %arg5[%c0_5, %c0_6, %c0_7] : memref<1x32x128xf32, #tpu.memory_space<vmem>>, vector<1x32x128xf32>
    %7 = vector.shape_cast %6 : vector<1x32x128xf32> to vector<32x128xf32>
    %cst = arith.constant dense<0.000000e+00> : vector<16x128xf32>
    %8 = tpu.matmul %3, %5, %cst {dimension_numbers = #tpu.dot_dimension_numbers<[1], [0], [0], [1], [0, 0, 1, 1], [], []>} : vector<16x32xf32>, vector<32x128xf32>, vector<16x128xf32> -> vector<16x128xf32>
    %c0_8 = arith.constant 0 : index
    %c0_9 = arith.constant 0 : index
    %c0_10 = arith.constant 0 : index
    %9 = vector.load %arg6[%c0_8, %c0_9, %c0_10] : memref<1x1x128xf32, #tpu.memory_space<vmem>>, vector<1x1x128xf32>
    %10 = vector.shape_cast %9 : vector<1x1x128xf32> to vector<1x128xf32>
    %11 = vector.broadcast %10 : vector<1x128xf32> to vector<16x128xf32>
    %12 = arith.addf %8, %11 : vector<16x128xf32>
    %cst_11 = arith.constant 0.000000e+00 : f32
    %13 = vector.broadcast %cst_11 : f32 to vector<8x32xf32>
    %cst_12 = arith.constant 0.000000e+00 : f32
    %14 = vector.broadcast %cst_12 : f32 to vector<8x32xf32>
    %15 = vector.extract_strided_slice %12 {offsets = [0, 0], sizes = [8, 128], strides = [1, 1]} : vector<16x128xf32> to vector<8x128xf32>
    %cst_13 = arith.constant dense<0.000000e+00> : vector<8x128xf32>
    %16 = tpu.matmul %13, %7, %cst_13 {dimension_numbers = #tpu.dot_dimension_numbers<[1], [0], [0], [1], [0, 0, 1, 1], [], []>} : vector<8x32xf32>, vector<32x128xf32>, vector<8x128xf32> -> vector<8x128xf32>
    %17 = arith.addf %15, %16 : vector<8x128xf32>
    %18 = vector.extract_strided_slice %17 {offsets = [0, 0], sizes = [8, 32], strides = [1, 1]} : vector<8x128xf32> to vector<8x32xf32>
    %19 = arith.negf %18 : vector<8x32xf32>
    %20 = math.exp %19 : vector<8x32xf32>
    %cst_14 = arith.constant 1.000000e+00 : f32
    %21 = vector.broadcast %cst_14 : f32 to vector<8x32xf32>
    %22 = arith.addf %21, %20 : vector<8x32xf32>
    %23 = arith.divf %21, %22 : vector<8x32xf32>
    %24 = vector.extract_strided_slice %17 {offsets = [0, 32], sizes = [8, 32], strides = [1, 1]} : vector<8x128xf32> to vector<8x32xf32>
    %25 = arith.negf %24 : vector<8x32xf32>
    %26 = math.exp %25 : vector<8x32xf32>
    %cst_15 = arith.constant 1.000000e+00 : f32
    %27 = vector.broadcast %cst_15 : f32 to vector<8x32xf32>
    %28 = arith.addf %27, %26 : vector<8x32xf32>
    %29 = arith.divf %27, %28 : vector<8x32xf32>
    %30 = vector.extract_strided_slice %17 {offsets = [0, 64], sizes = [8, 32], strides = [1, 1]} : vector<8x128xf32> to vector<8x32xf32>
    %31 = math.tanh %30 : vector<8x32xf32>
    %32 = vector.extract_strided_slice %17 {offsets = [0, 96], sizes = [8, 32], strides = [1, 1]} : vector<8x128xf32> to vector<8x32xf32>
    %33 = arith.negf %32 : vector<8x32xf32>
    %34 = math.exp %33 : vector<8x32xf32>
    %cst_16 = arith.constant 1.000000e+00 : f32
    %35 = vector.broadcast %cst_16 : f32 to vector<8x32xf32>
    %36 = arith.addf %35, %34 : vector<8x32xf32>
    %37 = arith.divf %35, %36 : vector<8x32xf32>
    %38 = arith.mulf %29, %14 : vector<8x32xf32>
    %39 = arith.mulf %23, %31 : vector<8x32xf32>
    %40 = arith.addf %38, %39 : vector<8x32xf32>
    %41 = math.tanh %40 : vector<8x32xf32>
    %42 = arith.mulf %37, %41 : vector<8x32xf32>
    %c0_17 = arith.constant 0 : index
    %c0_18 = arith.constant 0 : index
    %43 = vector.load %arg23[%c0_17, %c0_18] : memref<16x32xf32, #tpu.memory_space<vmem>>, vector<8x32xf32>
    tpu.vector_store %arg23[%c0_17, %c0_18], %42 {strides = array<i32>} : memref<16x32xf32, #tpu.memory_space<vmem>>, vector<8x32xf32>,
    %44 = vector.extract_strided_slice %12 {offsets = [8, 0], sizes = [8, 128], strides = [1, 1]} : vector<16x128xf32> to vector<8x128xf32>
    %cst_19 = arith.constant dense<0.000000e+00> : vector<8x128xf32>
    %45 = tpu.matmul %42, %7, %cst_19 {dimension_numbers = #tpu.dot_dimension_numbers<[1], [0], [0], [1], [0, 0, 1, 1], [], []>} : vector<8x32xf32>, vector<32x128xf32>, vector<8x128xf32> -> vector<8x128xf32>
    %46 = arith.addf %44, %45 : vector<8x128xf32>
    %47 = vector.extract_strided_slice %46 {offsets = [0, 0], sizes = [8, 32], strides = [1, 1]} : vector<8x128xf32> to vector<8x32xf32>
    %48 = arith.negf %47 : vector<8x32xf32>
    %49 = math.exp %48 : vector<8x32xf32>
    %cst_20 = arith.constant 1.000000e+00 : f32
    %50 = vector.broadcast %cst_20 : f32 to vector<8x32xf32>
    %51 = arith.addf %50, %49 : vector<8x32xf32>
    %52 = arith.divf %50, %51 : vector<8x32xf32>
    %53 = vector.extract_strided_slice %46 {offsets = [0, 32], sizes = [8, 32], strides = [1, 1]} : vector<8x128xf32> to vector<8x32xf32>
    %54 = arith.negf %53 : vector<8x32xf32>
    %55 = math.exp %54 : vector<8x32xf32>
    %cst_21 = arith.constant 1.000000e+00 : f32
    %56 = vector.broadcast %cst_21 : f32 to vector<8x32xf32>
    %57 = arith.addf %56, %55 : vector<8x32xf32>
    %58 = arith.divf %56, %57 : vector<8x32xf32>
    %59 = vector.extract_strided_slice %46 {offsets = [0, 64], sizes = [8, 32], strides = [1, 1]} : vector<8x128xf32> to vector<8x32xf32>
    %60 = math.tanh %59 : vector<8x32xf32>
    %61 = vector.extract_strided_slice %46 {offsets = [0, 96], sizes = [8, 32], strides = [1, 1]} : vector<8x128xf32> to vector<8x32xf32>
    %62 = arith.negf %61 : vector<8x32xf32>
    %63 = math.exp %62 : vector<8x32xf32>
    %cst_22 = arith.constant 1.000000e+00 : f32
    %64 = vector.broadcast %cst_22 : f32 to vector<8x32xf32>
    %65 = arith.addf %64, %63 : vector<8x32xf32>
    %66 = arith.divf %64, %65 : vector<8x32xf32>
    %67 = arith.mulf %58, %40 : vector<8x32xf32>
    %68 = arith.mulf %52, %60 : vector<8x32xf32>
    %69 = arith.addf %67, %68 : vector<8x32xf32>
    %70 = math.tanh %69 : vector<8x32xf32>
    %71 = arith.mulf %66, %70 : vector<8x32xf32>
    %c8 = arith.constant 8 : index
    %c0_23 = arith.constant 0 : index
    %72 = vector.load %arg23[%c8, %c0_23] : memref<16x32xf32, #tpu.memory_space<vmem>>, vector<8x32xf32>
    tpu.vector_store %arg23[%c8, %c0_23], %71 {strides = array<i32>} : memref<16x32xf32, #tpu.memory_space<vmem>>, vector<8x32xf32>,
    %c0_24 = arith.constant 0 : index
    %c0_25 = arith.constant 0 : index
    %73 = vector.load %arg23[%c0_24, %c0_25] : memref<16x32xf32, #tpu.memory_space<vmem>>, vector<16x32xf32>
    %c0_26 = arith.constant 0 : index
    %c0_27 = arith.constant 0 : index
    %c0_28 = arith.constant 0 : index
    %74 = vector.load %arg10[%c0_26, %c0_27, %c0_28] : memref<1x6x32xf32, #tpu.memory_space<vmem>>, vector<1x6x32xf32>
    %75 = vector.shape_cast %74 : vector<1x6x32xf32> to vector<6x32xf32>
    %76 = vector.extract_strided_slice %75 {offsets = [0, 0], sizes = [1, 32], strides = [1, 1]} : vector<6x32xf32> to vector<1x32xf32>
    %77 = vector.extract_strided_slice %75 {offsets = [1, 0], sizes = [1, 32], strides = [1, 1]} : vector<6x32xf32> to vector<1x32xf32>
    %78 = vector.extract_strided_slice %75 {offsets = [2, 0], sizes = [1, 32], strides = [1, 1]} : vector<6x32xf32> to vector<1x32xf32>
    %79 = vector.extract_strided_slice %75 {offsets = [3, 0], sizes = [1, 32], strides = [1, 1]} : vector<6x32xf32> to vector<1x32xf32>
    %80 = vector.extract_strided_slice %75 {offsets = [4, 0], sizes = [1, 32], strides = [1, 1]} : vector<6x32xf32> to vector<1x32xf32>
    %81 = vector.extract_strided_slice %75 {offsets = [5, 0], sizes = [1, 32], strides = [1, 1]} : vector<6x32xf32> to vector<1x32xf32>
    %c0_29 = arith.constant 0 : index
    %c0_30 = arith.constant 0 : index
    %c0_31 = arith.constant 0 : index
    %82 = vector.load %arg7[%c0_29, %c0_30, %c0_31] : memref<1x32x96xf32, #tpu.memory_space<vmem>>, vector<1x32x96xf32>
    %83 = vector.shape_cast %82 : vector<1x32x96xf32> to vector<32x96xf32>
    %cst_32 = arith.constant dense<0.000000e+00> : vector<16x96xf32>
    %84 = tpu.matmul %73, %83, %cst_32 {dimension_numbers = #tpu.dot_dimension_numbers<[1], [0], [0], [1], [0, 0, 1, 1], [], []>} : vector<16x32xf32>, vector<32x96xf32>, vector<16x96xf32> -> vector<16x96xf32>
    %c0_33 = arith.constant 0 : index
    %c0_34 = arith.constant 0 : index
    %c0_35 = arith.constant 0 : index
    %85 = vector.load %arg8[%c0_33, %c0_34, %c0_35] : memref<1x1x96xf32, #tpu.memory_space<vmem>>, vector<1x1x96xf32>
    %86 = vector.shape_cast %85 : vector<1x1x96xf32> to vector<1x96xf32>
    %87 = vector.broadcast %86 : vector<1x96xf32> to vector<16x96xf32>
    %88 = arith.addf %84, %87 : vector<16x96xf32>
    %89 = vector.extract_strided_slice %88 {offsets = [0, 0], sizes = [16, 32], strides = [1, 1]} : vector<16x96xf32> to vector<16x32xf32>
    %cst_36 = arith.constant 2.500000e-01 : f32
    %90 = vector.broadcast %cst_36 : f32 to vector<16x32xf32>
    %91 = arith.mulf %89, %90 : vector<16x32xf32>
    %92 = vector.extract_strided_slice %88 {offsets = [0, 32], sizes = [16, 32], strides = [1, 1]} : vector<16x96xf32> to vector<16x32xf32>
    %93 = vector.extract_strided_slice %88 {offsets = [0, 64], sizes = [16, 32], strides = [1, 1]} : vector<16x96xf32> to vector<16x32xf32>
    %94 = vector.extract_strided_slice %92 {offsets = [0, 0], sizes = [8, 32], strides = [1, 1]} : vector<16x32xf32> to vector<8x32xf32>
    %95 = tpu.concatenate %94, %94 in 0 : vector<8x32xf32>, vector<8x32xf32> -> vector<16x32xf32>
    %96 = vector.extract_strided_slice %92 {offsets = [8, 0], sizes = [8, 32], strides = [1, 1]} : vector<16x32xf32> to vector<8x32xf32>
    %97 = tpu.concatenate %96, %96 in 0 : vector<8x32xf32>, vector<8x32xf32> -> vector<16x32xf32>
    %98 = vector.extract_strided_slice %93 {offsets = [0, 0], sizes = [8, 32], strides = [1, 1]} : vector<16x32xf32> to vector<8x32xf32>
    %99 = tpu.concatenate %98, %98 in 0 : vector<8x32xf32>, vector<8x32xf32> -> vector<16x32xf32>
    %100 = vector.extract_strided_slice %93 {offsets = [8, 0], sizes = [8, 32], strides = [1, 1]} : vector<16x32xf32> to vector<8x32xf32>
    %101 = tpu.concatenate %100, %100 in 0 : vector<8x32xf32>, vector<8x32xf32> -> vector<16x32xf32>
    %102 = vector.extract_strided_slice %91 {offsets = [0, 0], sizes = [16, 16], strides = [1, 1]} : vector<16x32xf32> to vector<16x16xf32>
    %103 = vector.extract_strided_slice %95 {offsets = [0, 0], sizes = [16, 16], strides = [1, 1]} : vector<16x32xf32> to vector<16x16xf32>
    %104 = arith.mulf %102, %103 : vector<16x16xf32>
    %cst_37 = arith.constant dense<0.000000e+00> : vector<16xf32>
    %105 = vector.multi_reduction <add>, %104, %cst_37 [1] : vector<16x16xf32> to vector<16xf32>
    %106 = vector.shape_cast %105 : vector<16xf32> to vector<16x1xf32>
    %107 = vector.extract_strided_slice %97 {offsets = [0, 0], sizes = [16, 16], strides = [1, 1]} : vector<16x32xf32> to vector<16x16xf32>
    %108 = arith.mulf %102, %107 : vector<16x16xf32>
    %cst_38 = arith.constant dense<0.000000e+00> : vector<16xf32>
    %109 = vector.multi_reduction <add>, %108, %cst_38 [1] : vector<16x16xf32> to vector<16xf32>
    %110 = vector.shape_cast %109 : vector<16xf32> to vector<16x1xf32>
    %111 = tpu.concatenate %106, %110 in 1 : vector<16x1xf32>, vector<16x1xf32> -> vector<16x2xf32>
    %cst_39 = arith.constant dense<0xFF800000> : vector<16xf32>
    %112 = vector.multi_reduction <maximumf>, %111, %cst_39 [1] : vector<16x2xf32> to vector<16xf32>
    %113 = vector.shape_cast %112 : vector<16xf32> to vector<16x1xf32>
    %114 = vector.broadcast %113 : vector<16x1xf32> to vector<16x2xf32>
    %115 = arith.subf %111, %114 : vector<16x2xf32>
    %116 = math.exp %115 : vector<16x2xf32>
    %cst_40 = arith.constant dense<0.000000e+00> : vector<16xf32>
    %117 = vector.multi_reduction <add>, %116, %cst_40 [1] : vector<16x2xf32> to vector<16xf32>
    %118 = vector.shape_cast %117 : vector<16xf32> to vector<16x1xf32>
    %119 = vector.broadcast %118 : vector<16x1xf32> to vector<16x2xf32>
    %120 = arith.divf %116, %119 : vector<16x2xf32>
    %121 = vector.extract_strided_slice %120 {offsets = [0, 0], sizes = [16, 1], strides = [1, 1]} : vector<16x2xf32> to vector<16x1xf32>
    %122 = vector.extract_strided_slice %99 {offsets = [0, 0], sizes = [16, 16], strides = [1, 1]} : vector<16x32xf32> to vector<16x16xf32>
    %123 = vector.broadcast %121 : vector<16x1xf32> to vector<16x16xf32>
    %124 = arith.mulf %123, %122 : vector<16x16xf32>
    %125 = vector.extract_strided_slice %120 {offsets = [0, 1], sizes = [16, 1], strides = [1, 1]} : vector<16x2xf32> to vector<16x1xf32>
    %126 = vector.extract_strided_slice %101 {offsets = [0, 0], sizes = [16, 16], strides = [1, 1]} : vector<16x32xf32> to vector<16x16xf32>
    %127 = vector.broadcast %125 : vector<16x1xf32> to vector<16x16xf32>
    %128 = arith.mulf %127, %126 : vector<16x16xf32>
    %129 = arith.addf %124, %128 : vector<16x16xf32>
    %130 = vector.extract_strided_slice %91 {offsets = [0, 16], sizes = [16, 16], strides = [1, 1]} : vector<16x32xf32> to vector<16x16xf32>
    %131 = vector.extract_strided_slice %95 {offsets = [0, 16], sizes = [16, 16], strides = [1, 1]} : vector<16x32xf32> to vector<16x16xf32>
    %132 = arith.mulf %130, %131 : vector<16x16xf32>
    %cst_41 = arith.constant dense<0.000000e+00> : vector<16xf32>
    %133 = vector.multi_reduction <add>, %132, %cst_41 [1] : vector<16x16xf32> to vector<16xf32>
    %134 = vector.shape_cast %133 : vector<16xf32> to vector<16x1xf32>
    %135 = vector.extract_strided_slice %97 {offsets = [0, 16], sizes = [16, 16], strides = [1, 1]} : vector<16x32xf32> to vector<16x16xf32>
    %136 = arith.mulf %130, %135 : vector<16x16xf32>
    %cst_42 = arith.constant dense<0.000000e+00> : vector<16xf32>
    %137 = vector.multi_reduction <add>, %136, %cst_42 [1] : vector<16x16xf32> to vector<16xf32>
    %138 = vector.shape_cast %137 : vector<16xf32> to vector<16x1xf32>
    %139 = tpu.concatenate %134, %138 in 1 : vector<16x1xf32>, vector<16x1xf32> -> vector<16x2xf32>
    %cst_43 = arith.constant dense<0xFF800000> : vector<16xf32>
    %140 = vector.multi_reduction <maximumf>, %139, %cst_43 [1] : vector<16x2xf32> to vector<16xf32>
    %141 = vector.shape_cast %140 : vector<16xf32> to vector<16x1xf32>
    %142 = vector.broadcast %141 : vector<16x1xf32> to vector<16x2xf32>
    %143 = arith.subf %139, %142 : vector<16x2xf32>
    %144 = math.exp %143 : vector<16x2xf32>
    %cst_44 = arith.constant dense<0.000000e+00> : vector<16xf32>
    %145 = vector.multi_reduction <add>, %144, %cst_44 [1] : vector<16x2xf32> to vector<16xf32>
    %146 = vector.shape_cast %145 : vector<16xf32> to vector<16x1xf32>
    %147 = vector.broadcast %146 : vector<16x1xf32> to vector<16x2xf32>
    %148 = arith.divf %144, %147 : vector<16x2xf32>
    %149 = vector.extract_strided_slice %148 {offsets = [0, 0], sizes = [16, 1], strides = [1, 1]} : vector<16x2xf32> to vector<16x1xf32>
    %150 = vector.extract_strided_slice %99 {offsets = [0, 16], sizes = [16, 16], strides = [1, 1]} : vector<16x32xf32> to vector<16x16xf32>
    %151 = vector.broadcast %149 : vector<16x1xf32> to vector<16x16xf32>
    %152 = arith.mulf %151, %150 : vector<16x16xf32>
    %153 = vector.extract_strided_slice %148 {offsets = [0, 1], sizes = [16, 1], strides = [1, 1]} : vector<16x2xf32> to vector<16x1xf32>
    %154 = vector.extract_strided_slice %101 {offsets = [0, 16], sizes = [16, 16], strides = [1, 1]} : vector<16x32xf32> to vector<16x16xf32>
    %155 = vector.broadcast %153 : vector<16x1xf32> to vector<16x16xf32>
    %156 = arith.mulf %155, %154 : vector<16x16xf32>
    %157 = arith.addf %152, %156 : vector<16x16xf32>
    %158 = tpu.concatenate %129, %157 in 1 : vector<16x16xf32>, vector<16x16xf32> -> vector<16x32xf32>
    %c0_45 = arith.constant 0 : index
    %c0_46 = arith.constant 0 : index
    %c0_47 = arith.constant 0 : index
    %159 = vector.load %arg9[%c0_45, %c0_46, %c0_47] : memref<1x32x32xf32, #tpu.memory_space<vmem>>, vector<1x32x32xf32>
    %160 = vector.shape_cast %159 : vector<1x32x32xf32> to vector<32x32xf32>
    %cst_48 = arith.constant dense<0.000000e+00> : vector<16x32xf32>
    %161 = tpu.matmul %158, %160, %cst_48 {dimension_numbers = #tpu.dot_dimension_numbers<[1], [0], [0], [1], [0, 0, 1, 1], [], []>} : vector<16x32xf32>, vector<32x32xf32>, vector<16x32xf32> -> vector<16x32xf32>
    %162 = vector.broadcast %76 : vector<1x32xf32> to vector<16x32xf32>
    %163 = arith.addf %161, %162 : vector<16x32xf32>
    %164 = arith.addf %73, %163 : vector<16x32xf32>
    %cst_49 = arith.constant dense<0.000000e+00> : vector<16xf32>
    %165 = vector.multi_reduction <add>, %164, %cst_49 [1] : vector<16x32xf32> to vector<16xf32>
    %166 = vector.shape_cast %165 : vector<16xf32> to vector<16x1xf32>
    %cst_50 = arith.constant 3.200000e+01 : f32
    %167 = vector.broadcast %cst_50 : f32 to vector<16x1xf32>
    %168 = arith.divf %166, %167 : vector<16x1xf32>
    %169 = vector.broadcast %168 : vector<16x1xf32> to vector<16x32xf32>
    %170 = arith.subf %164, %169 : vector<16x32xf32>
    %171 = arith.mulf %170, %170 : vector<16x32xf32>
    %cst_51 = arith.constant dense<0.000000e+00> : vector<16xf32>
    %172 = vector.multi_reduction <add>, %171, %cst_51 [1] : vector<16x32xf32> to vector<16xf32>
    %173 = vector.shape_cast %172 : vector<16xf32> to vector<16x1xf32>
    %cst_52 = arith.constant 3.200000e+01 : f32
    %174 = vector.broadcast %cst_52 : f32 to vector<16x1xf32>
    %175 = arith.divf %173, %174 : vector<16x1xf32>
    %cst_53 = arith.constant 9.99999974E-6 : f32
    %176 = vector.broadcast %cst_53 : f32 to vector<16x1xf32>
    %177 = arith.addf %175, %176 : vector<16x1xf32>
    %178 = math.rsqrt %177 : vector<16x1xf32>
    %179 = vector.broadcast %178 : vector<16x1xf32> to vector<16x32xf32>
    %180 = arith.mulf %170, %179 : vector<16x32xf32>
    %181 = vector.broadcast %77 : vector<1x32xf32> to vector<16x32xf32>
    %182 = arith.mulf %180, %181 : vector<16x32xf32>
    %183 = vector.broadcast %78 : vector<1x32xf32> to vector<16x32xf32>
    %184 = arith.addf %182, %183 : vector<16x32xf32>
    %c0_54 = arith.constant 0 : index
    %c0_55 = arith.constant 0 : index
    %c0_56 = arith.constant 0 : index
    %185 = vector.load %arg11[%c0_54, %c0_55, %c0_56] : memref<1x32x2048xf32, #tpu.memory_space<vmem>>, vector<1x32x2048xf32>
    %186 = vector.shape_cast %185 : vector<1x32x2048xf32> to vector<32x2048xf32>
    %c0_57 = arith.constant 0 : index
    %c0_58 = arith.constant 0 : index
    %c0_59 = arith.constant 0 : index
    %187 = vector.load %arg13[%c0_57, %c0_58, %c0_59] : memref<1x2048x32xf32, #tpu.memory_space<vmem>>, vector<1x2048x32xf32>
    %188 = vector.shape_cast %187 : vector<1x2048x32xf32> to vector<2048x32xf32>
    %cst_60 = arith.constant dense<0.000000e+00> : vector<16x2048xf32>
    %189 = tpu.matmul %184, %186, %cst_60 {dimension_numbers = #tpu.dot_dimension_numbers<[1], [0], [0], [1], [0, 0, 1, 1], [], []>} : vector<16x32xf32>, vector<32x2048xf32>, vector<16x2048xf32> -> vector<16x2048xf32>
    %c0_61 = arith.constant 0 : index
    %c0_62 = arith.constant 0 : index
    %c0_63 = arith.constant 0 : index
    %190 = vector.load %arg12[%c0_61, %c0_62, %c0_63] : memref<1x1x2048xf32, #tpu.memory_space<vmem>>, vector<1x1x2048xf32>
    %191 = vector.shape_cast %190 : vector<1x1x2048xf32> to vector<1x2048xf32>
    %192 = vector.broadcast %191 : vector<1x2048xf32> to vector<16x2048xf32>
    %193 = arith.addf %189, %192 : vector<16x2048xf32>
    %cst_64 = arith.constant 0.000000e+00 : f32
    %194 = vector.broadcast %cst_64 : f32 to vector<16x2048xf32>
    %195 = arith.maximumf %193, %194 : vector<16x2048xf32>
    %cst_65 = arith.constant dense<0.000000e+00> : vector<16x32xf32>
    %196 = tpu.matmul %195, %188, %cst_65 {dimension_numbers = #tpu.dot_dimension_numbers<[1], [0], [0], [1], [0, 0, 1, 1], [], []>} : vector<16x2048xf32>, vector<2048x32xf32>, vector<16x32xf32> -> vector<16x32xf32>
    %197 = vector.broadcast %79 : vector<1x32xf32> to vector<16x32xf32>
    %198 = arith.addf %196, %197 : vector<16x32xf32>
    %199 = arith.addf %184, %198 : vector<16x32xf32>
    %cst_66 = arith.constant dense<0.000000e+00> : vector<16xf32>
    %200 = vector.multi_reduction <add>, %199, %cst_66 [1] : vector<16x32xf32> to vector<16xf32>
    %201 = vector.shape_cast %200 : vector<16xf32> to vector<16x1xf32>
    %cst_67 = arith.constant 3.200000e+01 : f32
    %202 = vector.broadcast %cst_67 : f32 to vector<16x1xf32>
    %203 = arith.divf %201, %202 : vector<16x1xf32>
    %204 = vector.broadcast %203 : vector<16x1xf32> to vector<16x32xf32>
    %205 = arith.subf %199, %204 : vector<16x32xf32>
    %206 = arith.mulf %205, %205 : vector<16x32xf32>
    %cst_68 = arith.constant dense<0.000000e+00> : vector<16xf32>
    %207 = vector.multi_reduction <add>, %206, %cst_68 [1] : vector<16x32xf32> to vector<16xf32>
    %208 = vector.shape_cast %207 : vector<16xf32> to vector<16x1xf32>
    %cst_69 = arith.constant 3.200000e+01 : f32
    %209 = vector.broadcast %cst_69 : f32 to vector<16x1xf32>
    %210 = arith.divf %208, %209 : vector<16x1xf32>
    %cst_70 = arith.constant 9.99999974E-6 : f32
    %211 = vector.broadcast %cst_70 : f32 to vector<16x1xf32>
    %212 = arith.addf %210, %211 : vector<16x1xf32>
    %213 = math.rsqrt %212 : vector<16x1xf32>
    %214 = vector.broadcast %213 : vector<16x1xf32> to vector<16x32xf32>
    %215 = arith.mulf %205, %214 : vector<16x32xf32>
    %216 = vector.broadcast %80 : vector<1x32xf32> to vector<16x32xf32>
    %217 = arith.mulf %215, %216 : vector<16x32xf32>
    %218 = vector.broadcast %81 : vector<1x32xf32> to vector<16x32xf32>
    %219 = arith.addf %217, %218 : vector<16x32xf32>
    %c0_71 = arith.constant 0 : index
    %c0_72 = arith.constant 0 : index
    %220 = vector.load %arg23[%c0_71, %c0_72] : memref<16x32xf32, #tpu.memory_space<vmem>>, vector<16x32xf32>
    tpu.vector_store %arg23[%c0_71, %c0_72], %219 {strides = array<i32>} : memref<16x32xf32, #tpu.memory_space<vmem>>, vector<16x32xf32>,
    %c2_i32 = arith.constant 2 : i32
    %221 = arith.cmpi eq, %arg0, %c2_i32 : i32
    %222 = arith.extui %221 : i1 to i32
    %c0_i32_73 = arith.constant 0 : i32
    %223 = arith.cmpi ne, %222, %c0_i32_73 : i32
    scf.if %223 {
      %224 = tpu.iota {dimensions = array<i32: 0>} : vector<2x16xi32>
      %225 = tpu.iota {dimensions = array<i32: 1>} : vector<2x16xi32>
      %c8_i32 = arith.constant 8 : i32
      %226 = vector.broadcast %c8_i32 : i32 to vector<2x16xi32>
      %227 = arith.muli %224, %226 : vector<2x16xi32>
      %c7_i32 = arith.constant 7 : i32
      %228 = vector.broadcast %c7_i32 : i32 to vector<2x16xi32>
      %229 = arith.addi %227, %228 : vector<2x16xi32>
      %230 = arith.cmpi eq, %225, %229 : vector<2x16xi32>
      %231 = arith.extui %230 : vector<2x16xi1> to vector<2x16xi32>
      %232 = arith.sitofp %231 : vector<2x16xi32> to vector<2x16xf32>
      %cst_74 = arith.constant dense<0.000000e+00> : vector<2x32xf32>
      %233 = tpu.matmul %232, %219, %cst_74 {dimension_numbers = #tpu.dot_dimension_numbers<[1], [0], [0], [1], [0, 0, 1, 1], [], []>} : vector<2x16xf32>, vector<16x32xf32>, vector<2x32xf32> -> vector<2x32xf32>
      %c0_75 = arith.constant 0 : index
      %c0_76 = arith.constant 0 : index
      %234 = vector.load %arg2[%c0_75, %c0_76] : memref<2x4xf32, #tpu.memory_space<vmem>>, vector<2x4xf32>
      %c0_77 = arith.constant 0 : index
      %c0_78 = arith.constant 0 : index
      %235 = vector.load %arg3[%c0_77, %c0_78] : memref<2x4xf32, #tpu.memory_space<vmem>>, vector<2x4xf32>
      %c0_79 = arith.constant 0 : index
      %c0_80 = arith.constant 0 : index
      %236 = vector.load %arg20[%c0_79, %c0_80] : memref<6x128xf32, #tpu.memory_space<vmem>>, vector<6x128xf32>
      %c0_81 = arith.constant 0 : index
      %c0_82 = arith.constant 0 : index
      %237 = vector.load %arg14[%c0_81, %c0_82] : memref<32x128xf32, #tpu.memory_space<vmem>>, vector<32x128xf32>
      %c0_83 = arith.constant 0 : index
      %c0_84 = arith.constant 0 : index
      %238 = vector.load %arg15[%c0_83, %c0_84] : memref<128x32xf32, #tpu.memory_space<vmem>>, vector<128x32xf32>
      %c0_85 = arith.constant 0 : index
      %c0_86 = arith.constant 0 : index
      %239 = vector.load %arg16[%c0_85, %c0_86] : memref<32x8xf32, #tpu.memory_space<vmem>>, vector<32x8xf32>
      %c0_87 = arith.constant 0 : index
      %c0_88 = arith.constant 0 : index
      %240 = vector.load %arg17[%c0_87, %c0_88] : memref<40x64xf32, #tpu.memory_space<vmem>>, vector<40x64xf32>
      %c0_89 = arith.constant 0 : index
      %c0_90 = arith.constant 0 : index
      %241 = vector.load %arg18[%c0_89, %c0_90] : memref<64x8xf32, #tpu.memory_space<vmem>>, vector<64x8xf32>
      %c0_91 = arith.constant 0 : index
      %c0_92 = arith.constant 0 : index
      %242 = vector.load %arg19[%c0_91, %c0_92] : memref<8x1xf32, #tpu.memory_space<vmem>>, vector<8x1xf32>
      %243 = vector.extract_strided_slice %236 {offsets = [0, 0], sizes = [1, 128], strides = [1, 1]} : vector<6x128xf32> to vector<1x128xf32>
      %244 = vector.extract_strided_slice %236 {offsets = [1, 0], sizes = [1, 32], strides = [1, 1]} : vector<6x128xf32> to vector<1x32xf32>
      %245 = vector.extract_strided_slice %236 {offsets = [2, 0], sizes = [1, 8], strides = [1, 1]} : vector<6x128xf32> to vector<1x8xf32>
      %246 = vector.extract_strided_slice %236 {offsets = [3, 0], sizes = [1, 64], strides = [1, 1]} : vector<6x128xf32> to vector<1x64xf32>
      %247 = vector.extract_strided_slice %236 {offsets = [4, 0], sizes = [1, 8], strides = [1, 1]} : vector<6x128xf32> to vector<1x8xf32>
      %248 = vector.extract_strided_slice %236 {offsets = [5, 0], sizes = [1, 1], strides = [1, 1]} : vector<6x128xf32> to vector<1x1xf32>
      %cst_93 = arith.constant dense<0.000000e+00> : vector<2x128xf32>
      %249 = tpu.matmul %233, %237, %cst_93 {dimension_numbers = #tpu.dot_dimension_numbers<[1], [0], [0], [1], [0, 0, 1, 1], [], []>} : vector<2x32xf32>, vector<32x128xf32>, vector<2x128xf32> -> vector<2x128xf32>
      %250 = vector.broadcast %243 : vector<1x128xf32> to vector<2x128xf32>
      %251 = arith.addf %249, %250 : vector<2x128xf32>
      %cst_94 = arith.constant 0.00999999977 : f32
      %252 = vector.broadcast %cst_94 : f32 to vector<2x128xf32>
      %253 = arith.mulf %252, %251 : vector<2x128xf32>
      %254 = arith.maximumf %251, %253 : vector<2x128xf32>
      %cst_95 = arith.constant dense<0.000000e+00> : vector<2x32xf32>
      %255 = tpu.matmul %254, %238, %cst_95 {dimension_numbers = #tpu.dot_dimension_numbers<[1], [0], [0], [1], [0, 0, 1, 1], [], []>} : vector<2x128xf32>, vector<128x32xf32>, vector<2x32xf32> -> vector<2x32xf32>
      %256 = vector.broadcast %244 : vector<1x32xf32> to vector<2x32xf32>
      %257 = arith.addf %255, %256 : vector<2x32xf32>
      %cst_96 = arith.constant 0.00999999977 : f32
      %258 = vector.broadcast %cst_96 : f32 to vector<2x32xf32>
      %259 = arith.mulf %258, %257 : vector<2x32xf32>
      %260 = arith.maximumf %257, %259 : vector<2x32xf32>
      %cst_97 = arith.constant dense<0.000000e+00> : vector<2x8xf32>
      %261 = tpu.matmul %260, %239, %cst_97 {dimension_numbers = #tpu.dot_dimension_numbers<[1], [0], [0], [1], [0, 0, 1, 1], [], []>} : vector<2x32xf32>, vector<32x8xf32>, vector<2x8xf32> -> vector<2x8xf32>
      %262 = vector.broadcast %245 : vector<1x8xf32> to vector<2x8xf32>
      %263 = arith.addf %261, %262 : vector<2x8xf32>
      %264 = vector.extract_strided_slice %263 {offsets = [0, 0], sizes = [2, 4], strides = [1, 1]} : vector<2x8xf32> to vector<2x4xf32>
      %265 = math.tanh %264 : vector<2x4xf32>
      %266 = vector.extract_strided_slice %263 {offsets = [0, 4], sizes = [2, 4], strides = [1, 1]} : vector<2x8xf32> to vector<2x4xf32>
      %267 = arith.negf %266 : vector<2x4xf32>
      %268 = math.exp %267 : vector<2x4xf32>
      %cst_98 = arith.constant 1.000000e+00 : f32
      %269 = vector.broadcast %cst_98 : f32 to vector<2x4xf32>
      %270 = arith.addf %269, %268 : vector<2x4xf32>
      %271 = arith.divf %269, %270 : vector<2x4xf32>
      %cst_99 = arith.constant 1.000000e+00 : f32
      %272 = vector.broadcast %cst_99 : f32 to vector<2x4xf32>
      %273 = arith.subf %272, %271 : vector<2x4xf32>
      %274 = arith.mulf %265, %273 : vector<2x4xf32>
      %275 = arith.mulf %271, %234 : vector<2x4xf32>
      %276 = arith.addf %274, %275 : vector<2x4xf32>
      %cst_100 = arith.constant dense<0xFF800000> : vector<2xf32>
      %277 = vector.multi_reduction <maximumf>, %276, %cst_100 [1] : vector<2x4xf32> to vector<2xf32>
      %278 = vector.shape_cast %277 : vector<2xf32> to vector<2x1xf32>
      %279 = vector.broadcast %278 : vector<2x1xf32> to vector<2x4xf32>
      %280 = arith.subf %276, %279 : vector<2x4xf32>
      %281 = math.exp %280 : vector<2x4xf32>
      %cst_101 = arith.constant dense<0.000000e+00> : vector<2xf32>
      %282 = vector.multi_reduction <add>, %281, %cst_101 [1] : vector<2x4xf32> to vector<2xf32>
      %283 = vector.shape_cast %282 : vector<2xf32> to vector<2x1xf32>
      %284 = vector.broadcast %283 : vector<2x1xf32> to vector<2x4xf32>
      %285 = arith.divf %281, %284 : vector<2x4xf32>
      %c0_102 = arith.constant 0 : index
      %c0_103 = arith.constant 0 : index
      %286 = vector.load %arg21[%c0_102, %c0_103] : memref<2x4xf32, #tpu.memory_space<vmem>>, vector<2x4xf32>
      tpu.vector_store %arg21[%c0_102, %c0_103], %285 {strides = array<i32>} : memref<2x4xf32, #tpu.memory_space<vmem>>, vector<2x4xf32>,
      %287 = tpu.concatenate %233, %234, %235 in 1 : vector<2x32xf32>, vector<2x4xf32>, vector<2x4xf32> -> vector<2x40xf32>
      %cst_104 = arith.constant dense<0.000000e+00> : vector<2x64xf32>
      %288 = tpu.matmul %287, %240, %cst_104 {dimension_numbers = #tpu.dot_dimension_numbers<[1], [0], [0], [1], [0, 0, 1, 1], [], []>} : vector<2x40xf32>, vector<40x64xf32>, vector<2x64xf32> -> vector<2x64xf32>
      %289 = vector.broadcast %246 : vector<1x64xf32> to vector<2x64xf32>
      %290 = arith.addf %288, %289 : vector<2x64xf32>
      %cst_105 = arith.constant 0.00999999977 : f32
      %291 = vector.broadcast %cst_105 : f32 to vector<2x64xf32>
      %292 = arith.mulf %291, %290 : vector<2x64xf32>
      %293 = arith.maximumf %290, %292 : vector<2x64xf32>
      %cst_106 = arith.constant dense<0.000000e+00> : vector<2x8xf32>
      %294 = tpu.matmul %293, %241, %cst_106 {dimension_numbers = #tpu.dot_dimension_numbers<[1], [0], [0], [1], [0, 0, 1, 1], [], []>} : vector<2x64xf32>, vector<64x8xf32>, vector<2x8xf32> -> vector<2x8xf32>
      %295 = vector.broadcast %247 : vector<1x8xf32> to vector<2x8xf32>
      %296 = arith.addf %294, %295 : vector<2x8xf32>
      %cst_107 = arith.constant 0.00999999977 : f32
      %297 = vector.broadcast %cst_107 : f32 to vector<2x8xf32>
      %298 = arith.mulf %297, %296 : vector<2x8xf32>
      %299 = arith.maximumf %296, %298 : vector<2x8xf32>
      %cst_108 = arith.constant dense<0.000000e+00> : vector<2x1xf32>
      %300 = tpu.matmul %299, %242, %cst_108 {dimension_numbers = #tpu.dot_dimension_numbers<[1], [0], [0], [1], [0, 0, 1, 1], [], []>} : vector<2x8xf32>, vector<8x1xf32>, vector<2x1xf32> -> vector<2x1xf32>
      %301 = vector.broadcast %248 : vector<1x1xf32> to vector<2x1xf32>
      %302 = arith.addf %300, %301 : vector<2x1xf32>
      %c0_109 = arith.constant 0 : index
      %c0_110 = arith.constant 0 : index
      %303 = vector.load %arg22[%c0_109, %c0_110] : memref<2x1xf32, #tpu.memory_space<vmem>>, vector<2x1xf32>
      tpu.vector_store %arg22[%c0_109, %c0_110], %302 {strides = array<i32>} : memref<2x1xf32, #tpu.memory_space<vmem>>, vector<2x1xf32>,
    } else {
    }
    return
  }
  func.func @transform_0(%arg0: i32) -> (i32, i32) {
    %c0_i32 = arith.constant 0 : i32
    %c0_i32_0 = arith.constant 0 : i32
    %c0_i32_1 = arith.constant 0 : i32
    return %c0_i32, %c0_i32_0 : i32, i32
  }
  func.func @transform_1(%arg0: i32) -> (i32, i32) {
    %c0_i32 = arith.constant 0 : i32
    %c0_i32_0 = arith.constant 0 : i32
    %c0_i32_1 = arith.constant 0 : i32
    return %c0_i32, %c0_i32_0 : i32, i32
  }
  func.func @transform_2(%arg0: i32) -> (i32, i32) {
    %c0_i32 = arith.constant 0 : i32
    %c0_i32_0 = arith.constant 0 : i32
    %c0_i32_1 = arith.constant 0 : i32
    return %c0_i32, %c0_i32_0 : i32, i32
  }
  func.func @transform_3(%arg0: i32) -> (i32, i32, i32) {
    %c0_i32 = arith.constant 0 : i32
    %c0_i32_0 = arith.constant 0 : i32
    %c0_i32_1 = arith.constant 0 : i32
    return %arg0, %c0_i32, %c0_i32_0 : i32, i32, i32
  }
  func.func @transform_4(%arg0: i32) -> (i32, i32, i32) {
    %c0_i32 = arith.constant 0 : i32
    %c0_i32_0 = arith.constant 0 : i32
    %c0_i32_1 = arith.constant 0 : i32
    return %arg0, %c0_i32, %c0_i32_0 : i32, i32, i32
  }
  func.func @transform_5(%arg0: i32) -> (i32, i32, i32) {
    %c0_i32 = arith.constant 0 : i32
    %c0_i32_0 = arith.constant 0 : i32
    %c0_i32_1 = arith.constant 0 : i32
    return %arg0, %c0_i32, %c0_i32_0 : i32, i32, i32
  }
  func.func @transform_6(%arg0: i32) -> (i32, i32, i32) {
    %c0_i32 = arith.constant 0 : i32
    %c0_i32_0 = arith.constant 0 : i32
    %c0_i32_1 = arith.constant 0 : i32
    return %arg0, %c0_i32, %c0_i32_0 : i32, i32, i32
  }
  func.func @transform_7(%arg0: i32) -> (i32, i32, i32) {
    %c0_i32 = arith.constant 0 : i32
    %c0_i32_0 = arith.constant 0 : i32
    %c0_i32_1 = arith.constant 0 : i32
    return %arg0, %c0_i32, %c0_i32_0 : i32, i32, i32
  }
  func.func @transform_8(%arg0: i32) -> (i32, i32, i32) {
    %c0_i32 = arith.constant 0 : i32
    %c0_i32_0 = arith.constant 0 : i32
    %c0_i32_1 = arith.constant 0 : i32
    return %arg0, %c0_i32, %c0_i32_0 : i32, i32, i32
  }
  func.func @transform_9(%arg0: i32) -> (i32, i32, i32) {
    %c0_i32 = arith.constant 0 : i32
    %c0_i32_0 = arith.constant 0 : i32
    %c0_i32_1 = arith.constant 0 : i32
    return %arg0, %c0_i32, %c0_i32_0 : i32, i32, i32
  }
  func.func @transform_10(%arg0: i32) -> (i32, i32, i32) {
    %c0_i32 = arith.constant 0 : i32
    %c0_i32_0 = arith.constant 0 : i32
    %c0_i32_1 = arith.constant 0 : i32
    return %arg0, %c0_i32, %c0_i32_0 : i32, i32, i32
  }
  func.func @transform_11(%arg0: i32) -> (i32, i32, i32) {
    %c0_i32 = arith.constant 0 : i32
    %c0_i32_0 = arith.constant 0 : i32
    %c0_i32_1 = arith.constant 0 : i32
    return %arg0, %c0_i32, %c0_i32_0 : i32, i32, i32
  }
  func.func @transform_12(%arg0: i32) -> (i32, i32, i32) {
    %c0_i32 = arith.constant 0 : i32
    %c0_i32_0 = arith.constant 0 : i32
    %c0_i32_1 = arith.constant 0 : i32
    return %arg0, %c0_i32, %c0_i32_0 : i32, i32, i32
  }
  func.func @transform_13(%arg0: i32) -> (i32, i32) {
    %c0_i32 = arith.constant 0 : i32
    %c0_i32_0 = arith.constant 0 : i32
    %c0_i32_1 = arith.constant 0 : i32
    return %c0_i32, %c0_i32_0 : i32, i32
  }
  func.func @transform_14(%arg0: i32) -> (i32, i32) {
    %c0_i32 = arith.constant 0 : i32
    %c0_i32_0 = arith.constant 0 : i32
    %c0_i32_1 = arith.constant 0 : i32
    return %c0_i32, %c0_i32_0 : i32, i32
  }
  func.func @transform_15(%arg0: i32) -> (i32, i32) {
    %c0_i32 = arith.constant 0 : i32
    %c0_i32_0 = arith.constant 0 : i32
    %c0_i32_1 = arith.constant 0 : i32
    return %c0_i32, %c0_i32_0 : i32, i32
  }
  func.func @transform_16(%arg0: i32) -> (i32, i32) {
    %c0_i32 = arith.constant 0 : i32
    %c0_i32_0 = arith.constant 0 : i32
    %c0_i32_1 = arith.constant 0 : i32
    return %c0_i32, %c0_i32_0 : i32, i32
  }
  func.func @transform_17(%arg0: i32) -> (i32, i32) {
    %c0_i32 = arith.constant 0 : i32
    %c0_i32_0 = arith.constant 0 : i32
    %c0_i32_1 = arith.constant 0 : i32
    return %c0_i32, %c0_i32_0 : i32, i32
  }
  func.func @transform_18(%arg0: i32) -> (i32, i32) {
    %c0_i32 = arith.constant 0 : i32
    %c0_i32_0 = arith.constant 0 : i32
    %c0_i32_1 = arith.constant 0 : i32
    return %c0_i32, %c0_i32_0 : i32, i32
  }
  func.func @transform_19(%arg0: i32) -> (i32, i32) {
    %c0_i32 = arith.constant 0 : i32
    %c0_i32_0 = arith.constant 0 : i32
    %c0_i32_1 = arith.constant 0 : i32
    return %c0_i32, %c0_i32_0 : i32, i32
  }
  func.func @transform_20(%arg0: i32) -> (i32, i32) {
    %c0_i32 = arith.constant 0 : i32
    %c0_i32_0 = arith.constant 0 : i32
    %c0_i32_1 = arith.constant 0 : i32
    return %c0_i32, %c0_i32_0 : i32, i32
  }
  func.func @transform_21(%arg0: i32) -> (i32, i32) {
    %c0_i32 = arith.constant 0 : i32
    %c0_i32_0 = arith.constant 0 : i32
    %c0_i32_1 = arith.constant 0 : i32
    return %c0_i32, %c0_i32_0 : i32, i32
  }
}

</mosaic_0001>

<llo_original>
// kernel: attn_a2c_forward.1
$region0: #{attn_a2c_forward.1}
  #allocation0 [shape = 'u32[]', space=smem, size = 0x4, offset = 0x4, fixed_abs, tag = 'smem constant byte address 0x4 - core index']
  #allocation1 [shape = 'u32[144,128]{1,0:T(1,128)}', space=vmem, size = 0x12000, scoped, tag = 'internal scratch']
  #allocation2 [shape = 'f32[16,32]{1,0:T(8,128)}', space=vmem, size = 0x2000, scoped, tag = 'scratch operand']
  %s0 = inlined_call_operand.vmem [shape: f32[16,32], index: 0, kind: input, shape index: {}]
  %s1 = inlined_call_operand.vmem [shape: f32[2,4], index: 1, kind: input, shape index: {}]
  %s2 = inlined_call_operand.vmem [shape: f32[2,4], index: 2, kind: input, shape index: {}]
  %s3 = inlined_call_operand.vmem [shape: f32[3,32,128], index: 3, kind: input, shape index: {}]
  %s4 = inlined_call_operand.vmem [shape: f32[3,32,128], index: 4, kind: input, shape index: {}]
  %s5 = inlined_call_operand.vmem [shape: f32[3,1,128], index: 5, kind: input, shape index: {}]
  %s6 = inlined_call_operand.vmem [shape: f32[3,32,96], index: 6, kind: input, shape index: {}]
  %s7 = inlined_call_operand.vmem [shape: f32[3,1,96], index: 7, kind: input, shape index: {}]
  %s8 = inlined_call_operand.vmem [shape: f32[3,32,32], index: 8, kind: input, shape index: {}]
  %s9 = inlined_call_operand.vmem [shape: f32[3,6,32], index: 9, kind: input, shape index: {}]
  %s10 = inlined_call_operand.vmem [shape: f32[3,32,2048], index: 10, kind: input, shape index: {}]
  %s11 = inlined_call_operand.vmem [shape: f32[3,1,2048], index: 11, kind: input, shape index: {}]
  %s12 = inlined_call_operand.vmem [shape: f32[3,2048,32], index: 12, kind: input, shape index: {}]
  %s13 = inlined_call_operand.vmem [shape: f32[32,128], index: 13, kind: input, shape index: {}]
  %s14 = inlined_call_operand.vmem [shape: f32[128,32], index: 14, kind: input, shape index: {}]
  %s15 = inlined_call_operand.vmem [shape: f32[32,8], index: 15, kind: input, shape index: {}]
  %s16 = inlined_call_operand.vmem [shape: f32[40,64], index: 16, kind: input, shape index: {}]
  %s17 = inlined_call_operand.vmem [shape: f32[64,8], index: 17, kind: input, shape index: {}]
  %s18 = inlined_call_operand.vmem [shape: f32[8,1], index: 18, kind: input, shape index: {}]
  %s19 = inlined_call_operand.vmem [shape: f32[6,128], index: 19, kind: input, shape index: {}]
  %s20 = inlined_call_operand.hbm [shape: f32[2,4], index: 20, kind: output, shape index: {0}]
  %s21 = inlined_call_operand.vmem [shape: f32[2,1], index: 21, kind: output, shape index: {1}]
  %22 = xla_tuple %s20, %s21
  %s23 = sld [smem:[#allocation0]]
  $region129: #{attn_a2c_forward.1} parent=0
    _
  %s25 = ssub.s32 1, %s23
  %s26 = scalar_select 0, %s25, %s23
  $region1: #{attn_a2c_forward.1} parent=0
    #allocation3 [shape = 'u8[1024]{0}', space=vmem, size = 0x400, scoped, tag = 'output window, operand 0, single buffered']
    #allocation4 [shape = 's32[2]{0}', space=sflag, size = 0x8, scoped, tag = 'scoped memory for attn_a2c_forward.1']
    %27 = vsyncpa [#allocation4], 0
    loop: start=0, step=1, limit=5
    $region2: #{attn_a2c_forward.1} parent=1 // loop_pre_header
      _
    $region3: #{attn_a2c_forward.1} parent=1 // loop_header
      %s29 = sphi 0, %s33
      %p30 = scmp.ge.s32.totalorder %s29, 5
      %s37 = sphi 0, %s37
      %s39 = sphi 0, %s37
      %s40 = sphi 0, %s39
      %s54 = sphi 0, %s40
      %s58 = sphi 0, %s58
      %s60 = sphi 0, %s58
      %s61 = sphi 0, %s60
      %s75 = sphi 0, %s61
      %s79 = sphi 0, %s79
      %s81 = sphi 0, %s79
      %s82 = sphi 0, %s81
      %s96 = sphi 0, %s82
      %s102 = sphi 0, %s104
      %s105 = sphi 0, %s102
      %s106 = sphi 0, %s105
      %s122 = sphi 0, %s106
      %s128 = sphi 0, %s130
      %s131 = sphi 0, %s128
      %s132 = sphi 0, %s131
      %s148 = sphi 0, %s132
      %s154 = sphi 0, %s156
      %s157 = sphi 0, %s154
      %s158 = sphi 0, %s157
      %s174 = sphi 0, %s158
      %s180 = sphi 0, %s182
      %s183 = sphi 0, %s180
      %s184 = sphi 0, %s183
      %s200 = sphi 0, %s184
      %s206 = sphi 0, %s208
      %s209 = sphi 0, %s206
      %s210 = sphi 0, %s209
      %s226 = sphi 0, %s210
      %s232 = sphi 0, %s234
      %s235 = sphi 0, %s232
      %s236 = sphi 0, %s235
      %s252 = sphi 0, %s236
      %s258 = sphi 0, %s260
      %s261 = sphi 0, %s258
      %s262 = sphi 0, %s261
      %s278 = sphi 0, %s262
      %s284 = sphi 0, %s286
      %s287 = sphi 0, %s284
      %s288 = sphi 0, %s287
      %s304 = sphi 0, %s288
      %s310 = sphi 0, %s312
      %s313 = sphi 0, %s310
      %s314 = sphi 0, %s313
      %s330 = sphi 0, %s314
      %s336 = sphi 0, %s338
      %s339 = sphi 0, %s336
      %s340 = sphi 0, %s339
      %s356 = sphi 0, %s340
      %s360 = sphi 0, %s360
      %s362 = sphi 0, %s360
      %s363 = sphi 0, %s362
      %s377 = sphi 0, %s363
      %s381 = sphi 0, %s381
      %s383 = sphi 0, %s381
      %s384 = sphi 0, %s383
      %s398 = sphi 0, %s384
      %s402 = sphi 0, %s402
      %s404 = sphi 0, %s402
      %s405 = sphi 0, %s404
      %s419 = sphi 0, %s405
      %s423 = sphi 0, %s423
      %s425 = sphi 0, %s423
      %s426 = sphi 0, %s425
      %s440 = sphi 0, %s426
      %s444 = sphi 0, %s444
      %s446 = sphi 0, %s444
      %s447 = sphi 0, %s446
      %s461 = sphi 0, %s447
      %s465 = sphi 0, %s465
      %s467 = sphi 0, %s465
      %s468 = sphi 0, %s467
      %s482 = sphi 0, %s468
      %s486 = sphi 0, %s486
      %s488 = sphi 0, %s486
      %s489 = sphi 0, %s488
      %s503 = sphi 0, %s489
      %s507 = sphi 0, %s507
      %s509 = sphi 0, %s507
      %s510 = sphi 0, %s509
      %s524 = sphi 0, %s510
      %s528 = sphi 0, %s528
      %s530 = sphi 0, %s528
      %s531 = sphi 0, %s530
      %s545 = sphi 0, %s531
    $region4: #{attn_a2c_forward.1} parent=1 // loop_header_branch
      %32 = sbr.rel (%p30) target = $region8
    $region5: #{attn_a2c_forward.1} parent=1 // loop_body
      %s34 = ssub.s32 %s29, 1
      %s35 = ssub.s32 %s29, 2
      %s36 = sadd.s32 %s29, 1
      %s38 = sadd.s32 %s37, 1
      %p41 = scmp.eq.s32.totalorder %s29, 2
      %p42 = scmp.ne.s32.totalorder %s37, %s39
      %p43 = scmp.eq.s32.totalorder %s29, 0
      %p44 = por %p42, %p43
      %p45 = scmp.ne.s32.totalorder %s37, %s39
      %p46 = scmp.eq.s32.totalorder %s34, 2
      %p47 = por %p45, %p46
      %p48 = scmp.ne.s32.totalorder %s39, %s40
      %p49 = scmp.eq.s32.totalorder %s34, 0
      %p50 = por %p48, %p49
      %p51 = scmp.ne.s32.totalorder %s39, %s40
      %p52 = scmp.eq.s32.totalorder %s35, 2
      %p53 = por %p51, %p52
      %p55 = scmp.ne.s32.totalorder %s40, %s54
      %p56 = scmp.eq.s32.totalorder %s35, 0
      %p57 = por %p55, %p56
      %s59 = sadd.s32 %s58, 1
      %p62 = scmp.eq.s32.totalorder %s29, 2
      %p63 = scmp.ne.s32.totalorder %s58, %s60
      %p64 = scmp.eq.s32.totalorder %s29, 0
      %p65 = por %p63, %p64
      %p66 = scmp.ne.s32.totalorder %s58, %s60
      %p67 = scmp.eq.s32.totalorder %s34, 2
      %p68 = por %p66, %p67
      %p69 = scmp.ne.s32.totalorder %s60, %s61
      %p70 = scmp.eq.s32.totalorder %s34, 0
      %p71 = por %p69, %p70
      %p72 = scmp.ne.s32.totalorder %s60, %s61
      %p73 = scmp.eq.s32.totalorder %s35, 2
      %p74 = por %p72, %p73
      %p76 = scmp.ne.s32.totalorder %s61, %s75
      %p77 = scmp.eq.s32.totalorder %s35, 0
      %p78 = por %p76, %p77
      %s80 = sadd.s32 %s79, 1
      %p83 = scmp.eq.s32.totalorder %s29, 2
      %p84 = scmp.ne.s32.totalorder %s79, %s81
      %p85 = scmp.eq.s32.totalorder %s29, 0
      %p86 = por %p84, %p85
      %p87 = scmp.ne.s32.totalorder %s79, %s81
      %p88 = scmp.eq.s32.totalorder %s34, 2
      %p89 = por %p87, %p88
      %p90 = scmp.ne.s32.totalorder %s81, %s82
      %p91 = scmp.eq.s32.totalorder %s34, 0
      %p92 = por %p90, %p91
      %p93 = scmp.ne.s32.totalorder %s81, %s82
      %p94 = scmp.eq.s32.totalorder %s35, 2
      %p95 = por %p93, %p94
      %p97 = scmp.ne.s32.totalorder %s82, %s96
      %p98 = scmp.eq.s32.totalorder %s35, 0
      %p99 = por %p97, %p98
      %s100 = ssub.s32 %s29, %s36
      %p101 = scmp.eq.s32.totalorder %s100, 0
      %s103 = sadd.s32 %s102, 1
      %s104 = scalar_select %p101, %s102, %s103
      %p107 = pneg %p101
      %p108 = scmp.eq.s32.totalorder %s29, 2
      %p109 = por %p107, %p108
      %p110 = scmp.ne.s32.totalorder %s102, %s105
      %p111 = scmp.eq.s32.totalorder %s29, 0
      %p112 = por %p110, %p111
      %p113 = scmp.ne.s32.totalorder %s102, %s105
      %p114 = scmp.eq.s32.totalorder %s34, 2
      %p115 = por %p113, %p114
      %p116 = scmp.ne.s32.totalorder %s105, %s106
      %p117 = scmp.eq.s32.totalorder %s34, 0
      %p118 = por %p116, %p117
      %p119 = scmp.ne.s32.totalorder %s105, %s106
      %p120 = scmp.eq.s32.totalorder %s35, 2
      %p121 = por %p119, %p120
      %p123 = scmp.ne.s32.totalorder %s106, %s122
      %p124 = scmp.eq.s32.totalorder %s35, 0
      %p125 = por %p123, %p124
      %s126 = ssub.s32 %s29, %s36
      %p127 = scmp.eq.s32.totalorder %s126, 0
      %s129 = sadd.s32 %s128, 1
      %s130 = scalar_select %p127, %s128, %s129
      %p133 = pneg %p127
      %p134 = scmp.eq.s32.totalorder %s29, 2
      %p135 = por %p133, %p134
      %p136 = scmp.ne.s32.totalorder %s128, %s131
      %p137 = scmp.eq.s32.totalorder %s29, 0
      %p138 = por %p136, %p137
      %p139 = scmp.ne.s32.totalorder %s128, %s131
      %p140 = scmp.eq.s32.totalorder %s34, 2
      %p141 = por %p139, %p140
      %p142 = scmp.ne.s32.totalorder %s131, %s132
      %p143 = scmp.eq.s32.totalorder %s34, 0
      %p144 = por %p142, %p143
      %p145 = scmp.ne.s32.totalorder %s131, %s132
      %p146 = scmp.eq.s32.totalorder %s35, 2
      %p147 = por %p145, %p146
      %p149 = scmp.ne.s32.totalorder %s132, %s148
      %p150 = scmp.eq.s32.totalorder %s35, 0
      %p151 = por %p149, %p150
      %s152 = ssub.s32 %s29, %s36
      %p153 = scmp.eq.s32.totalorder %s152, 0
      %s155 = sadd.s32 %s154, 1
      %s156 = scalar_select %p153, %s154, %s155
      %p159 = pneg %p153
      %p160 = scmp.eq.s32.totalorder %s29, 2
      %p161 = por %p159, %p160
      %p162 = scmp.ne.s32.totalorder %s154, %s157
      %p163 = scmp.eq.s32.totalorder %s29, 0
      %p164 = por %p162, %p163
      %p165 = scmp.ne.s32.totalorder %s154, %s157
      %p166 = scmp.eq.s32.totalorder %s34, 2
      %p167 = por %p165, %p166
      %p168 = scmp.ne.s32.totalorder %s157, %s158
      %p169 = scmp.eq.s32.totalorder %s34, 0
      %p170 = por %p168, %p169
      %p171 = scmp.ne.s32.totalorder %s157, %s158
      %p172 = scmp.eq.s32.totalorder %s35, 2
      %p173 = por %p171, %p172
      %p175 = scmp.ne.s32.totalorder %s158, %s174
      %p176 = scmp.eq.s32.totalorder %s35, 0
      %p177 = por %p175, %p176
      %s178 = ssub.s32 %s29, %s36
      %p179 = scmp.eq.s32.totalorder %s178, 0
      %s181 = sadd.s32 %s180, 1
      %s182 = scalar_select %p179, %s180, %s181
      %p185 = pneg %p179
      %p186 = scmp.eq.s32.totalorder %s29, 2
      %p187 = por %p185, %p186
      %p188 = scmp.ne.s32.totalorder %s180, %s183
      %p189 = scmp.eq.s32.totalorder %s29, 0
      %p190 = por %p188, %p189
      %p191 = scmp.ne.s32.totalorder %s180, %s183
      %p192 = scmp.eq.s32.totalorder %s34, 2
      %p193 = por %p191, %p192
      %p194 = scmp.ne.s32.totalorder %s183, %s184
      %p195 = scmp.eq.s32.totalorder %s34, 0
      %p196 = por %p194, %p195
      %p197 = scmp.ne.s32.totalorder %s183, %s184
      %p198 = scmp.eq.s32.totalorder %s35, 2
      %p199 = por %p197, %p198
      %p201 = scmp.ne.s32.totalorder %s184, %s200
      %p202 = scmp.eq.s32.totalorder %s35, 0
      %p203 = por %p201, %p202
      %s204 = ssub.s32 %s29, %s36
      %p205 = scmp.eq.s32.totalorder %s204, 0
      %s207 = sadd.s32 %s206, 1
      %s208 = scalar_select %p205, %s206, %s207
      %p211 = pneg %p205
      %p212 = scmp.eq.s32.totalorder %s29, 2
      %p213 = por %p211, %p212
      %p214 = scmp.ne.s32.totalorder %s206, %s209
      %p215 = scmp.eq.s32.totalorder %s29, 0
      %p216 = por %p214, %p215
      %p217 = scmp.ne.s32.totalorder %s206, %s209
      %p218 = scmp.eq.s32.totalorder %s34, 2
      %p219 = por %p217, %p218
      %p220 = scmp.ne.s32.totalorder %s209, %s210
      %p221 = scmp.eq.s32.totalorder %s34, 0
      %p222 = por %p220, %p221
      %p223 = scmp.ne.s32.totalorder %s209, %s210
      %p224 = scmp.eq.s32.totalorder %s35, 2
      %p225 = por %p223, %p224
      %p227 = scmp.ne.s32.totalorder %s210, %s226
      %p228 = scmp.eq.s32.totalorder %s35, 0
      %p229 = por %p227, %p228
      %s230 = ssub.s32 %s29, %s36
      %p231 = scmp.eq.s32.totalorder %s230, 0
      %s233 = sadd.s32 %s232, 1
      %s234 = scalar_select %p231, %s232, %s233
      %p237 = pneg %p231
      %p238 = scmp.eq.s32.totalorder %s29, 2
      %p239 = por %p237, %p238
      %p240 = scmp.ne.s32.totalorder %s232, %s235
      %p241 = scmp.eq.s32.totalorder %s29, 0
      %p242 = por %p240, %p241
      %p243 = scmp.ne.s32.totalorder %s232, %s235
      %p244 = scmp.eq.s32.totalorder %s34, 2
      %p245 = por %p243, %p244
      %p246 = scmp.ne.s32.totalorder %s235, %s236
      %p247 = scmp.eq.s32.totalorder %s34, 0
      %p248 = por %p246, %p247
      %p249 = scmp.ne.s32.totalorder %s235, %s236
      %p250 = scmp.eq.s32.totalorder %s35, 2
      %p251 = por %p249, %p250
      %p253 = scmp.ne.s32.totalorder %s236, %s252
      %p254 = scmp.eq.s32.totalorder %s35, 0
      %p255 = por %p253, %p254
      %s256 = ssub.s32 %s29, %s36
      %p257 = scmp.eq.s32.totalorder %s256, 0
      %s259 = sadd.s32 %s258, 1
      %s260 = scalar_select %p257, %s258, %s259
      %p263 = pneg %p257
      %p264 = scmp.eq.s32.totalorder %s29, 2
      %p265 = por %p263, %p264
      %p266 = scmp.ne.s32.totalorder %s258, %s261
      %p267 = scmp.eq.s32.totalorder %s29, 0
      %p268 = por %p266, %p267
      %p269 = scmp.ne.s32.totalorder %s258, %s261
      %p270 = scmp.eq.s32.totalorder %s34, 2
      %p271 = por %p269, %p270
      %p272 = scmp.ne.s32.totalorder %s261, %s262
      %p273 = scmp.eq.s32.totalorder %s34, 0
      %p274 = por %p272, %p273
      %p275 = scmp.ne.s32.totalorder %s261, %s262
      %p276 = scmp.eq.s32.totalorder %s35, 2
      %p277 = por %p275, %p276
      %p279 = scmp.ne.s32.totalorder %s262, %s278
      %p280 = scmp.eq.s32.totalorder %s35, 0
      %p281 = por %p279, %p280
      %s282 = ssub.s32 %s29, %s36
      %p283 = scmp.eq.s32.totalorder %s282, 0
      %s285 = sadd.s32 %s284, 1
      %s286 = scalar_select %p283, %s284, %s285
      %p289 = pneg %p283
      %p290 = scmp.eq.s32.totalorder %s29, 2
      %p291 = por %p289, %p290
      %p292 = scmp.ne.s32.totalorder %s284, %s287
      %p293 = scmp.eq.s32.totalorder %s29, 0
      %p294 = por %p292, %p293
      %p295 = scmp.ne.s32.totalorder %s284, %s287
      %p296 = scmp.eq.s32.totalorder %s34, 2
      %p297 = por %p295, %p296
      %p298 = scmp.ne.s32.totalorder %s287, %s288
      %p299 = scmp.eq.s32.totalorder %s34, 0
      %p300 = por %p298, %p299
      %p301 = scmp.ne.s32.totalorder %s287, %s288
      %p302 = scmp.eq.s32.totalorder %s35, 2
      %p303 = por %p301, %p302
      %p305 = scmp.ne.s32.totalorder %s288, %s304
      %p306 = scmp.eq.s32.totalorder %s35, 0
      %p307 = por %p305, %p306
      %s308 = ssub.s32 %s29, %s36
      %p309 = scmp.eq.s32.totalorder %s308, 0
      %s311 = sadd.s32 %s310, 1
      %s312 = scalar_select %p309, %s310, %s311
      %p315 = pneg %p309
      %p316 = scmp.eq.s32.totalorder %s29, 2
      %p317 = por %p315, %p316
      %p318 = scmp.ne.s32.totalorder %s310, %s313
      %p319 = scmp.eq.s32.totalorder %s29, 0
      %p320 = por %p318, %p319
      %p321 = scmp.ne.s32.totalorder %s310, %s313
      %p322 = scmp.eq.s32.totalorder %s34, 2
      %p323 = por %p321, %p322
      %p324 = scmp.ne.s32.totalorder %s313, %s314
      %p325 = scmp.eq.s32.totalorder %s34, 0
      %p326 = por %p324, %p325
      %p327 = scmp.ne.s32.totalorder %s313, %s314
      %p328 = scmp.eq.s32.totalorder %s35, 2
      %p329 = por %p327, %p328
      %p331 = scmp.ne.s32.totalorder %s314, %s330
      %p332 = scmp.eq.s32.totalorder %s35, 0
      %p333 = por %p331, %p332
      %s334 = ssub.s32 %s29, %s36
      %p335 = scmp.eq.s32.totalorder %s334, 0
      %s337 = sadd.s32 %s336, 1
      %s338 = scalar_select %p335, %s336, %s337
      %p341 = pneg %p335
      %p342 = scmp.eq.s32.totalorder %s29, 2
      %p343 = por %p341, %p342
      %p344 = scmp.ne.s32.totalorder %s336, %s339
      %p345 = scmp.eq.s32.totalorder %s29, 0
      %p346 = por %p344, %p345
      %p347 = scmp.ne.s32.totalorder %s336, %s339
      %p348 = scmp.eq.s32.totalorder %s34, 2
      %p349 = por %p347, %p348
      %p350 = scmp.ne.s32.totalorder %s339, %s340
      %p351 = scmp.eq.s32.totalorder %s34, 0
      %p352 = por %p350, %p351
      %p353 = scmp.ne.s32.totalorder %s339, %s340
      %p354 = scmp.eq.s32.totalorder %s35, 2
      %p355 = por %p353, %p354
      %p357 = scmp.ne.s32.totalorder %s340, %s356
      %p358 = scmp.eq.s32.totalorder %s35, 0
      %p359 = por %p357, %p358
      %s361 = sadd.s32 %s360, 1
      %p364 = scmp.eq.s32.totalorder %s29, 2
      %p365 = scmp.ne.s32.totalorder %s360, %s362
      %p366 = scmp.eq.s32.totalorder %s29, 0
      %p367 = por %p365, %p366
      %p368 = scmp.ne.s32.totalorder %s360, %s362
      %p369 = scmp.eq.s32.totalorder %s34, 2
      %p370 = por %p368, %p369
      %p371 = scmp.ne.s32.totalorder %s362, %s363
      %p372 = scmp.eq.s32.totalorder %s34, 0
      %p373 = por %p371, %p372
      %p374 = scmp.ne.s32.totalorder %s362, %s363
      %p375 = scmp.eq.s32.totalorder %s35, 2
      %p376 = por %p374, %p375
      %p378 = scmp.ne.s32.totalorder %s363, %s377
      %p379 = scmp.eq.s32.totalorder %s35, 0
      %p380 = por %p378, %p379
      %s382 = sadd.s32 %s381, 1
      %p385 = scmp.eq.s32.totalorder %s29, 2
      %p386 = scmp.ne.s32.totalorder %s381, %s383
      %p387 = scmp.eq.s32.totalorder %s29, 0
      %p388 = por %p386, %p387
      %p389 = scmp.ne.s32.totalorder %s381, %s383
      %p390 = scmp.eq.s32.totalorder %s34, 2
      %p391 = por %p389, %p390
      %p392 = scmp.ne.s32.totalorder %s383, %s384
      %p393 = scmp.eq.s32.totalorder %s34, 0
      %p394 = por %p392, %p393
      %p395 = scmp.ne.s32.totalorder %s383, %s384
      %p396 = scmp.eq.s32.totalorder %s35, 2
      %p397 = por %p395, %p396
      %p399 = scmp.ne.s32.totalorder %s384, %s398
      %p400 = scmp.eq.s32.totalorder %s35, 0
      %p401 = por %p399, %p400
      %s403 = sadd.s32 %s402, 1
      %p406 = scmp.eq.s32.totalorder %s29, 2
      %p407 = scmp.ne.s32.totalorder %s402, %s404
      %p408 = scmp.eq.s32.totalorder %s29, 0
      %p409 = por %p407, %p408
      %p410 = scmp.ne.s32.totalorder %s402, %s404
      %p411 = scmp.eq.s32.totalorder %s34, 2
      %p412 = por %p410, %p411
      %p413 = scmp.ne.s32.totalorder %s404, %s405
      %p414 = scmp.eq.s32.totalorder %s34, 0
      %p415 = por %p413, %p414
      %p416 = scmp.ne.s32.totalorder %s404, %s405
      %p417 = scmp.eq.s32.totalorder %s35, 2
      %p418 = por %p416, %p417
      %p420 = scmp.ne.s32.totalorder %s405, %s419
      %p421 = scmp.eq.s32.totalorder %s35, 0
      %p422 = por %p420, %p421
      %s424 = sadd.s32 %s423, 1
      %p427 = scmp.eq.s32.totalorder %s29, 2
      %p428 = scmp.ne.s32.totalorder %s423, %s425
      %p429 = scmp.eq.s32.totalorder %s29, 0
      %p430 = por %p428, %p429
      %p431 = scmp.ne.s32.totalorder %s423, %s425
      %p432 = scmp.eq.s32.totalorder %s34, 2
      %p433 = por %p431, %p432
      %p434 = scmp.ne.s32.totalorder %s425, %s426
      %p435 = scmp.eq.s32.totalorder %s34, 0
      %p436 = por %p434, %p435
      %p437 = scmp.ne.s32.totalorder %s425, %s426
      %p438 = scmp.eq.s32.totalorder %s35, 2
      %p439 = por %p437, %p438
      %p441 = scmp.ne.s32.totalorder %s426, %s440
      %p442 = scmp.eq.s32.totalorder %s35, 0
      %p443 = por %p441, %p442
      %s445 = sadd.s32 %s444, 1
      %p448 = scmp.eq.s32.totalorder %s29, 2
      %p449 = scmp.ne.s32.totalorder %s444, %s446
      %p450 = scmp.eq.s32.totalorder %s29, 0
      %p451 = por %p449, %p450
      %p452 = scmp.ne.s32.totalorder %s444, %s446
      %p453 = scmp.eq.s32.totalorder %s34, 2
      %p454 = por %p452, %p453
      %p455 = scmp.ne.s32.totalorder %s446, %s447
      %p456 = scmp.eq.s32.totalorder %s34, 0
      %p457 = por %p455, %p456
      %p458 = scmp.ne.s32.totalorder %s446, %s447
      %p459 = scmp.eq.s32.totalorder %s35, 2
      %p460 = por %p458, %p459
      %p462 = scmp.ne.s32.totalorder %s447, %s461
      %p463 = scmp.eq.s32.totalorder %s35, 0
      %p464 = por %p462, %p463
      %s466 = sadd.s32 %s465, 1
      %p469 = scmp.eq.s32.totalorder %s29, 2
      %p470 = scmp.ne.s32.totalorder %s465, %s467
      %p471 = scmp.eq.s32.totalorder %s29, 0
      %p472 = por %p470, %p471
      %p473 = scmp.ne.s32.totalorder %s465, %s467
      %p474 = scmp.eq.s32.totalorder %s34, 2
      %p475 = por %p473, %p474
      %p476 = scmp.ne.s32.totalorder %s467, %s468
      %p477 = scmp.eq.s32.totalorder %s34, 0
      %p478 = por %p476, %p477
      %p479 = scmp.ne.s32.totalorder %s467, %s468
      %p480 = scmp.eq.s32.totalorder %s35, 2
      %p481 = por %p479, %p480
      %p483 = scmp.ne.s32.totalorder %s468, %s482
      %p484 = scmp.eq.s32.totalorder %s35, 0
      %p485 = por %p483, %p484
      %s487 = sadd.s32 %s486, 1
      %p490 = scmp.eq.s32.totalorder %s29, 2
      %p491 = scmp.ne.s32.totalorder %s486, %s488
      %p492 = scmp.eq.s32.totalorder %s29, 0
      %p493 = por %p491, %p492
      %p494 = scmp.ne.s32.totalorder %s486, %s488
      %p495 = scmp.eq.s32.totalorder %s34, 2
      %p496 = por %p494, %p495
      %p497 = scmp.ne.s32.totalorder %s488, %s489
      %p498 = scmp.eq.s32.totalorder %s34, 0
      %p499 = por %p497, %p498
      %p500 = scmp.ne.s32.totalorder %s488, %s489
      %p501 = scmp.eq.s32.totalorder %s35, 2
      %p502 = por %p500, %p501
      %p504 = scmp.ne.s32.totalorder %s489, %s503
      %p505 = scmp.eq.s32.totalorder %s35, 0
      %p506 = por %p504, %p505
      %s508 = sadd.s32 %s507, 1
      %p511 = scmp.eq.s32.totalorder %s29, 2
      %p512 = scmp.ne.s32.totalorder %s507, %s509
      %p513 = scmp.eq.s32.totalorder %s29, 0
      %p514 = por %p512, %p513
      %p515 = scmp.ne.s32.totalorder %s507, %s509
      %p516 = scmp.eq.s32.totalorder %s34, 2
      %p517 = por %p515, %p516
      %p518 = scmp.ne.s32.totalorder %s509, %s510
      %p519 = scmp.eq.s32.totalorder %s34, 0
      %p520 = por %p518, %p519
      %p521 = scmp.ne.s32.totalorder %s509, %s510
      %p522 = scmp.eq.s32.totalorder %s35, 2
      %p523 = por %p521, %p522
      %p525 = scmp.ne.s32.totalorder %s510, %s524
      %p526 = scmp.eq.s32.totalorder %s35, 0
      %p527 = por %p525, %p526
      %s529 = sadd.s32 %s528, 1
      %p532 = scmp.eq.s32.totalorder %s29, 2
      %p533 = scmp.ne.s32.totalorder %s528, %s530
      %p534 = scmp.eq.s32.totalorder %s29, 0
      %p535 = por %p533, %p534
      %p536 = scmp.ne.s32.totalorder %s528, %s530
      %p537 = scmp.eq.s32.totalorder %s34, 2
      %p538 = por %p536, %p537
      %p539 = scmp.ne.s32.totalorder %s530, %s531
      %p540 = scmp.eq.s32.totalorder %s34, 0
      %p541 = por %p539, %p540
      %p542 = scmp.ne.s32.totalorder %s530, %s531
      %p543 = scmp.eq.s32.totalorder %s35, 2
      %p544 = por %p542, %p543
      %p546 = scmp.ne.s32.totalorder %s531, %s545
      %p547 = scmp.eq.s32.totalorder %s35, 0
      %p548 = por %p546, %p547
      %p549 = scmp.le.s32.totalorder 1, %s29
      %p550 = scmp.lt.s32.totalorder %s29, 4
      %p551 = pnand %p549, %p550
      %p552 = pneg %p551
      // Predicated region
      $region9: #{attn_a2c_forward.1} parent=5 // pred_check
        _
      $region10: #{attn_a2c_forward.1} parent=5 // pred_check_branch
        %554 = sbr.rel (%p551) target = $region12
      $region11: #{attn_a2c_forward.1} parent=5 // pred_region
        %s555 = ssub.s32 %s29, 1
        // Predicated region
        $region13: #{attn_a2c_forward.1} parent=11 // pred_check
          %p556 = pneg %p50
        $region14: #{attn_a2c_forward.1} parent=11 // pred_check_branch
          %558 = sbr.rel (%p556) target = $region16
        $region15: #{attn_a2c_forward.1} parent=11 // pred_region
          _
        $region16: #{attn_a2c_forward.1} parent=11 // pred_fallthru
          _
        // Predicated region
        $region17: #{attn_a2c_forward.1} parent=11 // pred_check
          %p559 = pneg %p71
        $region18: #{attn_a2c_forward.1} parent=11 // pred_check_branch
          %561 = sbr.rel (%p559) target = $region20
        $region19: #{attn_a2c_forward.1} parent=11 // pred_region
          _
        $region20: #{attn_a2c_forward.1} parent=11 // pred_fallthru
          _
        // Predicated region
        $region21: #{attn_a2c_forward.1} parent=11 // pred_check
          %p562 = pneg %p92
        $region22: #{attn_a2c_forward.1} parent=11 // pred_check_branch
          %564 = sbr.rel (%p562) target = $region24
        $region23: #{attn_a2c_forward.1} parent=11 // pred_region
          _
        $region24: #{attn_a2c_forward.1} parent=11 // pred_fallthru
          _
        // Predicated region
        $region25: #{attn_a2c_forward.1} parent=11 // pred_check
          %p565 = pneg %p373
        $region26: #{attn_a2c_forward.1} parent=11 // pred_check_branch
          %567 = sbr.rel (%p565) target = $region28
        $region27: #{attn_a2c_forward.1} parent=11 // pred_region
          _
        $region28: #{attn_a2c_forward.1} parent=11 // pred_fallthru
          _
        // Predicated region
        $region29: #{attn_a2c_forward.1} parent=11 // pred_check
          %p568 = pneg %p394
        $region30: #{attn_a2c_forward.1} parent=11 // pred_check_branch
          %570 = sbr.rel (%p568) target = $region32
        $region31: #{attn_a2c_forward.1} parent=11 // pred_region
          _
        $region32: #{attn_a2c_forward.1} parent=11 // pred_fallthru
          _
        // Predicated region
        $region33: #{attn_a2c_forward.1} parent=11 // pred_check
          %p571 = pneg %p415
        $region34: #{attn_a2c_forward.1} parent=11 // pred_check_branch
          %573 = sbr.rel (%p571) target = $region36
        $region35: #{attn_a2c_forward.1} parent=11 // pred_region
          _
        $region36: #{attn_a2c_forward.1} parent=11 // pred_fallthru
          _
        // Predicated region
        $region37: #{attn_a2c_forward.1} parent=11 // pred_check
          %p574 = pneg %p436
        $region38: #{attn_a2c_forward.1} parent=11 // pred_check_branch
          %576 = sbr.rel (%p574) target = $region40
        $region39: #{attn_a2c_forward.1} parent=11 // pred_region
          _
        $region40: #{attn_a2c_forward.1} parent=11 // pred_fallthru
          _
        // Predicated region
        $region41: #{attn_a2c_forward.1} parent=11 // pred_check
          %p577 = pneg %p457
        $region42: #{attn_a2c_forward.1} parent=11 // pred_check_branch
          %579 = sbr.rel (%p577) target = $region44
        $region43: #{attn_a2c_forward.1} parent=11 // pred_region
          _
        $region44: #{attn_a2c_forward.1} parent=11 // pred_fallthru
          _
        // Predicated region
        $region45: #{attn_a2c_forward.1} parent=11 // pred_check
          %p580 = pneg %p478
        $region46: #{attn_a2c_forward.1} parent=11 // pred_check_branch
          %582 = sbr.rel (%p580) target = $region48
        $region47: #{attn_a2c_forward.1} parent=11 // pred_region
          _
        $region48: #{attn_a2c_forward.1} parent=11 // pred_fallthru
          _
        // Predicated region
        $region49: #{attn_a2c_forward.1} parent=11 // pred_check
          %p583 = pneg %p499
        $region50: #{attn_a2c_forward.1} parent=11 // pred_check_branch
          %585 = sbr.rel (%p583) target = $region52
        $region51: #{attn_a2c_forward.1} parent=11 // pred_region
          _
        $region52: #{attn_a2c_forward.1} parent=11 // pred_fallthru
          _
      $region12: #{attn_a2c_forward.1} parent=5 // pred_fallthru
        _
      %p586 = scmp.lt.s32.totalorder %s29, 3
      // Predicated region
      $region53: #{attn_a2c_forward.1} parent=5 // pred_check
        %p587 = pneg %p586
      $region54: #{attn_a2c_forward.1} parent=5 // pred_check_branch
        %589 = sbr.rel (%p587) target = $region56
      $region55: #{attn_a2c_forward.1} parent=5 // pred_region
        // Predicated region
        $region57: #{attn_a2c_forward.1} parent=55 // pred_check
          %p590 = pneg %p112
        $region58: #{attn_a2c_forward.1} parent=55 // pred_check_branch
          %592 = sbr.rel (%p590) target = $region60
        $region59: #{attn_a2c_forward.1} parent=55 // pred_region
          %p593 = scmp.lt.s32.totalorder %s29, 2
          %s594 = scalar_select %p593, %s29, 2
          %s595 = smul.addr %s594, 4
          %s596 = smul.addr %s595, 8
          %s597 = scalar_lea.vmem %s3, %s596
        $region60: #{attn_a2c_forward.1} parent=55 // pred_fallthru
          _
        // Predicated region
        $region61: #{attn_a2c_forward.1} parent=55 // pred_check
          %p598 = pneg %p138
        $region62: #{attn_a2c_forward.1} parent=55 // pred_check_branch
          %600 = sbr.rel (%p598) target = $region64
        $region63: #{attn_a2c_forward.1} parent=55 // pred_region
          %p601 = scmp.lt.s32.totalorder %s29, 2
          %s602 = scalar_select %p601, %s29, 2
          %s603 = smul.addr %s602, 4
          %s604 = smul.addr %s603, 8
          %s605 = scalar_lea.vmem %s4, %s604
        $region64: #{attn_a2c_forward.1} parent=55 // pred_fallthru
          _
        // Predicated region
        $region65: #{attn_a2c_forward.1} parent=55 // pred_check
          %p606 = pneg %p164
        $region66: #{attn_a2c_forward.1} parent=55 // pred_check_branch
          %608 = sbr.rel (%p606) target = $region68
        $region67: #{attn_a2c_forward.1} parent=55 // pred_region
          %p609 = scmp.lt.s32.totalorder %s29, 2
          %s610 = scalar_select %p609, %s29, 2
          %s611 = scalar_lea.vmem %s5, %s610
        $region68: #{attn_a2c_forward.1} parent=55 // pred_fallthru
          _
        // Predicated region
        $region69: #{attn_a2c_forward.1} parent=55 // pred_check
          %p612 = pneg %p190
        $region70: #{attn_a2c_forward.1} parent=55 // pred_check_branch
          %614 = sbr.rel (%p612) target = $region72
        $region71: #{attn_a2c_forward.1} parent=55 // pred_region
          %p615 = scmp.lt.s32.totalorder %s29, 2
          %s616 = scalar_select %p615, %s29, 2
          %s617 = smul.addr %s616, 4
          %s618 = smul.addr %s617, 8
          %s619 = scalar_lea.vmem %s6, %s618
        $region72: #{attn_a2c_forward.1} parent=55 // pred_fallthru
          _
        // Predicated region
        $region73: #{attn_a2c_forward.1} parent=55 // pred_check
          %p620 = pneg %p216
        $region74: #{attn_a2c_forward.1} parent=55 // pred_check_branch
          %622 = sbr.rel (%p620) target = $region76
        $region75: #{attn_a2c_forward.1} parent=55 // pred_region
          %p623 = scmp.lt.s32.totalorder %s29, 2
          %s624 = scalar_select %p623, %s29, 2
          %s625 = scalar_lea.vmem %s7, %s624
        $region76: #{attn_a2c_forward.1} parent=55 // pred_fallthru
          _
        // Predicated region
        $region77: #{attn_a2c_forward.1} parent=55 // pred_check
          %p626 = pneg %p242
        $region78: #{attn_a2c_forward.1} parent=55 // pred_check_branch
          %628 = sbr.rel (%p626) target = $region80
        $region79: #{attn_a2c_forward.1} parent=55 // pred_region
          %p629 = scmp.lt.s32.totalorder %s29, 2
          %s630 = scalar_select %p629, %s29, 2
          %s631 = smul.addr %s630, 4
          %s632 = smul.addr %s631, 8
          %s633 = scalar_lea.vmem %s8, %s632
        $region80: #{attn_a2c_forward.1} parent=55 // pred_fallthru
          _
        // Predicated region
        $region81: #{attn_a2c_forward.1} parent=55 // pred_check
          %p634 = pneg %p268
        $region82: #{attn_a2c_forward.1} parent=55 // pred_check_branch
          %636 = sbr.rel (%p634) target = $region84
        $region83: #{attn_a2c_forward.1} parent=55 // pred_region
          %p637 = scmp.lt.s32.totalorder %s29, 2
          %s638 = scalar_select %p637, %s29, 2
          %s639 = smul.addr %s638, 8
          %s640 = scalar_lea.vmem %s9, %s639
        $region84: #{attn_a2c_forward.1} parent=55 // pred_fallthru
          _
        // Predicated region
        $region85: #{attn_a2c_forward.1} parent=55 // pred_check
          %p641 = pneg %p294
        $region86: #{attn_a2c_forward.1} parent=55 // pred_check_branch
          %643 = sbr.rel (%p641) target = $region88
        $region87: #{attn_a2c_forward.1} parent=55 // pred_region
          %p644 = scmp.lt.s32.totalorder %s29, 2
          %s645 = scalar_select %p644, %s29, 2
          %s646 = smul.addr %s645, 64
          %s647 = smul.addr %s646, 8
          %s648 = scalar_lea.vmem %s10, %s647
        $region88: #{attn_a2c_forward.1} parent=55 // pred_fallthru
          _
        // Predicated region
        $region89: #{attn_a2c_forward.1} parent=55 // pred_check
          %p649 = pneg %p320
        $region90: #{attn_a2c_forward.1} parent=55 // pred_check_branch
          %651 = sbr.rel (%p649) target = $region92
        $region91: #{attn_a2c_forward.1} parent=55 // pred_region
          %p652 = scmp.lt.s32.totalorder %s29, 2
          %s653 = scalar_select %p652, %s29, 2
          %s654 = smul.addr %s653, 16
          %s655 = scalar_lea.vmem %s11, %s654
        $region92: #{attn_a2c_forward.1} parent=55 // pred_fallthru
          _
        // Predicated region
        $region93: #{attn_a2c_forward.1} parent=55 // pred_check
          %p656 = pneg %p346
        $region94: #{attn_a2c_forward.1} parent=55 // pred_check_branch
          %658 = sbr.rel (%p656) target = $region96
        $region95: #{attn_a2c_forward.1} parent=55 // pred_region
          %p659 = scmp.lt.s32.totalorder %s29, 2
          %s660 = scalar_select %p659, %s29, 2
          %s661 = smul.addr %s660, 256
          %s662 = smul.addr %s661, 8
          %s663 = scalar_lea.vmem %s12, %s662
        $region96: #{attn_a2c_forward.1} parent=55 // pred_fallthru
          _
      $region56: #{attn_a2c_forward.1} parent=5 // pred_fallthru
        _
      %p664 = scmp.le.s32.totalorder 1, %s29
      %p665 = scmp.lt.s32.totalorder %s29, 4
      %p666 = pnand %p664, %p665
      %p667 = pneg %p666
      // Predicated region
      $region97: #{attn_a2c_forward.1} parent=5 // pred_check
        _
      $region98: #{attn_a2c_forward.1} parent=5 // pred_check_branch
        %669 = sbr.rel (%p666) target = $region100
      $region99: #{attn_a2c_forward.1} parent=5 // pred_region
        %s670 = ssub.s32 %s29, 1
        %p671 = pneg %p50
        %p672 = pneg %p47
        %p673 = pneg %p71
        %p674 = pneg %p68
        %p675 = pneg %p92
        %p676 = pneg %p89
        %p677 = scmp.lt.s32.totalorder %s34, 2
        %s678 = scalar_select %p677, %s34, 2
        %s679 = smul.addr %s678, 4
        %s680 = smul.addr %s679, 8
        %s681 = scalar_lea.vmem %s3, %s680
        %p682 = pneg %p118
        %p683 = pneg %p115
        %p684 = scmp.lt.s32.totalorder %s34, 2
        %s685 = scalar_select %p684, %s34, 2
        %s686 = smul.addr %s685, 4
        %s687 = smul.addr %s686, 8
        %s688 = scalar_lea.vmem %s4, %s687
        %p689 = pneg %p144
        %p690 = pneg %p141
        %p691 = scmp.lt.s32.totalorder %s34, 2
        %s692 = scalar_select %p691, %s34, 2
        %s693 = scalar_lea.vmem %s5, %s692
        %p694 = pneg %p170
        %p695 = pneg %p167
        %p696 = scmp.lt.s32.totalorder %s34, 2
        %s697 = scalar_select %p696, %s34, 2
        %s698 = smul.addr %s697, 4
        %s699 = smul.addr %s698, 8
        %s700 = scalar_lea.vmem %s6, %s699
        %p701 = pneg %p196
        %p702 = pneg %p193
        %p703 = scmp.lt.s32.totalorder %s34, 2
        %s704 = scalar_select %p703, %s34, 2
        %s705 = scalar_lea.vmem %s7, %s704
        %p706 = pneg %p222
        %p707 = pneg %p219
        %p708 = scmp.lt.s32.totalorder %s34, 2
        %s709 = scalar_select %p708, %s34, 2
        %s710 = smul.addr %s709, 4
        %s711 = smul.addr %s710, 8
        %s712 = scalar_lea.vmem %s8, %s711
        %p713 = pneg %p248
        %p714 = pneg %p245
        %p715 = scmp.lt.s32.totalorder %s34, 2
        %s716 = scalar_select %p715, %s34, 2
        %s717 = smul.addr %s716, 8
        %s718 = scalar_lea.vmem %s9, %s717
        %p719 = pneg %p274
        %p720 = pneg %p271
        %p721 = scmp.lt.s32.totalorder %s34, 2
        %s722 = scalar_select %p721, %s34, 2
        %s723 = smul.addr %s722, 64
        %s724 = smul.addr %s723, 8
        %s725 = scalar_lea.vmem %s10, %s724
        %p726 = pneg %p300
        %p727 = pneg %p297
        %p728 = scmp.lt.s32.totalorder %s34, 2
        %s729 = scalar_select %p728, %s34, 2
        %s730 = smul.addr %s729, 16
        %s731 = scalar_lea.vmem %s11, %s730
        %p732 = pneg %p326
        %p733 = pneg %p323
        %p734 = scmp.lt.s32.totalorder %s34, 2
        %s735 = scalar_select %p734, %s34, 2
        %s736 = smul.addr %s735, 256
        %s737 = smul.addr %s736, 8
        %s738 = scalar_lea.vmem %s12, %s737
        %p739 = pneg %p352
        %p740 = pneg %p349
        %p741 = pneg %p373
        %p742 = pneg %p370
        %p743 = pneg %p394
        %p744 = pneg %p391
        %p745 = pneg %p415
        %p746 = pneg %p412
        %p747 = pneg %p436
        %p748 = pneg %p433
        %p749 = pneg %p457
        %p750 = pneg %p454
        %p751 = pneg %p478
        %p752 = pneg %p475
        %p753 = pneg %p499
        %p754 = pneg %p496
        %p755 = pneg %p520
        %p756 = pneg %p517
        %p757 = pneg %p541
        %p758 = pneg %p538
        %p759 = scmp.lt.s32.totalorder %s34, 2
        %s760 = scalar_select %p759, %s34, 2
        %s761 = smul.addr %s760, 4
        %s762 = smul.addr %s761, 8
        %s763 = scalar_lea.vmem %s3, %s762
        %p764 = scmp.lt.s32.totalorder %s34, 2
        %s765 = scalar_select %p764, %s34, 2
        %s766 = smul.addr %s765, 4
        %s767 = smul.addr %s766, 8
        %s768 = scalar_lea.vmem %s4, %s767
        %p769 = scmp.lt.s32.totalorder %s34, 2
        %s770 = scalar_select %p769, %s34, 2
        %s771 = scalar_lea.vmem %s5, %s770
        %p772 = scmp.lt.s32.totalorder %s34, 2
        %s773 = scalar_select %p772, %s34, 2
        %s774 = smul.addr %s773, 4
        %s775 = smul.addr %s774, 8
        %s776 = scalar_lea.vmem %s6, %s775
        %p777 = scmp.lt.s32.totalorder %s34, 2
        %s778 = scalar_select %p777, %s34, 2
        %s779 = scalar_lea.vmem %s7, %s778
        %p780 = scmp.lt.s32.totalorder %s34, 2
        %s781 = scalar_select %p780, %s34, 2
        %s782 = smul.addr %s781, 4
        %s783 = smul.addr %s782, 8
        %s784 = scalar_lea.vmem %s8, %s783
        %p785 = scmp.lt.s32.totalorder %s34, 2
        %s786 = scalar_select %p785, %s34, 2
        %s787 = smul.addr %s786, 8
        %s788 = scalar_lea.vmem %s9, %s787
        %p789 = scmp.lt.s32.totalorder %s34, 2
        %s790 = scalar_select %p789, %s34, 2
        %s791 = smul.addr %s790, 64
        %s792 = smul.addr %s791, 8
        %s793 = scalar_lea.vmem %s10, %s792
        %p794 = scmp.lt.s32.totalorder %s34, 2
        %s795 = scalar_select %p794, %s34, 2
        %s796 = smul.addr %s795, 16
        %s797 = scalar_lea.vmem %s11, %s796
        %p798 = scmp.lt.s32.totalorder %s34, 2
        %s799 = scalar_select %p798, %s34, 2
        %s800 = smul.addr %s799, 256
        %s801 = smul.addr %s800, 8
        %s802 = scalar_lea.vmem %s12, %s801
        %p803 = scmp.eq.s32.totalorder %s34, 0
        // Predicated region
        $region101: #{attn_a2c_forward.1} parent=99 // pred_check
          %p804 = pneg %p803
        $region102: #{attn_a2c_forward.1} parent=99 // pred_check_branch
          %806 = sbr.rel (%p804) target = $region104
        $region103: #{attn_a2c_forward.1} parent=99 // pred_region
          %v807 = vld [vmem:[%s0] sm:$0xff]
          %v808 = vld [vmem:[%s0 + $0x8] sm:$0xff]
          %vm809 = vcmask 261120
          %810 = vst.msk [vmem:[#allocation2] sm:$0xff] %vm809, %v807
          %811 = vst.msk [vmem:[#allocation2 + $0x8] sm:$0xff] %vm809, %v808
        $region104: #{attn_a2c_forward.1} parent=99 // pred_fallthru
          _
        %v812 = vld [vmem:[#allocation2] sm:$0xff]
        %v813 = vld [vmem:[#allocation2 + $0x8] sm:$0xff]
        %v814 = vld [vmem:[%s763] sm:$0xff]
        %v815 = vld [vmem:[%s763 + $0x8] sm:$0xff]
        %v816 = vld [vmem:[%s763 + $0x10] sm:$0xff]
        %v817 = vld [vmem:[%s763 + $0x18] sm:$0xff]
        %v818 = vld [vmem:[%s768] sm:$0xff]
        %v819 = vld [vmem:[%s768 + $0x8] sm:$0xff]
        %v820 = vld [vmem:[%s768 + $0x10] sm:$0xff]
        %v821 = vld [vmem:[%s768 + $0x18] sm:$0xff]
        %v822 = vld [vmem:[%s771] sm:$0x1]
        %v824 = vlaneseq
        %v825 = vshrl.u32 %v824, 7
        %v826 = vsub.s32 0, %v825
        %v827 = vrot.slane %v822, %v826
        %vm829 = vcmask 261120
        %v831 = vsel %vm829, %v812, 0
        %v834 = vsel %vm829, %v813, 0
        %836 = vmatprep.subr.mxu0 0.0
        %837 = vmatpush1.msra.mxu0 0.0
        %838 = vmatprep.subr.mxu0 0.0
        %839 = vmatpush1.msra.mxu0 0.0
        %840 = vmatprep.subr.mxu0 0.0
        %841 = vmatpush1.msra.mxu0 0.0
        %842 = vmatprep.subr.mxu0 0.0
        %843 = vmatpush1.msra.mxu0 0.0
        %844 = vmatprep.subr.mxu0 0.0
        %845 = vmatpush1.msra.mxu0 0.0
        %846 = vmatprep.subr.mxu0 0.0
        %847 = vmatpush1.msra.mxu0 0.0
        %848 = vmatprep.subr.mxu0 0.0
        %849 = vmatpush1.msra.mxu0 0.0
        %850 = vmatprep.subr.mxu0 0.0
        %851 = vmatpush1.msra.mxu0 0.0
        %852 = vmatprep.subr.mxu0 0.0
        %853 = vmatpush1.msra.mxu0 0.0
        %854 = vmatprep.subr.mxu0 0.0
        %855 = vmatpush1.msra.mxu0 0.0
        %856 = vmatprep.subr.mxu0 0.0
        %857 = vmatpush1.msra.mxu0 0.0
        %858 = vmatprep.subr.mxu0 0.0
        %859 = vmatpush1.msra.mxu0 0.0
        %860 = vmatprep.subr.mxu0 0.0
        %861 = vmatpush1.msra.mxu0 %v817
        %862 = vmatprep.subr.mxu0 0.0
        %863 = vmatpush1.msra.mxu0 %v816
        %864 = vmatprep.subr.mxu0 0.0
        %865 = vmatpush1.msra.mxu0 %v815
        %866 = vmatprep.subr.mxu0 0.0
        %867 = vmatpush1.msra.mxu0 %v814
        %868 = vmatprep.subr.mxu0 0.0
        %869 = vmatpush2.msra.mxu0 0.0
        %870 = vmatprep.subr.mxu0 0.0
        %871 = vmatpush2.msra.mxu0 0.0
        %872 = vmatprep.subr.mxu0 0.0
        %873 = vmatpush2.msra.mxu0 0.0
        %874 = vmatprep.subr.mxu0 0.0
        %875 = vmatpush2.msra.mxu0 0.0
        %876 = vmatprep.subr.mxu0 0.0
        %877 = vmatpush2.msra.mxu0 0.0
        %878 = vmatprep.subr.mxu0 0.0
        %879 = vmatpush2.msra.mxu0 0.0
        %880 = vmatprep.subr.mxu0 0.0
        %881 = vmatpush2.msra.mxu0 0.0
        %882 = vmatprep.subr.mxu0 0.0
        %883 = vmatpush2.msra.mxu0 0.0
        %884 = vmatprep.subr.mxu0 0.0
        %885 = vmatpush2.msra.mxu0 0.0
        %886 = vmatprep.subr.mxu0 0.0
        %887 = vmatpush2.msra.mxu0 0.0
        %888 = vmatprep.subr.mxu0 0.0
        %889 = vmatpush2.msra.mxu0 0.0
        %890 = vmatprep.subr.mxu0 0.0
        %891 = vmatpush2.msra.mxu0 0.0
        %892 = vmatprep.subr.mxu0 0.0
        %893 = vmatpush2.msra.mxu0 0.0
        %894 = vmatprep.subr.mxu0 0.0
        %895 = vmatpush2.msra.mxu0 0.0
        %896 = vmatprep.subr.mxu0 0.0
        %897 = vmatpush2.msra.mxu0 0.0
        %898 = vmatprep.subr.mxu0 0.0
        %899 = vmatpush2.msra.mxu0 0.0
        %900 = vmatprep.mubr.f32.mxu0 0.0
        %901 = vmatmul.mubr.f32.gmra.mxu0 %v831
        %v902 = vpop.f32.mrf.mxu0
        %v903 = vadd.f32 %v827, %v902
        %v904 = vpop.f32.mrf.mxu0
        %905 = vmatprep.mubr.f32.mxu0 0.0
        %906 = vmatmul.mubr.f32.gmra.mxu0 %v834
        %v907 = vpop.f32.mrf.mxu0
        %v908 = vadd.f32 %v827, %v907
        %v909 = vpop.f32.mrf.mxu0
        %910 = vdwg.mxu0
        %v912 = vsel %vm829, 0.0, 0
        %914 = vmatprep.subr.mxu0 0.0
        %915 = vmatpush1.msra.mxu0 0.0
        %916 = vmatprep.subr.mxu0 0.0
        %917 = vmatpush1.msra.mxu0 0.0
        %918 = vmatprep.subr.mxu0 0.0
        %919 = vmatpush1.msra.mxu0 0.0
        %920 = vmatprep.subr.mxu0 0.0
        %921 = vmatpush1.msra.mxu0 0.0
        %922 = vmatprep.subr.mxu0 0.0
        %923 = vmatpush1.msra.mxu0 0.0
        %924 = vmatprep.subr.mxu0 0.0
        %925 = vmatpush1.msra.mxu0 0.0
        %926 = vmatprep.subr.mxu0 0.0
        %927 = vmatpush1.msra.mxu0 0.0
        %928 = vmatprep.subr.mxu0 0.0
        %929 = vmatpush1.msra.mxu0 0.0
        %930 = vmatprep.subr.mxu0 0.0
        %931 = vmatpush1.msra.mxu0 0.0
        %932 = vmatprep.subr.mxu0 0.0
        %933 = vmatpush1.msra.mxu0 0.0
        %934 = vmatprep.subr.mxu0 0.0
        %935 = vmatpush1.msra.mxu0 0.0
        %936 = vmatprep.subr.mxu0 0.0
        %937 = vmatpush1.msra.mxu0 0.0
        %938 = vmatprep.subr.mxu0 0.0
        %939 = vmatpush1.msra.mxu0 %v821
        %940 = vmatprep.subr.mxu0 0.0
        %941 = vmatpush1.msra.mxu0 %v820
        %942 = vmatprep.subr.mxu0 0.0
        %943 = vmatpush1.msra.mxu0 %v819
        %944 = vmatprep.subr.mxu0 0.0
        %945 = vmatpush1.msra.mxu0 %v818
        %946 = vmatprep.subr.mxu0 0.0
        %947 = vmatpush2.msra.mxu0 0.0
        %948 = vmatprep.subr.mxu0 0.0
        %949 = vmatpush2.msra.mxu0 0.0
        %950 = vmatprep.subr.mxu0 0.0
        %951 = vmatpush2.msra.mxu0 0.0
        %952 = vmatprep.subr.mxu0 0.0
        %953 = vmatpush2.msra.mxu0 0.0
        %954 = vmatprep.subr.mxu0 0.0
        %955 = vmatpush2.msra.mxu0 0.0
        %956 = vmatprep.subr.mxu0 0.0
        %957 = vmatpush2.msra.mxu0 0.0
        %958 = vmatprep.subr.mxu0 0.0
        %959 = vmatpush2.msra.mxu0 0.0
        %960 = vmatprep.subr.mxu0 0.0
        %961 = vmatpush2.msra.mxu0 0.0
        %962 = vmatprep.subr.mxu0 0.0
        %963 = vmatpush2.msra.mxu0 0.0
        %964 = vmatprep.subr.mxu0 0.0
        %965 = vmatpush2.msra.mxu0 0.0
        %966 = vmatprep.subr.mxu0 0.0
        %967 = vmatpush2.msra.mxu0 0.0
        %968 = vmatprep.subr.mxu0 0.0
        %969 = vmatpush2.msra.mxu0 0.0
        %970 = vmatprep.subr.mxu0 0.0
        %971 = vmatpush2.msra.mxu0 0.0
        %972 = vmatprep.subr.mxu0 0.0
        %973 = vmatpush2.msra.mxu0 0.0
        %974 = vmatprep.subr.mxu0 0.0
        %975 = vmatpush2.msra.mxu0 0.0
        %976 = vmatprep.subr.mxu0 0.0
        %977 = vmatpush2.msra.mxu0 0.0
        %978 = vmatprep.mubr.f32.mxu0 0.0
        %979 = vmatmul.mubr.f32.gmra.mxu0 %v912
        %v980 = vpop.f32.mrf.mxu0
        %v981 = vadd.f32 0.0, %v980
        %v982 = vpop.f32.mrf.mxu0
        %983 = vdwg.mxu0
        %v984 = vadd.f32 %v903, %v981
        %v985 = vxor.u32 %v984, 2147483648
        %v986 = vmul.f32 %v985, 1.442695
        %v987 = vpow.pop %v986
        %v988 = vadd.f32 %v987, 1.0
        %v989 = vrcp.pop %v988
        %v990 = vmul.f32 1.0, %v989
        %v991 = vtanh.pop %v984
        %v992 = vmul.f32 %v990, 0.0
        %994 = vrot.lane.b32.xlu0 %v991, 64
        %v995 = vpop.permute.xlu0 %994
        %v997 = vmul.f32 %v990, %v995
        %999 = vrot.lane.b32.xlu0 %v997, 32
        %v1000 = vpop.permute.xlu0 %999
        %v1002 = vadd.f32 %v992, %v1000
        %v1003 = vtanh.pop %v1002
        %1005 = vrot.lane.b32.xlu0 %v1003, 64
        %v1006 = vpop.permute.xlu0 %1005
        %v1008 = vmul.f32 %v990, %v1006
        %1010 = vrot.lane.b32.xlu0 %v1008, 32
        %v1011 = vpop.permute.xlu0 %1010
        %1013 = vst.msk [vmem:[#allocation2] sm:$0xff] %vm829, %v1011
        %v1014 = vsel %vm829, %v1011, 0
        %1016 = vmatprep.subr.mxu0 0.0
        %1017 = vmatpush1.msra.mxu0 0.0
        %1018 = vmatprep.subr.mxu0 0.0
        %1019 = vmatpush1.msra.mxu0 0.0
        %1020 = vmatprep.subr.mxu0 0.0
        %1021 = vmatpush1.msra.mxu0 0.0
        %1022 = vmatprep.subr.mxu0 0.0
        %1023 = vmatpush1.msra.mxu0 0.0
        %1024 = vmatprep.subr.mxu0 0.0
        %1025 = vmatpush1.msra.mxu0 0.0
        %1026 = vmatprep.subr.mxu0 0.0
        %1027 = vmatpush1.msra.mxu0 0.0
        %1028 = vmatprep.subr.mxu0 0.0
        %1029 = vmatpush1.msra.mxu0 0.0
        %1030 = vmatprep.subr.mxu0 0.0
        %1031 = vmatpush1.msra.mxu0 0.0
        %1032 = vmatprep.subr.mxu0 0.0
        %1033 = vmatpush1.msra.mxu0 0.0
        %1034 = vmatprep.subr.mxu0 0.0
        %1035 = vmatpush1.msra.mxu0 0.0
        %1036 = vmatprep.subr.mxu0 0.0
        %1037 = vmatpush1.msra.mxu0 0.0
        %1038 = vmatprep.subr.mxu0 0.0
        %1039 = vmatpush1.msra.mxu0 0.0
        %1040 = vmatprep.subr.mxu0 0.0
        %1041 = vmatpush1.msra.mxu0 %v821
        %1042 = vmatprep.subr.mxu0 0.0
        %1043 = vmatpush1.msra.mxu0 %v820
        %1044 = vmatprep.subr.mxu0 0.0
        %1045 = vmatpush1.msra.mxu0 %v819
        %1046 = vmatprep.subr.mxu0 0.0
        %1047 = vmatpush1.msra.mxu0 %v818
        %1048 = vmatprep.subr.mxu0 0.0
        %1049 = vmatpush2.msra.mxu0 0.0
        %1050 = vmatprep.subr.mxu0 0.0
        %1051 = vmatpush2.msra.mxu0 0.0
        %1052 = vmatprep.subr.mxu0 0.0
        %1053 = vmatpush2.msra.mxu0 0.0
        %1054 = vmatprep.subr.mxu0 0.0
        %1055 = vmatpush2.msra.mxu0 0.0
        %1056 = vmatprep.subr.mxu0 0.0
        %1057 = vmatpush2.msra.mxu0 0.0
        %1058 = vmatprep.subr.mxu0 0.0
        %1059 = vmatpush2.msra.mxu0 0.0
        %1060 = vmatprep.subr.mxu0 0.0
        %1061 = vmatpush2.msra.mxu0 0.0
        %1062 = vmatprep.subr.mxu0 0.0
        %1063 = vmatpush2.msra.mxu0 0.0
        %1064 = vmatprep.subr.mxu0 0.0
        %1065 = vmatpush2.msra.mxu0 0.0
        %1066 = vmatprep.subr.mxu0 0.0
        %1067 = vmatpush2.msra.mxu0 0.0
        %1068 = vmatprep.subr.mxu0 0.0
        %1069 = vmatpush2.msra.mxu0 0.0
        %1070 = vmatprep.subr.mxu0 0.0
        %1071 = vmatpush2.msra.mxu0 0.0
        %1072 = vmatprep.subr.mxu0 0.0
        %1073 = vmatpush2.msra.mxu0 0.0
        %1074 = vmatprep.subr.mxu0 0.0
        %1075 = vmatpush2.msra.mxu0 0.0
        %1076 = vmatprep.subr.mxu0 0.0
        %1077 = vmatpush2.msra.mxu0 0.0
        %1078 = vmatprep.subr.mxu0 0.0
        %1079 = vmatpush2.msra.mxu0 0.0
        %1080 = vmatprep.mubr.f32.mxu0 0.0
        %1081 = vmatmul.mubr.f32.gmra.mxu0 %v1014
        %v1082 = vpop.f32.mrf.mxu0
        %v1083 = vadd.f32 0.0, %v1082
        %v1084 = vpop.f32.mrf.mxu0
        %1085 = vdwg.mxu0
        %v1086 = vadd.f32 %v908, %v1083
        %v1087 = vxor.u32 %v1086, 2147483648
        %v1088 = vmul.f32 %v1087, 1.442695
        %v1089 = vpow.pop %v1088
        %v1090 = vadd.f32 %v1089, 1.0
        %v1091 = vrcp.pop %v1090
        %v1092 = vmul.f32 1.0, %v1091
        %v1093 = vtanh.pop %v1086
        %v1094 = vmul.f32 %v1092, %v1002
        %1096 = vrot.lane.b32.xlu0 %v1093, 64
        %v1097 = vpop.permute.xlu0 %1096
        %v1099 = vmul.f32 %v1092, %v1097
        %1101 = vrot.lane.b32.xlu0 %v1099, 32
        %v1102 = vpop.permute.xlu0 %1101
        %v1104 = vadd.f32 %v1094, %v1102
        %v1105 = vtanh.pop %v1104
        %1107 = vrot.lane.b32.xlu0 %v1105, 64
        %v1108 = vpop.permute.xlu0 %1107
        %v1110 = vmul.f32 %v1092, %v1108
        %1112 = vrot.lane.b32.xlu0 %v1110, 32
        %v1113 = vpop.permute.xlu0 %1112
        %1115 = vst.msk [vmem:[#allocation2 + $0x8] sm:$0xff] %vm829, %v1113
        %v1116 = vld [vmem:[#allocation2] sm:$0xff]
        %v1117 = vld [vmem:[#allocation2 + $0x8] sm:$0xff]
        %v1118 = vld [vmem:[%s788] sm:$0x3f]
        %v1119 = vld [vmem:[%s776] sm:$0xff]
        %v1120 = vld [vmem:[%s776 + $0x8] sm:$0xff]
        %v1121 = vld [vmem:[%s776 + $0x10] sm:$0xff]
        %v1122 = vld [vmem:[%s776 + $0x18] sm:$0xff]
        %v1123 = vld [vmem:[%s779] sm:$0x1]
        %v1125 = vlaneseq
        %v1126 = vshrl.u32 %v1125, 7
        %v1127 = vsub.s32 0, %v1126
        %v1128 = vrot.slane %v1123, %v1127
        %v1131 = vsel %vm829, %v1116, 0
        %v1134 = vsel %vm829, %v1117, 0
        %1136 = vmatprep.subr.mxu0 0.0
        %1137 = vmatpush1.msra.mxu0 0.0
        %1138 = vmatprep.subr.mxu0 0.0
        %1139 = vmatpush1.msra.mxu0 0.0
        %1140 = vmatprep.subr.mxu0 0.0
        %1141 = vmatpush1.msra.mxu0 0.0
        %1142 = vmatprep.subr.mxu0 0.0
        %1143 = vmatpush1.msra.mxu0 0.0
        %1144 = vmatprep.subr.mxu0 0.0
        %1145 = vmatpush1.msra.mxu0 0.0
        %1146 = vmatprep.subr.mxu0 0.0
        %1147 = vmatpush1.msra.mxu0 0.0
        %1148 = vmatprep.subr.mxu0 0.0
        %1149 = vmatpush1.msra.mxu0 0.0
        %1150 = vmatprep.subr.mxu0 0.0
        %1151 = vmatpush1.msra.mxu0 0.0
        %1152 = vmatprep.subr.mxu0 0.0
        %1153 = vmatpush1.msra.mxu0 0.0
        %1154 = vmatprep.subr.mxu0 0.0
        %1155 = vmatpush1.msra.mxu0 0.0
        %1156 = vmatprep.subr.mxu0 0.0
        %1157 = vmatpush1.msra.mxu0 0.0
        %1158 = vmatprep.subr.mxu0 0.0
        %1159 = vmatpush1.msra.mxu0 0.0
        %1160 = vmatprep.subr.mxu0 0.0
        %1161 = vmatpush1.msra.mxu0 %v1122
        %1162 = vmatprep.subr.mxu0 0.0
        %1163 = vmatpush1.msra.mxu0 %v1121
        %1164 = vmatprep.subr.mxu0 0.0
        %1165 = vmatpush1.msra.mxu0 %v1120
        %1166 = vmatprep.subr.mxu0 0.0
        %1167 = vmatpush1.msra.mxu0 %v1119
        %1168 = vmatprep.subr.mxu0 0.0
        %1169 = vmatpush2.msra.mxu0 0.0
        %1170 = vmatprep.subr.mxu0 0.0
        %1171 = vmatpush2.msra.mxu0 0.0
        %1172 = vmatprep.subr.mxu0 0.0
        %1173 = vmatpush2.msra.mxu0 0.0
        %1174 = vmatprep.subr.mxu0 0.0
        %1175 = vmatpush2.msra.mxu0 0.0
        %1176 = vmatprep.subr.mxu0 0.0
        %1177 = vmatpush2.msra.mxu0 0.0
        %1178 = vmatprep.subr.mxu0 0.0
        %1179 = vmatpush2.msra.mxu0 0.0
        %1180 = vmatprep.subr.mxu0 0.0
        %1181 = vmatpush2.msra.mxu0 0.0
        %1182 = vmatprep.subr.mxu0 0.0
        %1183 = vmatpush2.msra.mxu0 0.0
        %1184 = vmatprep.subr.mxu0 0.0
        %1185 = vmatpush2.msra.mxu0 0.0
        %1186 = vmatprep.subr.mxu0 0.0
        %1187 = vmatpush2.msra.mxu0 0.0
        %1188 = vmatprep.subr.mxu0 0.0
        %1189 = vmatpush2.msra.mxu0 0.0
        %1190 = vmatprep.subr.mxu0 0.0
        %1191 = vmatpush2.msra.mxu0 0.0
        %1192 = vmatprep.subr.mxu0 0.0
        %1193 = vmatpush2.msra.mxu0 0.0
        %1194 = vmatprep.subr.mxu0 0.0
        %1195 = vmatpush2.msra.mxu0 0.0
        %1196 = vmatprep.subr.mxu0 0.0
        %1197 = vmatpush2.msra.mxu0 0.0
        %1198 = vmatprep.subr.mxu0 0.0
        %1199 = vmatpush2.msra.mxu0 0.0
        %1200 = vmatprep.mubr.f32.mxu0 0.0
        %1201 = vmatmul.mubr.f32.gmra.mxu0 %v1131
        %v1202 = vpop.f32.mrf.mxu0
        %v1203 = vadd.f32 %v1128, %v1202
        %v1204 = vpop.f32.mrf.mxu0
        %1205 = vmatprep.mubr.f32.mxu0 0.0
        %1206 = vmatmul.mubr.f32.gmra.mxu0 %v1134
        %v1207 = vpop.f32.mrf.mxu0
        %v1208 = vadd.f32 %v1128, %v1207
        %v1209 = vpop.f32.mrf.mxu0
        %1210 = vdwg.mxu0
        %v1211 = vmul.f32 %v1203, 0.25
        %v1212 = vmul.f32 %v1208, 0.25
        %1214 = vrot.lane.b32.xlu0 %v1203, 96
        %v1215 = vpop.permute.xlu0 %1214
        %v1217 = vmul.f32 %v1211, %v1215
        %v1218 = vmul.f32 %v1212, %v1215
        %vm1219 = vcmask 130048
        %v1220 = vsel %vm1219, %v1217, 0.0
        %1221 = vadd.xlane.f32.xlu0 %v1220
        %v1222 = vpop.xlane.xlu0 %1221
        %v1223 = vsel %vm1219, %v1218, 0.0
        %1224 = vadd.xlane.f32.xlu0 %v1223
        %v1225 = vpop.xlane.xlu0 %1224
        %1227 = vrot.lane.b32.xlu0 %v1208, 96
        %v1228 = vpop.permute.xlu0 %1227
        %v1230 = vmul.f32 %v1211, %v1228
        %v1231 = vmul.f32 %v1212, %v1228
        %v1232 = vsel %vm1219, %v1230, 0.0
        %1233 = vadd.xlane.f32.xlu0 %v1232
        %v1234 = vpop.xlane.xlu0 %1233
        %v1235 = vsel %vm1219, %v1231, 0.0
        %1236 = vadd.xlane.f32.xlu0 %v1235
        %v1237 = vpop.xlane.xlu0 %1236
        %vm1238 = vcmask 7168
        %v1239 = vsel %vm1238, %v1222, %v1234
        %v1240 = vsel %vm1238, %v1225, %v1237
        %vm1241 = vcmask 15360
        %v1242 = vsel %vm1241, %v1239, -inf
        %1243 = vmax.xlane.f32.xlu0 %v1242
        %v1244 = vpop.xlane.xlu0 %1243
        %v1245 = vsel %vm1241, %v1240, -inf
        %1246 = vmax.xlane.f32.xlu0 %v1245
        %v1247 = vpop.xlane.xlu0 %1246
        %v1248 = vsub.f32 %v1239, %v1244
        %v1249 = vsub.f32 %v1240, %v1247
        %v1250 = vmul.f32 %v1248, 1.442695
        %v1251 = vpow.pop %v1250
        %v1252 = vmul.f32 %v1249, 1.442695
        %v1253 = vpow.pop %v1252
        %v1254 = vsel %vm1241, %v1251, 0.0
        %1255 = vadd.xlane.f32.xlu0 %v1254
        %v1256 = vpop.xlane.xlu0 %1255
        %v1257 = vsel %vm1241, %v1253, 0.0
        %1258 = vadd.xlane.f32.xlu0 %v1257
        %v1259 = vpop.xlane.xlu0 %1258
        %v1260 = vrcp.pop %v1256
        %v1261 = vmul.f32 %v1251, %v1260
        %v1262 = vrcp.pop %v1259
        %v1263 = vmul.f32 %v1253, %v1262
        %1265 = vset.pattern.permute.xlu0 0
        %1266 = vperm.xlu0 %1265, %v1261
        %v1267 = vpop.permute.xlu0 %1266
        %1270 = vset.pattern.permute.xlu0 0
        %1271 = vperm.xlu0 %1270, %v1263
        %v1272 = vpop.permute.xlu0 %1271
        %v1274 = vmul.f32 %v1267, %v1203
        %v1275 = vmul.f32 %v1272, %v1203
        %1276 = vset.pattern.permute.xlu0 1
        %1277 = vperm.xlu0 %1276, %v1261
        %v1278 = vpop.permute.xlu0 %1277
        %1280 = vset.pattern.permute.xlu0 1
        %1281 = vperm.xlu0 %1280, %v1263
        %v1282 = vpop.permute.xlu0 %1281
        %v1284 = vmul.f32 %v1278, %v1208
        %v1285 = vmul.f32 %v1282, %v1208
        %v1286 = vadd.f32 %v1274, %v1284
        %v1287 = vadd.f32 %v1275, %v1285
        %1290 = vrot.lane.b32.xlu0 %v1217, 112
        %v1291 = vpop.permute.xlu0 %1290
        %1292 = vrot.lane.b32.xlu0 %v1218, 112
        %v1293 = vpop.permute.xlu0 %1292
        %v1296 = vsel %vm1219, %v1291, 0.0
        %1297 = vadd.xlane.f32.xlu0 %v1296
        %v1298 = vpop.xlane.xlu0 %1297
        %v1299 = vsel %vm1219, %v1293, 0.0
        %1300 = vadd.xlane.f32.xlu0 %v1299
        %v1301 = vpop.xlane.xlu0 %1300
        %1304 = vrot.lane.b32.xlu0 %v1230, 112
        %v1305 = vpop.permute.xlu0 %1304
        %1306 = vrot.lane.b32.xlu0 %v1231, 112
        %v1307 = vpop.permute.xlu0 %1306
        %v1310 = vsel %vm1219, %v1305, 0.0
        %1311 = vadd.xlane.f32.xlu0 %v1310
        %v1312 = vpop.xlane.xlu0 %1311
        %v1313 = vsel %vm1219, %v1307, 0.0
        %1314 = vadd.xlane.f32.xlu0 %v1313
        %v1315 = vpop.xlane.xlu0 %1314
        %v1316 = vsel %vm1238, %v1298, %v1312
        %v1317 = vsel %vm1238, %v1301, %v1315
        %v1318 = vsel %vm1241, %v1316, -inf
        %1319 = vmax.xlane.f32.xlu0 %v1318
        %v1320 = vpop.xlane.xlu0 %1319
        %v1321 = vsel %vm1241, %v1317, -inf
        %1322 = vmax.xlane.f32.xlu0 %v1321
        %v1323 = vpop.xlane.xlu0 %1322
        %v1324 = vsub.f32 %v1316, %v1320
        %v1325 = vsub.f32 %v1317, %v1323
        %v1326 = vmul.f32 %v1324, 1.442695
        %v1327 = vpow.pop %v1326
        %v1328 = vmul.f32 %v1325, 1.442695
        %v1329 = vpow.pop %v1328
        %v1330 = vsel %vm1241, %v1327, 0.0
        %1331 = vadd.xlane.f32.xlu0 %v1330
        %v1332 = vpop.xlane.xlu0 %1331
        %v1333 = vsel %vm1241, %v1329, 0.0
        %1334 = vadd.xlane.f32.xlu0 %v1333
        %v1335 = vpop.xlane.xlu0 %1334
        %v1336 = vrcp.pop %v1332
        %v1337 = vmul.f32 %v1327, %v1336
        %v1338 = vrcp.pop %v1335
        %v1339 = vmul.f32 %v1329, %v1338
        %1341 = vset.pattern.permute.xlu0 0
        %1342 = vperm.xlu0 %1341, %v1337
        %v1343 = vpop.permute.xlu0 %1342
        %1346 = vset.pattern.permute.xlu0 0
        %1347 = vperm.xlu0 %1346, %v1339
        %v1348 = vpop.permute.xlu0 %1347
        %v1350 = vmul.f32 %v1343, %v1203
        %v1351 = vmul.f32 %v1348, %v1203
        %1352 = vset.pattern.permute.xlu0 1
        %1353 = vperm.xlu0 %1352, %v1337
        %v1354 = vpop.permute.xlu0 %1353
        %1356 = vset.pattern.permute.xlu0 1
        %1357 = vperm.xlu0 %1356, %v1339
        %v1358 = vpop.permute.xlu0 %1357
        %v1360 = vmul.f32 %v1354, %v1208
        %v1361 = vmul.f32 %v1358, %v1208
        %v1362 = vadd.f32 %v1350, %v1360
        %v1363 = vadd.f32 %v1351, %v1361
        %1366 = vrot.lane.b32.xlu0 %v1286, 64
        %v1367 = vpop.permute.xlu0 %1366
        %1368 = vrot.lane.b32.xlu0 %v1287, 64
        %v1369 = vpop.permute.xlu0 %1368
        %1374 = vrot.lane.b32.xlu0 %v1362, 64
        %v1375 = vpop.permute.xlu0 %1374
        %1376 = vrot.lane.b32.xlu0 %v1363, 64
        %v1377 = vpop.permute.xlu0 %1376
        %v1380 = vsel %vm1219, %v1367, %v1375
        %v1381 = vsel %vm1219, %v1369, %v1377
        %v1382 = vld [vmem:[%s784] sm:$0xff]
        %v1383 = vld [vmem:[%s784 + $0x8] sm:$0xff]
        %v1384 = vld [vmem:[%s784 + $0x10] sm:$0xff]
        %v1385 = vld [vmem:[%s784 + $0x18] sm:$0xff]
        %v1386 = vlaneseq
        %v1387 = vshrl.u32 %v1386, 7
        %v1388 = vsub.s32 0, %v1387
        %v1389 = vrot.slane %v1118, %v1388
        %v1391 = vsel %vm829, %v1380, 0
        %v1394 = vsel %vm829, %v1381, 0
        %1396 = vmatprep.subr.mxu0 0.0
        %1397 = vmatpush1.msra.mxu0 0.0
        %1398 = vmatprep.subr.mxu0 0.0
        %1399 = vmatpush1.msra.mxu0 0.0
        %1400 = vmatprep.subr.mxu0 0.0
        %1401 = vmatpush1.msra.mxu0 0.0
        %1402 = vmatprep.subr.mxu0 0.0
        %1403 = vmatpush1.msra.mxu0 0.0
        %1404 = vmatprep.subr.mxu0 0.0
        %1405 = vmatpush1.msra.mxu0 0.0
        %1406 = vmatprep.subr.mxu0 0.0
        %1407 = vmatpush1.msra.mxu0 0.0
        %1408 = vmatprep.subr.mxu0 0.0
        %1409 = vmatpush1.msra.mxu0 0.0
        %1410 = vmatprep.subr.mxu0 0.0
        %1411 = vmatpush1.msra.mxu0 0.0
        %1412 = vmatprep.subr.mxu0 0.0
        %1413 = vmatpush1.msra.mxu0 0.0
        %1414 = vmatprep.subr.mxu0 0.0
        %1415 = vmatpush1.msra.mxu0 0.0
        %1416 = vmatprep.subr.mxu0 0.0
        %1417 = vmatpush1.msra.mxu0 0.0
        %1418 = vmatprep.subr.mxu0 0.0
        %1419 = vmatpush1.msra.mxu0 0.0
        %1420 = vmatprep.subr.mxu0 0.0
        %1421 = vmatpush1.msra.mxu0 %v1385
        %1422 = vmatprep.subr.mxu0 0.0
        %1423 = vmatpush1.msra.mxu0 %v1384
        %1424 = vmatprep.subr.mxu0 0.0
        %1425 = vmatpush1.msra.mxu0 %v1383
        %1426 = vmatprep.subr.mxu0 0.0
        %1427 = vmatpush1.msra.mxu0 %v1382
        %1428 = vmatprep.subr.mxu0 0.0
        %1429 = vmatpush2.msra.mxu0 0.0
        %1430 = vmatprep.subr.mxu0 0.0
        %1431 = vmatpush2.msra.mxu0 0.0
        %1432 = vmatprep.subr.mxu0 0.0
        %1433 = vmatpush2.msra.mxu0 0.0
        %1434 = vmatprep.subr.mxu0 0.0
        %1435 = vmatpush2.msra.mxu0 0.0
        %1436 = vmatprep.subr.mxu0 0.0
        %1437 = vmatpush2.msra.mxu0 0.0
        %1438 = vmatprep.subr.mxu0 0.0
        %1439 = vmatpush2.msra.mxu0 0.0
        %1440 = vmatprep.subr.mxu0 0.0
        %1441 = vmatpush2.msra.mxu0 0.0
        %1442 = vmatprep.subr.mxu0 0.0
        %1443 = vmatpush2.msra.mxu0 0.0
        %1444 = vmatprep.subr.mxu0 0.0
        %1445 = vmatpush2.msra.mxu0 0.0
        %1446 = vmatprep.subr.mxu0 0.0
        %1447 = vmatpush2.msra.mxu0 0.0
        %1448 = vmatprep.subr.mxu0 0.0
        %1449 = vmatpush2.msra.mxu0 0.0
        %1450 = vmatprep.subr.mxu0 0.0
        %1451 = vmatpush2.msra.mxu0 0.0
        %1452 = vmatprep.subr.mxu0 0.0
        %1453 = vmatpush2.msra.mxu0 0.0
        %1454 = vmatprep.subr.mxu0 0.0
        %1455 = vmatpush2.msra.mxu0 0.0
        %1456 = vmatprep.subr.mxu0 0.0
        %1457 = vmatpush2.msra.mxu0 0.0
        %1458 = vmatprep.subr.mxu0 0.0
        %1459 = vmatpush2.msra.mxu0 0.0
        %1460 = vmatprep.mubr.f32.mxu0 0.0
        %1461 = vmatmul.mubr.f32.gmra.mxu0 %v1391
        %v1462 = vpop.f32.mrf.mxu0
        %v1463 = vadd.f32 %v1389, %v1462
        %v1464 = vpop.f32.mrf.mxu0
        %1465 = vmatprep.mubr.f32.mxu0 0.0
        %1466 = vmatmul.mubr.f32.gmra.mxu0 %v1394
        %v1467 = vpop.f32.mrf.mxu0
        %v1468 = vadd.f32 %v1389, %v1467
        %v1469 = vpop.f32.mrf.mxu0
        %1470 = vdwg.mxu0
        %v1471 = vadd.f32 %v1116, %v1463
        %v1472 = vadd.f32 %v1117, %v1468
        %v1473 = vsel %vm829, %v1471, 0.0
        %1474 = vadd.xlane.f32.xlu0 %v1473
        %v1475 = vpop.xlane.xlu0 %1474
        %v1476 = vsel %vm829, %v1472, 0.0
        %1477 = vadd.xlane.f32.xlu0 %v1476
        %v1478 = vpop.xlane.xlu0 %1477
        %v1479 = vrcp.pop 32.0
        %v1480 = vmul.f32 %v1475, %v1479
        %v1481 = vmul.f32 %v1478, %v1479
        %v1482 = vsub.f32 %v1471, %v1480
        %v1483 = vsub.f32 %v1472, %v1481
        %v1484 = vmul.f32 %v1482, %v1482
        %v1485 = vmul.f32 %v1483, %v1483
        %v1486 = vsel %vm829, %v1484, 0.0
        %1487 = vadd.xlane.f32.xlu0 %v1486
        %v1488 = vpop.xlane.xlu0 %1487
        %v1489 = vsel %vm829, %v1485, 0.0
        %1490 = vadd.xlane.f32.xlu0 %v1489
        %v1491 = vpop.xlane.xlu0 %1490
        %v1492 = vmul.f32 %v1488, %v1479
        %v1493 = vmul.f32 %v1491, %v1479
        %v1494 = vadd.f32 %v1492, 1e-05
        %v1495 = vadd.f32 %v1493, 1e-05
        %v1496 = vrsqrt.pop %v1494
        %v1497 = vrsqrt.pop %v1495
        %v1498 = vmul.f32 %v1482, %v1496
        %v1499 = vmul.f32 %v1483, %v1497
        %v1500 = vlaneseq
        %v1501 = vshrl.u32 %v1500, 7
        %v1502 = vsub.s32 1, %v1501
        %v1503 = vrot.slane %v1118, %v1502
        %v1504 = vmul.f32 %v1498, %v1503
        %v1505 = vmul.f32 %v1499, %v1503
        %v1506 = vlaneseq
        %v1507 = vshrl.u32 %v1506, 7
        %v1508 = vsub.s32 2, %v1507
        %v1509 = vrot.slane %v1118, %v1508
        %v1510 = vadd.f32 %v1504, %v1509
        %v1511 = vadd.f32 %v1505, %v1509
        %v1512 = vld [vmem:[%s793] sm:$0xff]
        %v1513 = vld [vmem:[%s793 + $0x8] sm:$0xff]
        %v1514 = vld [vmem:[%s793 + $0x10] sm:$0xff]
        %v1515 = vld [vmem:[%s793 + $0x18] sm:$0xff]
        %v1516 = vld [vmem:[%s793 + $0x20] sm:$0xff]
        %v1517 = vld [vmem:[%s793 + $0x28] sm:$0xff]
        %v1518 = vld [vmem:[%s793 + $0x30] sm:$0xff]
        %v1519 = vld [vmem:[%s793 + $0x38] sm:$0xff]
        %v1520 = vld [vmem:[%s793 + $0x40] sm:$0xff]
        %v1521 = vld [vmem:[%s793 + $0x48] sm:$0xff]
        %v1522 = vld [vmem:[%s793 + $0x50] sm:$0xff]
        %v1523 = vld [vmem:[%s793 + $0x58] sm:$0xff]
        %v1524 = vld [vmem:[%s793 + $0x60] sm:$0xff]
        %v1525 = vld [vmem:[%s793 + $0x68] sm:$0xff]
        %v1526 = vld [vmem:[%s793 + $0x70] sm:$0xff]
        %v1527 = vld [vmem:[%s793 + $0x78] sm:$0xff]
        %v1528 = vld [vmem:[%s793 + $0x80] sm:$0xff]
        %v1529 = vld [vmem:[%s793 + $0x88] sm:$0xff]
        %v1530 = vld [vmem:[%s793 + $0x90] sm:$0xff]
        %v1531 = vld [vmem:[%s793 + $0x98] sm:$0xff]
        %v1532 = vld [vmem:[%s793 + $0xa0] sm:$0xff]
        %v1533 = vld [vmem:[%s793 + $0xa8] sm:$0xff]
        %v1534 = vld [vmem:[%s793 + $0xb0] sm:$0xff]
        %v1535 = vld [vmem:[%s793 + $0xb8] sm:$0xff]
        %v1536 = vld [vmem:[%s793 + $0xc0] sm:$0xff]
        %v1537 = vld [vmem:[%s793 + $0xc8] sm:$0xff]
        %v1538 = vld [vmem:[%s793 + $0xd0] sm:$0xff]
        %v1539 = vld [vmem:[%s793 + $0xd8] sm:$0xff]
        %v1540 = vld [vmem:[%s793 + $0xe0] sm:$0xff]
        %v1541 = vld [vmem:[%s793 + $0xe8] sm:$0xff]
        %v1542 = vld [vmem:[%s793 + $0xf0] sm:$0xff]
        %v1543 = vld [vmem:[%s793 + $0xf8] sm:$0xff]
        %v1544 = vld [vmem:[%s793 + $0x100] sm:$0xff]
        %v1545 = vld [vmem:[%s793 + $0x108] sm:$0xff]
        %v1546 = vld [vmem:[%s793 + $0x110] sm:$0xff]
        %v1547 = vld [vmem:[%s793 + $0x118] sm:$0xff]
        %v1548 = vld [vmem:[%s793 + $0x120] sm:$0xff]
        %v1549 = vld [vmem:[%s793 + $0x128] sm:$0xff]
        %v1550 = vld [vmem:[%s793 + $0x130] sm:$0xff]
        %v1551 = vld [vmem:[%s793 + $0x138] sm:$0xff]
        %v1552 = vld [vmem:[%s793 + $0x140] sm:$0xff]
        %v1553 = vld [vmem:[%s793 + $0x148] sm:$0xff]
        %v1554 = vld [vmem:[%s793 + $0x150] sm:$0xff]
        %v1555 = vld [vmem:[%s793 + $0x158] sm:$0xff]
        %v1556 = vld [vmem:[%s793 + $0x160] sm:$0xff]
        %v1557 = vld [vmem:[%s793 + $0x168] sm:$0xff]
        %v1558 = vld [vmem:[%s793 + $0x170] sm:$0xff]
        %v1559 = vld [vmem:[%s793 + $0x178] sm:$0xff]
        %v1560 = vld [vmem:[%s793 + $0x180] sm:$0xff]
        %v1561 = vld [vmem:[%s793 + $0x188] sm:$0xff]
        %v1562 = vld [vmem:[%s793 + $0x190] sm:$0xff]
        %v1563 = vld [vmem:[%s793 + $0x198] sm:$0xff]
        %v1564 = vld [vmem:[%s793 + $0x1a0] sm:$0xff]
        %v1565 = vld [vmem:[%s793 + $0x1a8] sm:$0xff]
        %v1566 = vld [vmem:[%s793 + $0x1b0] sm:$0xff]
        %v1567 = vld [vmem:[%s793 + $0x1b8] sm:$0xff]
        %v1568 = vld [vmem:[%s793 + $0x1c0] sm:$0xff]
        %v1569 = vld [vmem:[%s793 + $0x1c8] sm:$0xff]
        %v1570 = vld [vmem:[%s793 + $0x1d0] sm:$0xff]
        %v1571 = vld [vmem:[%s793 + $0x1d8] sm:$0xff]
        %v1572 = vld [vmem:[%s793 + $0x1e0] sm:$0xff]
        %v1573 = vld [vmem:[%s793 + $0x1e8] sm:$0xff]
        %v1574 = vld [vmem:[%s793 + $0x1f0] sm:$0xff]
        %v1575 = vld [vmem:[%s793 + $0x1f8] sm:$0xff]
        %v1576 = vld [vmem:[%s802] sm:$0xff]
        %v1577 = vld [vmem:[%s802 + $0x8] sm:$0xff]
        %v1578 = vld [vmem:[%s802 + $0x10] sm:$0xff]
        %v1579 = vld [vmem:[%s802 + $0x18] sm:$0xff]
        %v1580 = vld [vmem:[%s802 + $0x20] sm:$0xff]
        %v1581 = vld [vmem:[%s802 + $0x28] sm:$0xff]
        %v1582 = vld [vmem:[%s802 + $0x30] sm:$0xff]
        %v1583 = vld [vmem:[%s802 + $0x38] sm:$0xff]
        %v1584 = vld [vmem:[%s802 + $0x40] sm:$0xff]
        %v1585 = vld [vmem:[%s802 + $0x48] sm:$0xff]
        %v1586 = vld [vmem:[%s802 + $0x50] sm:$0xff]
        %v1587 = vld [vmem:[%s802 + $0x58] sm:$0xff]
        %v1588 = vld [vmem:[%s802 + $0x60] sm:$0xff]
        %v1589 = vld [vmem:[%s802 + $0x68] sm:$0xff]
        %v1590 = vld [vmem:[%s802 + $0x70] sm:$0xff]
        %v1591 = vld [vmem:[%s802 + $0x78] sm:$0xff]
        %v1592 = vld [vmem:[%s802 + $0x80] sm:$0xff]
        %v1593 = vld [vmem:[%s802 + $0x88] sm:$0xff]
        %v1594 = vld [vmem:[%s802 + $0x90] sm:$0xff]
        %v1595 = vld [vmem:[%s802 + $0x98] sm:$0xff]
        %v1596 = vld [vmem:[%s802 + $0xa0] sm:$0xff]
        %v1597 = vld [vmem:[%s802 + $0xa8] sm:$0xff]
        %v1598 = vld [vmem:[%s802 + $0xb0] sm:$0xff]
        %v1599 = vld [vmem:[%s802 + $0xb8] sm:$0xff]
        %v1600 = vld [vmem:[%s802 + $0xc0] sm:$0xff]
        %v1601 = vld [vmem:[%s802 + $0xc8] sm:$0xff]
        %v1602 = vld [vmem:[%s802 + $0xd0] sm:$0xff]
        %v1603 = vld [vmem:[%s802 + $0xd8] sm:$0xff]
        %v1604 = vld [vmem:[%s802 + $0xe0] sm:$0xff]
        %v1605 = vld [vmem:[%s802 + $0xe8] sm:$0xff]
        %v1606 = vld [vmem:[%s802 + $0xf0] sm:$0xff]
        %v1607 = vld [vmem:[%s802 + $0xf8] sm:$0xff]
        %v1608 = vld [vmem:[%s802 + $0x100] sm:$0xff]
        %v1609 = vld [vmem:[%s802 + $0x108] sm:$0xff]
        %v1610 = vld [vmem:[%s802 + $0x110] sm:$0xff]
        %v1611 = vld [vmem:[%s802 + $0x118] sm:$0xff]
        %v1612 = vld [vmem:[%s802 + $0x120] sm:$0xff]
        %v1613 = vld [vmem:[%s802 + $0x128] sm:$0xff]
        %v1614 = vld [vmem:[%s802 + $0x130] sm:$0xff]
        %v1615 = vld [vmem:[%s802 + $0x138] sm:$0xff]
        %v1616 = vld [vmem:[%s802 + $0x140] sm:$0xff]
        %v1617 = vld [vmem:[%s802 + $0x148] sm:$0xff]
        %v1618 = vld [vmem:[%s802 + $0x150] sm:$0xff]
        %v1619 = vld [vmem:[%s802 + $0x158] sm:$0xff]
        %v1620 = vld [vmem:[%s802 + $0x160] sm:$0xff]
        %v1621 = vld [vmem:[%s802 + $0x168] sm:$0xff]
        %v1622 = vld [vmem:[%s802 + $0x170] sm:$0xff]
        %v1623 = vld [vmem:[%s802 + $0x178] sm:$0xff]
        %v1624 = vld [vmem:[%s802 + $0x180] sm:$0xff]
        %v1625 = vld [vmem:[%s802 + $0x188] sm:$0xff]
        %v1626 = vld [vmem:[%s802 + $0x190] sm:$0xff]
        %v1627 = vld [vmem:[%s802 + $0x198] sm:$0xff]
        %v1628 = vld [vmem:[%s802 + $0x1a0] sm:$0xff]
        %v1629 = vld [vmem:[%s802 + $0x1a8] sm:$0xff]
        %v1630 = vld [vmem:[%s802 + $0x1b0] sm:$0xff]
        %v1631 = vld [vmem:[%s802 + $0x1b8] sm:$0xff]
        %v1632 = vld [vmem:[%s802 + $0x1c0] sm:$0xff]
        %v1633 = vld [vmem:[%s802 + $0x1c8] sm:$0xff]
        %v1634 = vld [vmem:[%s802 + $0x1d0] sm:$0xff]
        %v1635 = vld [vmem:[%s802 + $0x1d8] sm:$0xff]
        %v1636 = vld [vmem:[%s802 + $0x1e0] sm:$0xff]
        %v1637 = vld [vmem:[%s802 + $0x1e8] sm:$0xff]
        %v1638 = vld [vmem:[%s802 + $0x1f0] sm:$0xff]
        %v1639 = vld [vmem:[%s802 + $0x1f8] sm:$0xff]
        %v1640 = vld [vmem:[%s802 + $0x200] sm:$0xff]
        %v1641 = vld [vmem:[%s802 + $0x208] sm:$0xff]
        %v1642 = vld [vmem:[%s802 + $0x210] sm:$0xff]
        %v1643 = vld [vmem:[%s802 + $0x218] sm:$0xff]
        %v1644 = vld [vmem:[%s802 + $0x220] sm:$0xff]
        %v1645 = vld [vmem:[%s802 + $0x228] sm:$0xff]
        %v1646 = vld [vmem:[%s802 + $0x230] sm:$0xff]
        %v1647 = vld [vmem:[%s802 + $0x238] sm:$0xff]
        %v1648 = vld [vmem:[%s802 + $0x240] sm:$0xff]
        %v1649 = vld [vmem:[%s802 + $0x248] sm:$0xff]
        %v1650 = vld [vmem:[%s802 + $0x250] sm:$0xff]
        %v1651 = vld [vmem:[%s802 + $0x258] sm:$0xff]
        %v1652 = vld [vmem:[%s802 + $0x260] sm:$0xff]
        %v1653 = vld [vmem:[%s802 + $0x268] sm:$0xff]
        %v1654 = vld [vmem:[%s802 + $0x270] sm:$0xff]
        %v1655 = vld [vmem:[%s802 + $0x278] sm:$0xff]
        %v1656 = vld [vmem:[%s802 + $0x280] sm:$0xff]
        %v1657 = vld [vmem:[%s802 + $0x288] sm:$0xff]
        %v1658 = vld [vmem:[%s802 + $0x290] sm:$0xff]
        %v1659 = vld [vmem:[%s802 + $0x298] sm:$0xff]
        %v1660 = vld [vmem:[%s802 + $0x2a0] sm:$0xff]
        %v1661 = vld [vmem:[%s802 + $0x2a8] sm:$0xff]
        %v1662 = vld [vmem:[%s802 + $0x2b0] sm:$0xff]
        %v1663 = vld [vmem:[%s802 + $0x2b8] sm:$0xff]
        %v1664 = vld [vmem:[%s802 + $0x2c0] sm:$0xff]
        %v1665 = vld [vmem:[%s802 + $0x2c8] sm:$0xff]
        %v1666 = vld [vmem:[%s802 + $0x2d0] sm:$0xff]
        %v1667 = vld [vmem:[%s802 + $0x2d8] sm:$0xff]
        %v1668 = vld [vmem:[%s802 + $0x2e0] sm:$0xff]
        %v1669 = vld [vmem:[%s802 + $0x2e8] sm:$0xff]
        %v1670 = vld [vmem:[%s802 + $0x2f0] sm:$0xff]
        %v1671 = vld [vmem:[%s802 + $0x2f8] sm:$0xff]
        %v1672 = vld [vmem:[%s802 + $0x300] sm:$0xff]
        %v1673 = vld [vmem:[%s802 + $0x308] sm:$0xff]
        %v1674 = vld [vmem:[%s802 + $0x310] sm:$0xff]
        %v1675 = vld [vmem:[%s802 + $0x318] sm:$0xff]
        %v1676 = vld [vmem:[%s802 + $0x320] sm:$0xff]
        %v1677 = vld [vmem:[%s802 + $0x328] sm:$0xff]
        %v1678 = vld [vmem:[%s802 + $0x330] sm:$0xff]
        %v1679 = vld [vmem:[%s802 + $0x338] sm:$0xff]
        %v1680 = vld [vmem:[%s802 + $0x340] sm:$0xff]
        %v1681 = vld [vmem:[%s802 + $0x348] sm:$0xff]
        %v1682 = vld [vmem:[%s802 + $0x350] sm:$0xff]
        %v1683 = vld [vmem:[%s802 + $0x358] sm:$0xff]
        %v1684 = vld [vmem:[%s802 + $0x360] sm:$0xff]
        %v1685 = vld [vmem:[%s802 + $0x368] sm:$0xff]
        %v1686 = vld [vmem:[%s802 + $0x370] sm:$0xff]
        %v1687 = vld [vmem:[%s802 + $0x378] sm:$0xff]
        %v1688 = vld [vmem:[%s802 + $0x380] sm:$0xff]
        %v1689 = vld [vmem:[%s802 + $0x388] sm:$0xff]
        %v1690 = vld [vmem:[%s802 + $0x390] sm:$0xff]
        %v1691 = vld [vmem:[%s802 + $0x398] sm:$0xff]
        %v1692 = vld [vmem:[%s802 + $0x3a0] sm:$0xff]
        %v1693 = vld [vmem:[%s802 + $0x3a8] sm:$0xff]
        %v1694 = vld [vmem:[%s802 + $0x3b0] sm:$0xff]
        %v1695 = vld [vmem:[%s802 + $0x3b8] sm:$0xff]
        %v1696 = vld [vmem:[%s802 + $0x3c0] sm:$0xff]
        %v1697 = vld [vmem:[%s802 + $0x3c8] sm:$0xff]
        %v1698 = vld [vmem:[%s802 + $0x3d0] sm:$0xff]
        %v1699 = vld [vmem:[%s802 + $0x3d8] sm:$0xff]
        %v1700 = vld [vmem:[%s802 + $0x3e0] sm:$0xff]
        %v1701 = vld [vmem:[%s802 + $0x3e8] sm:$0xff]
        %v1702 = vld [vmem:[%s802 + $0x3f0] sm:$0xff]
        %v1703 = vld [vmem:[%s802 + $0x3f8] sm:$0xff]
        %v1704 = vld [vmem:[%s802 + $0x400] sm:$0xff]
        %v1705 = vld [vmem:[%s802 + $0x408] sm:$0xff]
        %v1706 = vld [vmem:[%s802 + $0x410] sm:$0xff]
        %v1707 = vld [vmem:[%s802 + $0x418] sm:$0xff]
        %v1708 = vld [vmem:[%s802 + $0x420] sm:$0xff]
        %v1709 = vld [vmem:[%s802 + $0x428] sm:$0xff]
        %v1710 = vld [vmem:[%s802 + $0x430] sm:$0xff]
        %v1711 = vld [vmem:[%s802 + $0x438] sm:$0xff]
        %v1712 = vld [vmem:[%s802 + $0x440] sm:$0xff]
        %v1713 = vld [vmem:[%s802 + $0x448] sm:$0xff]
        %v1714 = vld [vmem:[%s802 + $0x450] sm:$0xff]
        %v1715 = vld [vmem:[%s802 + $0x458] sm:$0xff]
        %v1716 = vld [vmem:[%s802 + $0x460] sm:$0xff]
        %v1717 = vld [vmem:[%s802 + $0x468] sm:$0xff]
        %v1718 = vld [vmem:[%s802 + $0x470] sm:$0xff]
        %v1719 = vld [vmem:[%s802 + $0x478] sm:$0xff]
        %v1720 = vld [vmem:[%s802 + $0x480] sm:$0xff]
        %v1721 = vld [vmem:[%s802 + $0x488] sm:$0xff]
        %v1722 = vld [vmem:[%s802 + $0x490] sm:$0xff]
        %v1723 = vld [vmem:[%s802 + $0x498] sm:$0xff]
        %v1724 = vld [vmem:[%s802 + $0x4a0] sm:$0xff]
        %v1725 = vld [vmem:[%s802 + $0x4a8] sm:$0xff]
        %v1726 = vld [vmem:[%s802 + $0x4b0] sm:$0xff]
        %v1727 = vld [vmem:[%s802 + $0x4b8] sm:$0xff]
        %v1728 = vld [vmem:[%s802 + $0x4c0] sm:$0xff]
        %v1729 = vld [vmem:[%s802 + $0x4c8] sm:$0xff]
        %v1730 = vld [vmem:[%s802 + $0x4d0] sm:$0xff]
        %v1731 = vld [vmem:[%s802 + $0x4d8] sm:$0xff]
        %v1732 = vld [vmem:[%s802 + $0x4e0] sm:$0xff]
        %v1733 = vld [vmem:[%s802 + $0x4e8] sm:$0xff]
        %v1734 = vld [vmem:[%s802 + $0x4f0] sm:$0xff]
        %v1735 = vld [vmem:[%s802 + $0x4f8] sm:$0xff]
        %v1736 = vld [vmem:[%s802 + $0x500] sm:$0xff]
        %v1737 = vld [vmem:[%s802 + $0x508] sm:$0xff]
        %v1738 = vld [vmem:[%s802 + $0x510] sm:$0xff]
        %v1739 = vld [vmem:[%s802 + $0x518] sm:$0xff]
        %v1740 = vld [vmem:[%s802 + $0x520] sm:$0xff]
        %v1741 = vld [vmem:[%s802 + $0x528] sm:$0xff]
        %v1742 = vld [vmem:[%s802 + $0x530] sm:$0xff]
        %v1743 = vld [vmem:[%s802 + $0x538] sm:$0xff]
        %v1744 = vld [vmem:[%s802 + $0x540] sm:$0xff]
        %v1745 = vld [vmem:[%s802 + $0x548] sm:$0xff]
        %v1746 = vld [vmem:[%s802 + $0x550] sm:$0xff]
        %v1747 = vld [vmem:[%s802 + $0x558] sm:$0xff]
        %v1748 = vld [vmem:[%s802 + $0x560] sm:$0xff]
        %v1749 = vld [vmem:[%s802 + $0x568] sm:$0xff]
        %v1750 = vld [vmem:[%s802 + $0x570] sm:$0xff]
        %v1751 = vld [vmem:[%s802 + $0x578] sm:$0xff]
        %v1752 = vld [vmem:[%s802 + $0x580] sm:$0xff]
        %v1753 = vld [vmem:[%s802 + $0x588] sm:$0xff]
        %v1754 = vld [vmem:[%s802 + $0x590] sm:$0xff]
        %v1755 = vld [vmem:[%s802 + $0x598] sm:$0xff]
        %v1756 = vld [vmem:[%s802 + $0x5a0] sm:$0xff]
        %v1757 = vld [vmem:[%s802 + $0x5a8] sm:$0xff]
        %v1758 = vld [vmem:[%s802 + $0x5b0] sm:$0xff]
        %v1759 = vld [vmem:[%s802 + $0x5b8] sm:$0xff]
        %v1760 = vld [vmem:[%s802 + $0x5c0] sm:$0xff]
        %v1761 = vld [vmem:[%s802 + $0x5c8] sm:$0xff]
        %v1762 = vld [vmem:[%s802 + $0x5d0] sm:$0xff]
        %v1763 = vld [vmem:[%s802 + $0x5d8] sm:$0xff]
        %v1764 = vld [vmem:[%s802 + $0x5e0] sm:$0xff]
        %v1765 = vld [vmem:[%s802 + $0x5e8] sm:$0xff]
        %v1766 = vld [vmem:[%s802 + $0x5f0] sm:$0xff]
        %v1767 = vld [vmem:[%s802 + $0x5f8] sm:$0xff]
        %v1768 = vld [vmem:[%s802 + $0x600] sm:$0xff]
        %v1769 = vld [vmem:[%s802 + $0x608] sm:$0xff]
        %v1770 = vld [vmem:[%s802 + $0x610] sm:$0xff]
        %v1771 = vld [vmem:[%s802 + $0x618] sm:$0xff]
        %v1772 = vld [vmem:[%s802 + $0x620] sm:$0xff]
        %v1773 = vld [vmem:[%s802 + $0x628] sm:$0xff]
        %v1774 = vld [vmem:[%s802 + $0x630] sm:$0xff]
        %v1775 = vld [vmem:[%s802 + $0x638] sm:$0xff]
        %v1776 = vld [vmem:[%s802 + $0x640] sm:$0xff]
        %v1777 = vld [vmem:[%s802 + $0x648] sm:$0xff]
        %v1778 = vld [vmem:[%s802 + $0x650] sm:$0xff]
        %v1779 = vld [vmem:[%s802 + $0x658] sm:$0xff]
        %v1780 = vld [vmem:[%s802 + $0x660] sm:$0xff]
        %v1781 = vld [vmem:[%s802 + $0x668] sm:$0xff]
        %v1782 = vld [vmem:[%s802 + $0x670] sm:$0xff]
        %v1783 = vld [vmem:[%s802 + $0x678] sm:$0xff]
        %v1784 = vld [vmem:[%s802 + $0x680] sm:$0xff]
        %v1785 = vld [vmem:[%s802 + $0x688] sm:$0xff]
        %v1786 = vld [vmem:[%s802 + $0x690] sm:$0xff]
        %v1787 = vld [vmem:[%s802 + $0x698] sm:$0xff]
        %v1788 = vld [vmem:[%s802 + $0x6a0] sm:$0xff]
        %v1789 = vld [vmem:[%s802 + $0x6a8] sm:$0xff]
        %v1790 = vld [vmem:[%s802 + $0x6b0] sm:$0xff]
        %v1791 = vld [vmem:[%s802 + $0x6b8] sm:$0xff]
        %v1792 = vld [vmem:[%s802 + $0x6c0] sm:$0xff]
        %v1793 = vld [vmem:[%s802 + $0x6c8] sm:$0xff]
        %v1794 = vld [vmem:[%s802 + $0x6d0] sm:$0xff]
        %v1795 = vld [vmem:[%s802 + $0x6d8] sm:$0xff]
        %v1796 = vld [vmem:[%s802 + $0x6e0] sm:$0xff]
        %v1797 = vld [vmem:[%s802 + $0x6e8] sm:$0xff]
        %v1798 = vld [vmem:[%s802 + $0x6f0] sm:$0xff]
        %v1799 = vld [vmem:[%s802 + $0x6f8] sm:$0xff]
        %v1800 = vld [vmem:[%s802 + $0x700] sm:$0xff]
        %v1801 = vld [vmem:[%s802 + $0x708] sm:$0xff]
        %v1802 = vld [vmem:[%s802 + $0x710] sm:$0xff]
        %v1803 = vld [vmem:[%s802 + $0x718] sm:$0xff]
        %v1804 = vld [vmem:[%s802 + $0x720] sm:$0xff]
        %v1805 = vld [vmem:[%s802 + $0x728] sm:$0xff]
        %v1806 = vld [vmem:[%s802 + $0x730] sm:$0xff]
        %v1807 = vld [vmem:[%s802 + $0x738] sm:$0xff]
        %v1808 = vld [vmem:[%s802 + $0x740] sm:$0xff]
        %v1809 = vld [vmem:[%s802 + $0x748] sm:$0xff]
        %v1810 = vld [vmem:[%s802 + $0x750] sm:$0xff]
        %v1811 = vld [vmem:[%s802 + $0x758] sm:$0xff]
        %v1812 = vld [vmem:[%s802 + $0x760] sm:$0xff]
        %v1813 = vld [vmem:[%s802 + $0x768] sm:$0xff]
        %v1814 = vld [vmem:[%s802 + $0x770] sm:$0xff]
        %v1815 = vld [vmem:[%s802 + $0x778] sm:$0xff]
        %v1816 = vld [vmem:[%s802 + $0x780] sm:$0xff]
        %v1817 = vld [vmem:[%s802 + $0x788] sm:$0xff]
        %v1818 = vld [vmem:[%s802 + $0x790] sm:$0xff]
        %v1819 = vld [vmem:[%s802 + $0x798] sm:$0xff]
        %v1820 = vld [vmem:[%s802 + $0x7a0] sm:$0xff]
        %v1821 = vld [vmem:[%s802 + $0x7a8] sm:$0xff]
        %v1822 = vld [vmem:[%s802 + $0x7b0] sm:$0xff]
        %v1823 = vld [vmem:[%s802 + $0x7b8] sm:$0xff]
        %v1824 = vld [vmem:[%s802 + $0x7c0] sm:$0xff]
        %v1825 = vld [vmem:[%s802 + $0x7c8] sm:$0xff]
        %v1826 = vld [vmem:[%s802 + $0x7d0] sm:$0xff]
        %v1827 = vld [vmem:[%s802 + $0x7d8] sm:$0xff]
        %v1828 = vld [vmem:[%s802 + $0x7e0] sm:$0xff]
        %v1829 = vld [vmem:[%s802 + $0x7e8] sm:$0xff]
        %v1830 = vld [vmem:[%s802 + $0x7f0] sm:$0xff]
        %v1831 = vld [vmem:[%s802 + $0x7f8] sm:$0xff]
        %v1832 = vld [vmem:[%s797] sm:$0xff]
        %v1833 = vld [vmem:[%s797 + $0x8] sm:$0xff]
        %v1836 = vlaneseq
        %v1837 = vshrl.u32 %v1836, 7
        %v1838 = vsub.s32 0, %v1837
        %v1839 = vrot.slane %v1832, %v1838
        %v1840 = vlaneseq
        %v1841 = vshrl.u32 %v1840, 7
        %v1842 = vsub.s32 1, %v1841
        %v1843 = vrot.slane %v1832, %v1842
        %v1844 = vlaneseq
        %v1845 = vshrl.u32 %v1844, 7
        %v1846 = vsub.s32 2, %v1845
        %v1847 = vrot.slane %v1832, %v1846
        %v1848 = vlaneseq
        %v1849 = vshrl.u32 %v1848, 7
        %v1850 = vsub.s32 3, %v1849
        %v1851 = vrot.slane %v1832, %v1850
        %v1852 = vlaneseq
        %v1853 = vshrl.u32 %v1852, 7
        %v1854 = vsub.s32 4, %v1853
        %v1855 = vrot.slane %v1832, %v1854
        %v1856 = vlaneseq
        %v1857 = vshrl.u32 %v1856, 7
        %v1858 = vsub.s32 5, %v1857
        %v1859 = vrot.slane %v1832, %v1858
        %v1860 = vlaneseq
        %v1861 = vshrl.u32 %v1860, 7
        %v1862 = vsub.s32 6, %v1861
        %v1863 = vrot.slane %v1832, %v1862
        %v1864 = vlaneseq
        %v1865 = vshrl.u32 %v1864, 7
        %v1866 = vsub.s32 7, %v1865
        %v1867 = vrot.slane %v1832, %v1866
        %v1868 = vlaneseq
        %v1869 = vshrl.u32 %v1868, 7
        %v1870 = vsub.s32 0, %v1869
        %v1871 = vrot.slane %v1833, %v1870
        %v1872 = vlaneseq
        %v1873 = vshrl.u32 %v1872, 7
        %v1874 = vsub.s32 1, %v1873
        %v1875 = vrot.slane %v1833, %v1874
        %v1876 = vlaneseq
        %v1877 = vshrl.u32 %v1876, 7
        %v1878 = vsub.s32 2, %v1877
        %v1879 = vrot.slane %v1833, %v1878
        %v1880 = vlaneseq
        %v1881 = vshrl.u32 %v1880, 7
        %v1882 = vsub.s32 3, %v1881
        %v1883 = vrot.slane %v1833, %v1882
        %v1884 = vlaneseq
        %v1885 = vshrl.u32 %v1884, 7
        %v1886 = vsub.s32 4, %v1885
        %v1887 = vrot.slane %v1833, %v1886
        %v1888 = vlaneseq
        %v1889 = vshrl.u32 %v1888, 7
        %v1890 = vsub.s32 5, %v1889
        %v1891 = vrot.slane %v1833, %v1890
        %v1892 = vlaneseq
        %v1893 = vshrl.u32 %v1892, 7
        %v1894 = vsub.s32 6, %v1893
        %v1895 = vrot.slane %v1833, %v1894
        %v1896 = vlaneseq
        %v1897 = vshrl.u32 %v1896, 7
        %v1898 = vsub.s32 7, %v1897
        %v1899 = vrot.slane %v1833, %v1898
        %v1917 = vsel %vm829, %v1510, 0
        %v1920 = vsel %vm829, %v1511, 0
        %1922 = vmatprep.subr.mxu0 0.0
        %1923 = vmatpush1.msra.mxu0 0.0
        %1924 = vmatprep.subr.mxu0 0.0
        %1925 = vmatpush1.msra.mxu0 0.0
        %1926 = vmatprep.subr.mxu0 0.0
        %1927 = vmatpush1.msra.mxu0 0.0
        %1928 = vmatprep.subr.mxu0 0.0
        %1929 = vmatpush1.msra.mxu0 0.0
        %1930 = vmatprep.subr.mxu0 0.0
        %1931 = vmatpush1.msra.mxu0 0.0
        %1932 = vmatprep.subr.mxu0 0.0
        %1933 = vmatpush1.msra.mxu0 0.0
        %1934 = vmatprep.subr.mxu0 0.0
        %1935 = vmatpush1.msra.mxu0 0.0
        %1936 = vmatprep.subr.mxu0 0.0
        %1937 = vmatpush1.msra.mxu0 0.0
        %1938 = vmatprep.subr.mxu0 0.0
        %1939 = vmatpush1.msra.mxu0 0.0
        %1940 = vmatprep.subr.mxu0 0.0
        %1941 = vmatpush1.msra.mxu0 0.0
        %1942 = vmatprep.subr.mxu0 0.0
        %1943 = vmatpush1.msra.mxu0 0.0
        %1944 = vmatprep.subr.mxu0 0.0
        %1945 = vmatpush1.msra.mxu0 0.0
        %1946 = vmatprep.subr.mxu0 %v1561
        %1947 = vmatpush1.msra.mxu0 %v1560
        %1948 = vmatprep.subr.mxu0 %v1545
        %1949 = vmatpush1.msra.mxu0 %v1544
        %1950 = vmatprep.subr.mxu0 %v1529
        %1951 = vmatpush1.msra.mxu0 %v1528
        %1952 = vmatprep.subr.mxu0 %v1513
        %1953 = vmatpush1.msra.mxu0 %v1512
        %1954 = vmatprep.subr.mxu0 0.0
        %1955 = vmatpush2.msra.mxu0 0.0
        %1956 = vmatprep.subr.mxu0 0.0
        %1957 = vmatpush2.msra.mxu0 0.0
        %1958 = vmatprep.subr.mxu0 0.0
        %1959 = vmatpush2.msra.mxu0 0.0
        %1960 = vmatprep.subr.mxu0 0.0
        %1961 = vmatpush2.msra.mxu0 0.0
        %1962 = vmatprep.subr.mxu0 0.0
        %1963 = vmatpush2.msra.mxu0 0.0
        %1964 = vmatprep.subr.mxu0 0.0
        %1965 = vmatpush2.msra.mxu0 0.0
        %1966 = vmatprep.subr.mxu0 0.0
        %1967 = vmatpush2.msra.mxu0 0.0
        %1968 = vmatprep.subr.mxu0 0.0
        %1969 = vmatpush2.msra.mxu0 0.0
        %1970 = vmatprep.subr.mxu0 0.0
        %1971 = vmatpush2.msra.mxu0 0.0
        %1972 = vmatprep.subr.mxu0 0.0
        %1973 = vmatpush2.msra.mxu0 0.0
        %1974 = vmatprep.subr.mxu0 0.0
        %1975 = vmatpush2.msra.mxu0 0.0
        %1976 = vmatprep.subr.mxu0 0.0
        %1977 = vmatpush2.msra.mxu0 0.0
        %1978 = vmatprep.subr.mxu0 0.0
        %1979 = vmatpush2.msra.mxu0 0.0
        %1980 = vmatprep.subr.mxu0 0.0
        %1981 = vmatpush2.msra.mxu0 0.0
        %1982 = vmatprep.subr.mxu0 0.0
        %1983 = vmatpush2.msra.mxu0 0.0
        %1984 = vmatprep.subr.mxu0 0.0
        %1985 = vmatpush2.msra.mxu0 0.0
        %1986 = vmatprep.mubr.f32.mxu0 0.0
        %1987 = vmatmul.mubr.f32.gmra.mxu0 %v1917
        %v1988 = vpop.f32.mrf.mxu0
        %v1989 = vadd.f32 %v1839, %v1988
        %v1990 = vpop.f32.mrf.mxu0
        %v1991 = vadd.f32 %v1843, %v1990
        %1992 = vmatprep.mubr.f32.mxu0 0.0
        %1993 = vmatmul.mubr.f32.gmra.mxu0 %v1920
        %v1994 = vpop.f32.mrf.mxu0
        %v1995 = vadd.f32 %v1839, %v1994
        %v1996 = vpop.f32.mrf.mxu0
        %v1997 = vadd.f32 %v1843, %v1996
        %1998 = vdwg.mxu0
        %1999 = vmatprep.subr.mxu0 0.0
        %2000 = vmatpush1.msra.mxu0 0.0
        %2001 = vmatprep.subr.mxu0 0.0
        %2002 = vmatpush1.msra.mxu0 0.0
        %2003 = vmatprep.subr.mxu0 0.0
        %2004 = vmatpush1.msra.mxu0 0.0
        %2005 = vmatprep.subr.mxu0 0.0
        %2006 = vmatpush1.msra.mxu0 0.0
        %2007 = vmatprep.subr.mxu0 0.0
        %2008 = vmatpush1.msra.mxu0 0.0
        %2009 = vmatprep.subr.mxu0 0.0
        %2010 = vmatpush1.msra.mxu0 0.0
        %2011 = vmatprep.subr.mxu0 0.0
        %2012 = vmatpush1.msra.mxu0 0.0
        %2013 = vmatprep.subr.mxu0 0.0
        %2014 = vmatpush1.msra.mxu0 0.0
        %2015 = vmatprep.subr.mxu0 0.0
        %2016 = vmatpush1.msra.mxu0 0.0
        %2017 = vmatprep.subr.mxu0 0.0
        %2018 = vmatpush1.msra.mxu0 0.0
        %2019 = vmatprep.subr.mxu0 0.0
        %2020 = vmatpush1.msra.mxu0 0.0
        %2021 = vmatprep.subr.mxu0 0.0
        %2022 = vmatpush1.msra.mxu0 0.0
        %2023 = vmatprep.subr.mxu0 %v1563
        %2024 = vmatpush1.msra.mxu0 %v1562
        %2025 = vmatprep.subr.mxu0 %v1547
        %2026 = vmatpush1.msra.mxu0 %v1546
        %2027 = vmatprep.subr.mxu0 %v1531
        %2028 = vmatpush1.msra.mxu0 %v1530
        %2029 = vmatprep.subr.mxu0 %v1515
        %2030 = vmatpush1.msra.mxu0 %v1514
        %2031 = vmatprep.subr.mxu0 0.0
        %2032 = vmatpush2.msra.mxu0 0.0
        %2033 = vmatprep.subr.mxu0 0.0
        %2034 = vmatpush2.msra.mxu0 0.0
        %2035 = vmatprep.subr.mxu0 0.0
        %2036 = vmatpush2.msra.mxu0 0.0
        %2037 = vmatprep.subr.mxu0 0.0
        %2038 = vmatpush2.msra.mxu0 0.0
        %2039 = vmatprep.subr.mxu0 0.0
        %2040 = vmatpush2.msra.mxu0 0.0
        %2041 = vmatprep.subr.mxu0 0.0
        %2042 = vmatpush2.msra.mxu0 0.0
        %2043 = vmatprep.subr.mxu0 0.0
        %2044 = vmatpush2.msra.mxu0 0.0
        %2045 = vmatprep.subr.mxu0 0.0
        %2046 = vmatpush2.msra.mxu0 0.0
        %2047 = vmatprep.subr.mxu0 0.0
        %2048 = vmatpush2.msra.mxu0 0.0
        %2049 = vmatprep.subr.mxu0 0.0
        %2050 = vmatpush2.msra.mxu0 0.0
        %2051 = vmatprep.subr.mxu0 0.0
        %2052 = vmatpush2.msra.mxu0 0.0
        %2053 = vmatprep.subr.mxu0 0.0
        %2054 = vmatpush2.msra.mxu0 0.0
        %2055 = vmatprep.subr.mxu0 0.0
        %2056 = vmatpush2.msra.mxu0 0.0
        %2057 = vmatprep.subr.mxu0 0.0
        %2058 = vmatpush2.msra.mxu0 0.0
        %2059 = vmatprep.subr.mxu0 0.0
        %2060 = vmatpush2.msra.mxu0 0.0
        %2061 = vmatprep.subr.mxu0 0.0
        %2062 = vmatpush2.msra.mxu0 0.0
        %2063 = vmatprep.mubr.f32.mxu0 0.0
        %2064 = vmatmul.mubr.f32.gmra.mxu0 %v1917
        %v2065 = vpop.f32.mrf.mxu0
        %v2066 = vadd.f32 %v1847, %v2065
        %v2067 = vpop.f32.mrf.mxu0
        %v2068 = vadd.f32 %v1851, %v2067
        %2069 = vmatprep.mubr.f32.mxu0 0.0
        %2070 = vmatmul.mubr.f32.gmra.mxu0 %v1920
        %v2071 = vpop.f32.mrf.mxu0
        %v2072 = vadd.f32 %v1847, %v2071
        %v2073 = vpop.f32.mrf.mxu0
        %v2074 = vadd.f32 %v1851, %v2073
        %2075 = vdwg.mxu0
        %2076 = vmatprep.subr.mxu0 0.0
        %2077 = vmatpush1.msra.mxu0 0.0
        %2078 = vmatprep.subr.mxu0 0.0
        %2079 = vmatpush1.msra.mxu0 0.0
        %2080 = vmatprep.subr.mxu0 0.0
        %2081 = vmatpush1.msra.mxu0 0.0
        %2082 = vmatprep.subr.mxu0 0.0
        %2083 = vmatpush1.msra.mxu0 0.0
        %2084 = vmatprep.subr.mxu0 0.0
        %2085 = vmatpush1.msra.mxu0 0.0
        %2086 = vmatprep.subr.mxu0 0.0
        %2087 = vmatpush1.msra.mxu0 0.0
        %2088 = vmatprep.subr.mxu0 0.0
        %2089 = vmatpush1.msra.mxu0 0.0
        %2090 = vmatprep.subr.mxu0 0.0
        %2091 = vmatpush1.msra.mxu0 0.0
        %2092 = vmatprep.subr.mxu0 0.0
        %2093 = vmatpush1.msra.mxu0 0.0
        %2094 = vmatprep.subr.mxu0 0.0
        %2095 = vmatpush1.msra.mxu0 0.0
        %2096 = vmatprep.subr.mxu0 0.0
        %2097 = vmatpush1.msra.mxu0 0.0
        %2098 = vmatprep.subr.mxu0 0.0
        %2099 = vmatpush1.msra.mxu0 0.0
        %2100 = vmatprep.subr.mxu0 %v1565
        %2101 = vmatpush1.msra.mxu0 %v1564
        %2102 = vmatprep.subr.mxu0 %v1549
        %2103 = vmatpush1.msra.mxu0 %v1548
        %2104 = vmatprep.subr.mxu0 %v1533
        %2105 = vmatpush1.msra.mxu0 %v1532
        %2106 = vmatprep.subr.mxu0 %v1517
        %2107 = vmatpush1.msra.mxu0 %v1516
        %2108 = vmatprep.subr.mxu0 0.0
        %2109 = vmatpush2.msra.mxu0 0.0
        %2110 = vmatprep.subr.mxu0 0.0
        %2111 = vmatpush2.msra.mxu0 0.0
        %2112 = vmatprep.subr.mxu0 0.0
        %2113 = vmatpush2.msra.mxu0 0.0
        %2114 = vmatprep.subr.mxu0 0.0
        %2115 = vmatpush2.msra.mxu0 0.0
        %2116 = vmatprep.subr.mxu0 0.0
        %2117 = vmatpush2.msra.mxu0 0.0
        %2118 = vmatprep.subr.mxu0 0.0
        %2119 = vmatpush2.msra.mxu0 0.0
        %2120 = vmatprep.subr.mxu0 0.0
        %2121 = vmatpush2.msra.mxu0 0.0
        %2122 = vmatprep.subr.mxu0 0.0
        %2123 = vmatpush2.msra.mxu0 0.0
        %2124 = vmatprep.subr.mxu0 0.0
        %2125 = vmatpush2.msra.mxu0 0.0
        %2126 = vmatprep.subr.mxu0 0.0
        %2127 = vmatpush2.msra.mxu0 0.0
        %2128 = vmatprep.subr.mxu0 0.0
        %2129 = vmatpush2.msra.mxu0 0.0
        %2130 = vmatprep.subr.mxu0 0.0
        %2131 = vmatpush2.msra.mxu0 0.0
        %2132 = vmatprep.subr.mxu0 0.0
        %2133 = vmatpush2.msra.mxu0 0.0
        %2134 = vmatprep.subr.mxu0 0.0
        %2135 = vmatpush2.msra.mxu0 0.0
        %2136 = vmatprep.subr.mxu0 0.0
        %2137 = vmatpush2.msra.mxu0 0.0
        %2138 = vmatprep.subr.mxu0 0.0
        %2139 = vmatpush2.msra.mxu0 0.0
        %2140 = vmatprep.mubr.f32.mxu0 0.0
        %2141 = vmatmul.mubr.f32.gmra.mxu0 %v1917
        %v2142 = vpop.f32.mrf.mxu0
        %v2143 = vadd.f32 %v1855, %v2142
        %v2144 = vpop.f32.mrf.mxu0
        %v2145 = vadd.f32 %v1859, %v2144
        %2146 = vmatprep.mubr.f32.mxu0 0.0
        %2147 = vmatmul.mubr.f32.gmra.mxu0 %v1920
        %v2148 = vpop.f32.mrf.mxu0
        %v2149 = vadd.f32 %v1855, %v2148
        %v2150 = vpop.f32.mrf.mxu0
        %v2151 = vadd.f32 %v1859, %v2150
        %2152 = vdwg.mxu0
        %2153 = vmatprep.subr.mxu0 0.0
        %2154 = vmatpush1.msra.mxu0 0.0
        %2155 = vmatprep.subr.mxu0 0.0
        %2156 = vmatpush1.msra.mxu0 0.0
        %2157 = vmatprep.subr.mxu0 0.0
        %2158 = vmatpush1.msra.mxu0 0.0
        %2159 = vmatprep.subr.mxu0 0.0
        %2160 = vmatpush1.msra.mxu0 0.0
        %2161 = vmatprep.subr.mxu0 0.0
        %2162 = vmatpush1.msra.mxu0 0.0
        %2163 = vmatprep.subr.mxu0 0.0
        %2164 = vmatpush1.msra.mxu0 0.0
        %2165 = vmatprep.subr.mxu0 0.0
        %2166 = vmatpush1.msra.mxu0 0.0
        %2167 = vmatprep.subr.mxu0 0.0
        %2168 = vmatpush1.msra.mxu0 0.0
        %2169 = vmatprep.subr.mxu0 0.0
        %2170 = vmatpush1.msra.mxu0 0.0
        %2171 = vmatprep.subr.mxu0 0.0
        %2172 = vmatpush1.msra.mxu0 0.0
        %2173 = vmatprep.subr.mxu0 0.0
        %2174 = vmatpush1.msra.mxu0 0.0
        %2175 = vmatprep.subr.mxu0 0.0
        %2176 = vmatpush1.msra.mxu0 0.0
        %2177 = vmatprep.subr.mxu0 %v1567
        %2178 = vmatpush1.msra.mxu0 %v1566
        %2179 = vmatprep.subr.mxu0 %v1551
        %2180 = vmatpush1.msra.mxu0 %v1550
        %2181 = vmatprep.subr.mxu0 %v1535
        %2182 = vmatpush1.msra.mxu0 %v1534
        %2183 = vmatprep.subr.mxu0 %v1519
        %2184 = vmatpush1.msra.mxu0 %v1518
        %2185 = vmatprep.subr.mxu0 0.0
        %2186 = vmatpush2.msra.mxu0 0.0
        %2187 = vmatprep.subr.mxu0 0.0
        %2188 = vmatpush2.msra.mxu0 0.0
        %2189 = vmatprep.subr.mxu0 0.0
        %2190 = vmatpush2.msra.mxu0 0.0
        %2191 = vmatprep.subr.mxu0 0.0
        %2192 = vmatpush2.msra.mxu0 0.0
        %2193 = vmatprep.subr.mxu0 0.0
        %2194 = vmatpush2.msra.mxu0 0.0
        %2195 = vmatprep.subr.mxu0 0.0
        %2196 = vmatpush2.msra.mxu0 0.0
        %2197 = vmatprep.subr.mxu0 0.0
        %2198 = vmatpush2.msra.mxu0 0.0
        %2199 = vmatprep.subr.mxu0 0.0
        %2200 = vmatpush2.msra.mxu0 0.0
        %2201 = vmatprep.subr.mxu0 0.0
        %2202 = vmatpush2.msra.mxu0 0.0
        %2203 = vmatprep.subr.mxu0 0.0
        %2204 = vmatpush2.msra.mxu0 0.0
        %2205 = vmatprep.subr.mxu0 0.0
        %2206 = vmatpush2.msra.mxu0 0.0
        %2207 = vmatprep.subr.mxu0 0.0
        %2208 = vmatpush2.msra.mxu0 0.0
        %2209 = vmatprep.subr.mxu0 0.0
        %2210 = vmatpush2.msra.mxu0 0.0
        %2211 = vmatprep.subr.mxu0 0.0
        %2212 = vmatpush2.msra.mxu0 0.0
        %2213 = vmatprep.subr.mxu0 0.0
        %2214 = vmatpush2.msra.mxu0 0.0
        %2215 = vmatprep.subr.mxu0 0.0
        %2216 = vmatpush2.msra.mxu0 0.0
        %2217 = vmatprep.mubr.f32.mxu0 0.0
        %2218 = vmatmul.mubr.f32.gmra.mxu0 %v1917
        %v2219 = vpop.f32.mrf.mxu0
        %v2220 = vadd.f32 %v1863, %v2219
        %v2221 = vpop.f32.mrf.mxu0
        %v2222 = vadd.f32 %v1867, %v2221
        %2223 = vmatprep.mubr.f32.mxu0 0.0
        %2224 = vmatmul.mubr.f32.gmra.mxu0 %v1920
        %v2225 = vpop.f32.mrf.mxu0
        %v2226 = vadd.f32 %v1863, %v2225
        %v2227 = vpop.f32.mrf.mxu0
        %v2228 = vadd.f32 %v1867, %v2227
        %2229 = vdwg.mxu0
        %2230 = vmatprep.subr.mxu0 0.0
        %2231 = vmatpush1.msra.mxu0 0.0
        %2232 = vmatprep.subr.mxu0 0.0
        %2233 = vmatpush1.msra.mxu0 0.0
        %2234 = vmatprep.subr.mxu0 0.0
        %2235 = vmatpush1.msra.mxu0 0.0
        %2236 = vmatprep.subr.mxu0 0.0
        %2237 = vmatpush1.msra.mxu0 0.0
        %2238 = vmatprep.subr.mxu0 0.0
        %2239 = vmatpush1.msra.mxu0 0.0
        %2240 = vmatprep.subr.mxu0 0.0
        %2241 = vmatpush1.msra.mxu0 0.0
        %2242 = vmatprep.subr.mxu0 0.0
        %2243 = vmatpush1.msra.mxu0 0.0
        %2244 = vmatprep.subr.mxu0 0.0
        %2245 = vmatpush1.msra.mxu0 0.0
        %2246 = vmatprep.subr.mxu0 0.0
        %2247 = vmatpush1.msra.mxu0 0.0
        %2248 = vmatprep.subr.mxu0 0.0
        %2249 = vmatpush1.msra.mxu0 0.0
        %2250 = vmatprep.subr.mxu0 0.0
        %2251 = vmatpush1.msra.mxu0 0.0
        %2252 = vmatprep.subr.mxu0 0.0
        %2253 = vmatpush1.msra.mxu0 0.0
        %2254 = vmatprep.subr.mxu0 %v1569
        %2255 = vmatpush1.msra.mxu0 %v1568
        %2256 = vmatprep.subr.mxu0 %v1553
        %2257 = vmatpush1.msra.mxu0 %v1552
        %2258 = vmatprep.subr.mxu0 %v1537
        %2259 = vmatpush1.msra.mxu0 %v1536
        %2260 = vmatprep.subr.mxu0 %v1521
        %2261 = vmatpush1.msra.mxu0 %v1520
        %2262 = vmatprep.subr.mxu0 0.0
        %2263 = vmatpush2.msra.mxu0 0.0
        %2264 = vmatprep.subr.mxu0 0.0
        %2265 = vmatpush2.msra.mxu0 0.0
        %2266 = vmatprep.subr.mxu0 0.0
        %2267 = vmatpush2.msra.mxu0 0.0
        %2268 = vmatprep.subr.mxu0 0.0
        %2269 = vmatpush2.msra.mxu0 0.0
        %2270 = vmatprep.subr.mxu0 0.0
        %2271 = vmatpush2.msra.mxu0 0.0
        %2272 = vmatprep.subr.mxu0 0.0
        %2273 = vmatpush2.msra.mxu0 0.0
        %2274 = vmatprep.subr.mxu0 0.0
        %2275 = vmatpush2.msra.mxu0 0.0
        %2276 = vmatprep.subr.mxu0 0.0
        %2277 = vmatpush2.msra.mxu0 0.0
        %2278 = vmatprep.subr.mxu0 0.0
        %2279 = vmatpush2.msra.mxu0 0.0
        %2280 = vmatprep.subr.mxu0 0.0
        %2281 = vmatpush2.msra.mxu0 0.0
        %2282 = vmatprep.subr.mxu0 0.0
        %2283 = vmatpush2.msra.mxu0 0.0
        %2284 = vmatprep.subr.mxu0 0.0
        %2285 = vmatpush2.msra.mxu0 0.0
        %2286 = vmatprep.subr.mxu0 0.0
        %2287 = vmatpush2.msra.mxu0 0.0
        %2288 = vmatprep.subr.mxu0 0.0
        %2289 = vmatpush2.msra.mxu0 0.0
        %2290 = vmatprep.subr.mxu0 0.0
        %2291 = vmatpush2.msra.mxu0 0.0
        %2292 = vmatprep.subr.mxu0 0.0
        %2293 = vmatpush2.msra.mxu0 0.0
        %2294 = vmatprep.mubr.f32.mxu0 0.0
        %2295 = vmatmul.mubr.f32.gmra.mxu0 %v1917
        %v2296 = vpop.f32.mrf.mxu0
        %v2297 = vadd.f32 %v1871, %v2296
        %v2298 = vpop.f32.mrf.mxu0
        %v2299 = vadd.f32 %v1875, %v2298
        %2300 = vmatprep.mubr.f32.mxu0 0.0
        %2301 = vmatmul.mubr.f32.gmra.mxu0 %v1920
        %v2302 = vpop.f32.mrf.mxu0
        %v2303 = vadd.f32 %v1871, %v2302
        %v2304 = vpop.f32.mrf.mxu0
        %v2305 = vadd.f32 %v1875, %v2304
        %2306 = vdwg.mxu0
        %2307 = vmatprep.subr.mxu0 0.0
        %2308 = vmatpush1.msra.mxu0 0.0
        %2309 = vmatprep.subr.mxu0 0.0
        %2310 = vmatpush1.msra.mxu0 0.0
        %2311 = vmatprep.subr.mxu0 0.0
        %2312 = vmatpush1.msra.mxu0 0.0
        %2313 = vmatprep.subr.mxu0 0.0
        %2314 = vmatpush1.msra.mxu0 0.0
        %2315 = vmatprep.subr.mxu0 0.0
        %2316 = vmatpush1.msra.mxu0 0.0
        %2317 = vmatprep.subr.mxu0 0.0
        %2318 = vmatpush1.msra.mxu0 0.0
        %2319 = vmatprep.subr.mxu0 0.0
        %2320 = vmatpush1.msra.mxu0 0.0
        %2321 = vmatprep.subr.mxu0 0.0
        %2322 = vmatpush1.msra.mxu0 0.0
        %2323 = vmatprep.subr.mxu0 0.0
        %2324 = vmatpush1.msra.mxu0 0.0
        %2325 = vmatprep.subr.mxu0 0.0
        %2326 = vmatpush1.msra.mxu0 0.0
        %2327 = vmatprep.subr.mxu0 0.0
        %2328 = vmatpush1.msra.mxu0 0.0
        %2329 = vmatprep.subr.mxu0 0.0
        %2330 = vmatpush1.msra.mxu0 0.0
        %2331 = vmatprep.subr.mxu0 %v1571
        %2332 = vmatpush1.msra.mxu0 %v1570
        %2333 = vmatprep.subr.mxu0 %v1555
        %2334 = vmatpush1.msra.mxu0 %v1554
        %2335 = vmatprep.subr.mxu0 %v1539
        %2336 = vmatpush1.msra.mxu0 %v1538
        %2337 = vmatprep.subr.mxu0 %v1523
        %2338 = vmatpush1.msra.mxu0 %v1522
        %2339 = vmatprep.subr.mxu0 0.0
        %2340 = vmatpush2.msra.mxu0 0.0
        %2341 = vmatprep.subr.mxu0 0.0
        %2342 = vmatpush2.msra.mxu0 0.0
        %2343 = vmatprep.subr.mxu0 0.0
        %2344 = vmatpush2.msra.mxu0 0.0
        %2345 = vmatprep.subr.mxu0 0.0
        %2346 = vmatpush2.msra.mxu0 0.0
        %2347 = vmatprep.subr.mxu0 0.0
        %2348 = vmatpush2.msra.mxu0 0.0
        %2349 = vmatprep.subr.mxu0 0.0
        %2350 = vmatpush2.msra.mxu0 0.0
        %2351 = vmatprep.subr.mxu0 0.0
        %2352 = vmatpush2.msra.mxu0 0.0
        %2353 = vmatprep.subr.mxu0 0.0
        %2354 = vmatpush2.msra.mxu0 0.0
        %2355 = vmatprep.subr.mxu0 0.0
        %2356 = vmatpush2.msra.mxu0 0.0
        %2357 = vmatprep.subr.mxu0 0.0
        %2358 = vmatpush2.msra.mxu0 0.0
        %2359 = vmatprep.subr.mxu0 0.0
        %2360 = vmatpush2.msra.mxu0 0.0
        %2361 = vmatprep.subr.mxu0 0.0
        %2362 = vmatpush2.msra.mxu0 0.0
        %2363 = vmatprep.subr.mxu0 0.0
        %2364 = vmatpush2.msra.mxu0 0.0
        %2365 = vmatprep.subr.mxu0 0.0
        %2366 = vmatpush2.msra.mxu0 0.0
        %2367 = vmatprep.subr.mxu0 0.0
        %2368 = vmatpush2.msra.mxu0 0.0
        %2369 = vmatprep.subr.mxu0 0.0
        %2370 = vmatpush2.msra.mxu0 0.0
        %2371 = vmatprep.mubr.f32.mxu0 0.0
        %2372 = vmatmul.mubr.f32.gmra.mxu0 %v1917
        %v2373 = vpop.f32.mrf.mxu0
        %v2374 = vadd.f32 %v1879, %v2373
        %v2375 = vpop.f32.mrf.mxu0
        %v2376 = vadd.f32 %v1883, %v2375
        %2377 = vmatprep.mubr.f32.mxu0 0.0
        %2378 = vmatmul.mubr.f32.gmra.mxu0 %v1920
        %v2379 = vpop.f32.mrf.mxu0
        %v2380 = vadd.f32 %v1879, %v2379
        %v2381 = vpop.f32.mrf.mxu0
        %v2382 = vadd.f32 %v1883, %v2381
        %2383 = vdwg.mxu0
        %2384 = vmatprep.subr.mxu0 0.0
        %2385 = vmatpush1.msra.mxu0 0.0
        %2386 = vmatprep.subr.mxu0 0.0
        %2387 = vmatpush1.msra.mxu0 0.0
        %2388 = vmatprep.subr.mxu0 0.0
        %2389 = vmatpush1.msra.mxu0 0.0
        %2390 = vmatprep.subr.mxu0 0.0
        %2391 = vmatpush1.msra.mxu0 0.0
        %2392 = vmatprep.subr.mxu0 0.0
        %2393 = vmatpush1.msra.mxu0 0.0
        %2394 = vmatprep.subr.mxu0 0.0
        %2395 = vmatpush1.msra.mxu0 0.0
        %2396 = vmatprep.subr.mxu0 0.0
        %2397 = vmatpush1.msra.mxu0 0.0
        %2398 = vmatprep.subr.mxu0 0.0
        %2399 = vmatpush1.msra.mxu0 0.0
        %2400 = vmatprep.subr.mxu0 0.0
        %2401 = vmatpush1.msra.mxu0 0.0
        %2402 = vmatprep.subr.mxu0 0.0
        %2403 = vmatpush1.msra.mxu0 0.0
        %2404 = vmatprep.subr.mxu0 0.0
        %2405 = vmatpush1.msra.mxu0 0.0
        %2406 = vmatprep.subr.mxu0 0.0
        %2407 = vmatpush1.msra.mxu0 0.0
        %2408 = vmatprep.subr.mxu0 %v1573
        %2409 = vmatpush1.msra.mxu0 %v1572
        %2410 = vmatprep.subr.mxu0 %v1557
        %2411 = vmatpush1.msra.mxu0 %v1556
        %2412 = vmatprep.subr.mxu0 %v1541
        %2413 = vmatpush1.msra.mxu0 %v1540
        %2414 = vmatprep.subr.mxu0 %v1525
        %2415 = vmatpush1.msra.mxu0 %v1524
        %2416 = vmatprep.subr.mxu0 0.0
        %2417 = vmatpush2.msra.mxu0 0.0
        %2418 = vmatprep.subr.mxu0 0.0
        %2419 = vmatpush2.msra.mxu0 0.0
        %2420 = vmatprep.subr.mxu0 0.0
        %2421 = vmatpush2.msra.mxu0 0.0
        %2422 = vmatprep.subr.mxu0 0.0
        %2423 = vmatpush2.msra.mxu0 0.0
        %2424 = vmatprep.subr.mxu0 0.0
        %2425 = vmatpush2.msra.mxu0 0.0
        %2426 = vmatprep.subr.mxu0 0.0
        %2427 = vmatpush2.msra.mxu0 0.0
        %2428 = vmatprep.subr.mxu0 0.0
        %2429 = vmatpush2.msra.mxu0 0.0
        %2430 = vmatprep.subr.mxu0 0.0
        %2431 = vmatpush2.msra.mxu0 0.0
        %2432 = vmatprep.subr.mxu0 0.0
        %2433 = vmatpush2.msra.mxu0 0.0
        %2434 = vmatprep.subr.mxu0 0.0
        %2435 = vmatpush2.msra.mxu0 0.0
        %2436 = vmatprep.subr.mxu0 0.0
        %2437 = vmatpush2.msra.mxu0 0.0
        %2438 = vmatprep.subr.mxu0 0.0
        %2439 = vmatpush2.msra.mxu0 0.0
        %2440 = vmatprep.subr.mxu0 0.0
        %2441 = vmatpush2.msra.mxu0 0.0
        %2442 = vmatprep.subr.mxu0 0.0
        %2443 = vmatpush2.msra.mxu0 0.0
        %2444 = vmatprep.subr.mxu0 0.0
        %2445 = vmatpush2.msra.mxu0 0.0
        %2446 = vmatprep.subr.mxu0 0.0
        %2447 = vmatpush2.msra.mxu0 0.0
        %2448 = vmatprep.mubr.f32.mxu0 0.0
        %2449 = vmatmul.mubr.f32.gmra.mxu0 %v1917
        %v2450 = vpop.f32.mrf.mxu0
        %v2451 = vadd.f32 %v1887, %v2450
        %v2452 = vpop.f32.mrf.mxu0
        %v2453 = vadd.f32 %v1891, %v2452
        %2454 = vmatprep.mubr.f32.mxu0 0.0
        %2455 = vmatmul.mubr.f32.gmra.mxu0 %v1920
        %v2456 = vpop.f32.mrf.mxu0
        %v2457 = vadd.f32 %v1887, %v2456
        %v2458 = vpop.f32.mrf.mxu0
        %v2459 = vadd.f32 %v1891, %v2458
        %2460 = vdwg.mxu0
        %2461 = vmatprep.subr.mxu0 0.0
        %2462 = vmatpush1.msra.mxu0 0.0
        %2463 = vmatprep.subr.mxu0 0.0
        %2464 = vmatpush1.msra.mxu0 0.0
        %2465 = vmatprep.subr.mxu0 0.0
        %2466 = vmatpush1.msra.mxu0 0.0
        %2467 = vmatprep.subr.mxu0 0.0
        %2468 = vmatpush1.msra.mxu0 0.0
        %2469 = vmatprep.subr.mxu0 0.0
        %2470 = vmatpush1.msra.mxu0 0.0
        %2471 = vmatprep.subr.mxu0 0.0
        %2472 = vmatpush1.msra.mxu0 0.0
        %2473 = vmatprep.subr.mxu0 0.0
        %2474 = vmatpush1.msra.mxu0 0.0
        %2475 = vmatprep.subr.mxu0 0.0
        %2476 = vmatpush1.msra.mxu0 0.0
        %2477 = vmatprep.subr.mxu0 0.0
        %2478 = vmatpush1.msra.mxu0 0.0
        %2479 = vmatprep.subr.mxu0 0.0
        %2480 = vmatpush1.msra.mxu0 0.0
        %2481 = vmatprep.subr.mxu0 0.0
        %2482 = vmatpush1.msra.mxu0 0.0
        %2483 = vmatprep.subr.mxu0 0.0
        %2484 = vmatpush1.msra.mxu0 0.0
        %2485 = vmatprep.subr.mxu0 %v1575
        %2486 = vmatpush1.msra.mxu0 %v1574
        %2487 = vmatprep.subr.mxu0 %v1559
        %2488 = vmatpush1.msra.mxu0 %v1558
        %2489 = vmatprep.subr.mxu0 %v1543
        %2490 = vmatpush1.msra.mxu0 %v1542
        %2491 = vmatprep.subr.mxu0 %v1527
        %2492 = vmatpush1.msra.mxu0 %v1526
        %2493 = vmatprep.subr.mxu0 0.0
        %2494 = vmatpush2.msra.mxu0 0.0
        %2495 = vmatprep.subr.mxu0 0.0
        %2496 = vmatpush2.msra.mxu0 0.0
        %2497 = vmatprep.subr.mxu0 0.0
        %2498 = vmatpush2.msra.mxu0 0.0
        %2499 = vmatprep.subr.mxu0 0.0
        %2500 = vmatpush2.msra.mxu0 0.0
        %2501 = vmatprep.subr.mxu0 0.0
        %2502 = vmatpush2.msra.mxu0 0.0
        %2503 = vmatprep.subr.mxu0 0.0
        %2504 = vmatpush2.msra.mxu0 0.0
        %2505 = vmatprep.subr.mxu0 0.0
        %2506 = vmatpush2.msra.mxu0 0.0
        %2507 = vmatprep.subr.mxu0 0.0
        %2508 = vmatpush2.msra.mxu0 0.0
        %2509 = vmatprep.subr.mxu0 0.0
        %2510 = vmatpush2.msra.mxu0 0.0
        %2511 = vmatprep.subr.mxu0 0.0
        %2512 = vmatpush2.msra.mxu0 0.0
        %2513 = vmatprep.subr.mxu0 0.0
        %2514 = vmatpush2.msra.mxu0 0.0
        %2515 = vmatprep.subr.mxu0 0.0
        %2516 = vmatpush2.msra.mxu0 0.0
        %2517 = vmatprep.subr.mxu0 0.0
        %2518 = vmatpush2.msra.mxu0 0.0
        %2519 = vmatprep.subr.mxu0 0.0
        %2520 = vmatpush2.msra.mxu0 0.0
        %2521 = vmatprep.subr.mxu0 0.0
        %2522 = vmatpush2.msra.mxu0 0.0
        %2523 = vmatprep.subr.mxu0 0.0
        %2524 = vmatpush2.msra.mxu0 0.0
        %2525 = vmatprep.mubr.f32.mxu0 0.0
        %2526 = vmatmul.mubr.f32.gmra.mxu0 %v1917
        %v2527 = vpop.f32.mrf.mxu0
        %v2528 = vadd.f32 %v1895, %v2527
        %v2529 = vpop.f32.mrf.mxu0
        %v2530 = vadd.f32 %v1899, %v2529
        %2531 = vmatprep.mubr.f32.mxu0 0.0
        %2532 = vmatmul.mubr.f32.gmra.mxu0 %v1920
        %v2533 = vpop.f32.mrf.mxu0
        %v2534 = vadd.f32 %v1895, %v2533
        %v2535 = vpop.f32.mrf.mxu0
        %v2536 = vadd.f32 %v1899, %v2535
        %2537 = vdwg.mxu0
        %v2538 = vmax.f32 %v1989, 0.0
        %v2539 = vmax.f32 %v1991, 0.0
        %v2540 = vmax.f32 %v2066, 0.0
        %v2541 = vmax.f32 %v2068, 0.0
        %v2542 = vmax.f32 %v2143, 0.0
        %v2543 = vmax.f32 %v2145, 0.0
        %v2544 = vmax.f32 %v2220, 0.0
        %v2545 = vmax.f32 %v2222, 0.0
        %v2546 = vmax.f32 %v2297, 0.0
        %v2547 = vmax.f32 %v2299, 0.0
        %v2548 = vmax.f32 %v2374, 0.0
        %v2549 = vmax.f32 %v2376, 0.0
        %v2550 = vmax.f32 %v2451, 0.0
        %v2551 = vmax.f32 %v2453, 0.0
        %v2552 = vmax.f32 %v2528, 0.0
        %v2553 = vmax.f32 %v2530, 0.0
        %v2554 = vmax.f32 %v1995, 0.0
        %v2555 = vmax.f32 %v1997, 0.0
        %v2556 = vmax.f32 %v2072, 0.0
        %v2557 = vmax.f32 %v2074, 0.0
        %v2558 = vmax.f32 %v2149, 0.0
        %v2559 = vmax.f32 %v2151, 0.0
        %v2560 = vmax.f32 %v2226, 0.0
        %v2561 = vmax.f32 %v2228, 0.0
        %v2562 = vmax.f32 %v2303, 0.0
        %v2563 = vmax.f32 %v2305, 0.0
        %v2564 = vmax.f32 %v2380, 0.0
        %v2565 = vmax.f32 %v2382, 0.0
        %v2566 = vmax.f32 %v2457, 0.0
        %v2567 = vmax.f32 %v2459, 0.0
        %v2568 = vmax.f32 %v2534, 0.0
        %v2569 = vmax.f32 %v2536, 0.0
        %v2570 = vlaneseq
        %v2571 = vshrl.u32 %v2570, 7
        %v2572 = vsub.s32 3, %v2571
        %v2573 = vrot.slane %v1118, %v2572
        %2574 = vmatprep.subr.mxu0 0.0
        %2575 = vmatpush1.msra.mxu0 %v1591
        %2576 = vmatprep.subr.mxu0 0.0
        %2577 = vmatpush1.msra.mxu0 %v1590
        %2578 = vmatprep.subr.mxu0 0.0
        %2579 = vmatpush1.msra.mxu0 %v1589
        %2580 = vmatprep.subr.mxu0 0.0
        %2581 = vmatpush1.msra.mxu0 %v1588
        %2582 = vmatprep.subr.mxu0 0.0
        %2583 = vmatpush1.msra.mxu0 %v1587
        %2584 = vmatprep.subr.mxu0 0.0
        %2585 = vmatpush1.msra.mxu0 %v1586
        %2586 = vmatprep.subr.mxu0 0.0
        %2587 = vmatpush1.msra.mxu0 %v1585
        %2588 = vmatprep.subr.mxu0 0.0
        %2589 = vmatpush1.msra.mxu0 %v1584
        %2590 = vmatprep.subr.mxu0 0.0
        %2591 = vmatpush1.msra.mxu0 %v1583
        %2592 = vmatprep.subr.mxu0 0.0
        %2593 = vmatpush1.msra.mxu0 %v1582
        %2594 = vmatprep.subr.mxu0 0.0
        %2595 = vmatpush1.msra.mxu0 %v1581
        %2596 = vmatprep.subr.mxu0 0.0
        %2597 = vmatpush1.msra.mxu0 %v1580
        %2598 = vmatprep.subr.mxu0 0.0
        %2599 = vmatpush1.msra.mxu0 %v1579
        %2600 = vmatprep.subr.mxu0 0.0
        %2601 = vmatpush1.msra.mxu0 %v1578
        %2602 = vmatprep.subr.mxu0 0.0
        %2603 = vmatpush1.msra.mxu0 %v1577
        %2604 = vmatprep.subr.mxu0 0.0
        %2605 = vmatpush1.msra.mxu0 %v1576
        %2606 = vmatprep.subr.mxu0 0.0
        %2607 = vmatpush2.msra.mxu0 %v1607
        %2608 = vmatprep.subr.mxu0 0.0
        %2609 = vmatpush2.msra.mxu0 %v1606
        %2610 = vmatprep.subr.mxu0 0.0
        %2611 = vmatpush2.msra.mxu0 %v1605
        %2612 = vmatprep.subr.mxu0 0.0
        %2613 = vmatpush2.msra.mxu0 %v1604
        %2614 = vmatprep.subr.mxu0 0.0
        %2615 = vmatpush2.msra.mxu0 %v1603
        %2616 = vmatprep.subr.mxu0 0.0
        %2617 = vmatpush2.msra.mxu0 %v1602
        %2618 = vmatprep.subr.mxu0 0.0
        %2619 = vmatpush2.msra.mxu0 %v1601
        %2620 = vmatprep.subr.mxu0 0.0
        %2621 = vmatpush2.msra.mxu0 %v1600
        %2622 = vmatprep.subr.mxu0 0.0
        %2623 = vmatpush2.msra.mxu0 %v1599
        %2624 = vmatprep.subr.mxu0 0.0
        %2625 = vmatpush2.msra.mxu0 %v1598
        %2626 = vmatprep.subr.mxu0 0.0
        %2627 = vmatpush2.msra.mxu0 %v1597
        %2628 = vmatprep.subr.mxu0 0.0
        %2629 = vmatpush2.msra.mxu0 %v1596
        %2630 = vmatprep.subr.mxu0 0.0
        %2631 = vmatpush2.msra.mxu0 %v1595
        %2632 = vmatprep.subr.mxu0 0.0
        %2633 = vmatpush2.msra.mxu0 %v1594
        %2634 = vmatprep.subr.mxu0 0.0
        %2635 = vmatpush2.msra.mxu0 %v1593
        %2636 = vmatprep.subr.mxu0 0.0
        %2637 = vmatpush2.msra.mxu0 %v1592
        %2638 = vmatprep.mubr.f32.mxu0 %v2539
        %2639 = vmatmul.mubr.f32.gmra.mxu0 %v2538
        %v2640 = vpop.f32.mrf.mxu0
        %v2641 = vadd.f32 %v2573, %v2640
        %v2642 = vpop.f32.mrf.mxu0
        %2643 = vmatprep.mubr.f32.mxu0 %v2555
        %2644 = vmatmul.mubr.f32.gmra.mxu0 %v2554
        %v2645 = vpop.f32.mrf.mxu0
        %v2646 = vadd.f32 %v2573, %v2645
        %v2647 = vpop.f32.mrf.mxu0
        %2648 = vdwg.mxu0
        %2649 = vmatprep.subr.mxu0 0.0
        %2650 = vmatpush1.msra.mxu0 %v1623
        %2651 = vmatprep.subr.mxu0 0.0
        %2652 = vmatpush1.msra.mxu0 %v1622
        %2653 = vmatprep.subr.mxu0 0.0
        %2654 = vmatpush1.msra.mxu0 %v1621
        %2655 = vmatprep.subr.mxu0 0.0
        %2656 = vmatpush1.msra.mxu0 %v1620
        %2657 = vmatprep.subr.mxu0 0.0
        %2658 = vmatpush1.msra.mxu0 %v1619
        %2659 = vmatprep.subr.mxu0 0.0
        %2660 = vmatpush1.msra.mxu0 %v1618
        %2661 = vmatprep.subr.mxu0 0.0
        %2662 = vmatpush1.msra.mxu0 %v1617
        %2663 = vmatprep.subr.mxu0 0.0
        %2664 = vmatpush1.msra.mxu0 %v1616
        %2665 = vmatprep.subr.mxu0 0.0
        %2666 = vmatpush1.msra.mxu0 %v1615
        %2667 = vmatprep.subr.mxu0 0.0
        %2668 = vmatpush1.msra.mxu0 %v1614
        %2669 = vmatprep.subr.mxu0 0.0
        %2670 = vmatpush1.msra.mxu0 %v1613
        %2671 = vmatprep.subr.mxu0 0.0
        %2672 = vmatpush1.msra.mxu0 %v1612
        %2673 = vmatprep.subr.mxu0 0.0
        %2674 = vmatpush1.msra.mxu0 %v1611
        %2675 = vmatprep.subr.mxu0 0.0
        %2676 = vmatpush1.msra.mxu0 %v1610
        %2677 = vmatprep.subr.mxu0 0.0
        %2678 = vmatpush1.msra.mxu0 %v1609
        %2679 = vmatprep.subr.mxu0 0.0
        %2680 = vmatpush1.msra.mxu0 %v1608
        %2681 = vmatprep.subr.mxu0 0.0
        %2682 = vmatpush2.msra.mxu0 %v1639
        %2683 = vmatprep.subr.mxu0 0.0
        %2684 = vmatpush2.msra.mxu0 %v1638
        %2685 = vmatprep.subr.mxu0 0.0
        %2686 = vmatpush2.msra.mxu0 %v1637
        %2687 = vmatprep.subr.mxu0 0.0
        %2688 = vmatpush2.msra.mxu0 %v1636
        %2689 = vmatprep.subr.mxu0 0.0
        %2690 = vmatpush2.msra.mxu0 %v1635
        %2691 = vmatprep.subr.mxu0 0.0
        %2692 = vmatpush2.msra.mxu0 %v1634
        %2693 = vmatprep.subr.mxu0 0.0
        %2694 = vmatpush2.msra.mxu0 %v1633
        %2695 = vmatprep.subr.mxu0 0.0
        %2696 = vmatpush2.msra.mxu0 %v1632
        %2697 = vmatprep.subr.mxu0 0.0
        %2698 = vmatpush2.msra.mxu0 %v1631
        %2699 = vmatprep.subr.mxu0 0.0
        %2700 = vmatpush2.msra.mxu0 %v1630
        %2701 = vmatprep.subr.mxu0 0.0
        %2702 = vmatpush2.msra.mxu0 %v1629
        %2703 = vmatprep.subr.mxu0 0.0
        %2704 = vmatpush2.msra.mxu0 %v1628
        %2705 = vmatprep.subr.mxu0 0.0
        %2706 = vmatpush2.msra.mxu0 %v1627
        %2707 = vmatprep.subr.mxu0 0.0
        %2708 = vmatpush2.msra.mxu0 %v1626
        %2709 = vmatprep.subr.mxu0 0.0
        %2710 = vmatpush2.msra.mxu0 %v1625
        %2711 = vmatprep.subr.mxu0 0.0
        %2712 = vmatpush2.msra.mxu0 %v1624
        %2713 = vmatprep.mubr.f32.mxu0 %v2541
        %2714 = vmatmul.mubr.f32.gmra.mxu0 %v2540
        %v2715 = vpop.f32.mrf.mxu0
        %v2716 = vadd.f32 %v2641, %v2715
        %v2717 = vpop.f32.mrf.mxu0
        %2718 = vmatprep.mubr.f32.mxu0 %v2557
        %2719 = vmatmul.mubr.f32.gmra.mxu0 %v2556
        %v2720 = vpop.f32.mrf.mxu0
        %v2721 = vadd.f32 %v2646, %v2720
        %v2722 = vpop.f32.mrf.mxu0
        %2723 = vdwg.mxu0
        %2724 = vmatprep.subr.mxu0 0.0
        %2725 = vmatpush1.msra.mxu0 %v1655
        %2726 = vmatprep.subr.mxu0 0.0
        %2727 = vmatpush1.msra.mxu0 %v1654
        %2728 = vmatprep.subr.mxu0 0.0
        %2729 = vmatpush1.msra.mxu0 %v1653
        %2730 = vmatprep.subr.mxu0 0.0
        %2731 = vmatpush1.msra.mxu0 %v1652
        %2732 = vmatprep.subr.mxu0 0.0
        %2733 = vmatpush1.msra.mxu0 %v1651
        %2734 = vmatprep.subr.mxu0 0.0
        %2735 = vmatpush1.msra.mxu0 %v1650
        %2736 = vmatprep.subr.mxu0 0.0
        %2737 = vmatpush1.msra.mxu0 %v1649
        %2738 = vmatprep.subr.mxu0 0.0
        %2739 = vmatpush1.msra.mxu0 %v1648
        %2740 = vmatprep.subr.mxu0 0.0
        %2741 = vmatpush1.msra.mxu0 %v1647
        %2742 = vmatprep.subr.mxu0 0.0
        %2743 = vmatpush1.msra.mxu0 %v1646
        %2744 = vmatprep.subr.mxu0 0.0
        %2745 = vmatpush1.msra.mxu0 %v1645
        %2746 = vmatprep.subr.mxu0 0.0
        %2747 = vmatpush1.msra.mxu0 %v1644
        %2748 = vmatprep.subr.mxu0 0.0
        %2749 = vmatpush1.msra.mxu0 %v1643
        %2750 = vmatprep.subr.mxu0 0.0
        %2751 = vmatpush1.msra.mxu0 %v1642
        %2752 = vmatprep.subr.mxu0 0.0
        %2753 = vmatpush1.msra.mxu0 %v1641
        %2754 = vmatprep.subr.mxu0 0.0
        %2755 = vmatpush1.msra.mxu0 %v1640
        %2756 = vmatprep.subr.mxu0 0.0
        %2757 = vmatpush2.msra.mxu0 %v1671
        %2758 = vmatprep.subr.mxu0 0.0
        %2759 = vmatpush2.msra.mxu0 %v1670
        %2760 = vmatprep.subr.mxu0 0.0
        %2761 = vmatpush2.msra.mxu0 %v1669
        %2762 = vmatprep.subr.mxu0 0.0
        %2763 = vmatpush2.msra.mxu0 %v1668
        %2764 = vmatprep.subr.mxu0 0.0
        %2765 = vmatpush2.msra.mxu0 %v1667
        %2766 = vmatprep.subr.mxu0 0.0
        %2767 = vmatpush2.msra.mxu0 %v1666
        %2768 = vmatprep.subr.mxu0 0.0
        %2769 = vmatpush2.msra.mxu0 %v1665
        %2770 = vmatprep.subr.mxu0 0.0
        %2771 = vmatpush2.msra.mxu0 %v1664
        %2772 = vmatprep.subr.mxu0 0.0
        %2773 = vmatpush2.msra.mxu0 %v1663
        %2774 = vmatprep.subr.mxu0 0.0
        %2775 = vmatpush2.msra.mxu0 %v1662
        %2776 = vmatprep.subr.mxu0 0.0
        %2777 = vmatpush2.msra.mxu0 %v1661
        %2778 = vmatprep.subr.mxu0 0.0
        %2779 = vmatpush2.msra.mxu0 %v1660
        %2780 = vmatprep.subr.mxu0 0.0
        %2781 = vmatpush2.msra.mxu0 %v1659
        %2782 = vmatprep.subr.mxu0 0.0
        %2783 = vmatpush2.msra.mxu0 %v1658
        %2784 = vmatprep.subr.mxu0 0.0
        %2785 = vmatpush2.msra.mxu0 %v1657
        %2786 = vmatprep.subr.mxu0 0.0
        %2787 = vmatpush2.msra.mxu0 %v1656
        %2788 = vmatprep.mubr.f32.mxu0 %v2543
        %2789 = vmatmul.mubr.f32.gmra.mxu0 %v2542
        %v2790 = vpop.f32.mrf.mxu0
        %v2791 = vadd.f32 %v2716, %v2790
        %v2792 = vpop.f32.mrf.mxu0
        %2793 = vmatprep.mubr.f32.mxu0 %v2559
        %2794 = vmatmul.mubr.f32.gmra.mxu0 %v2558
        %v2795 = vpop.f32.mrf.mxu0
        %v2796 = vadd.f32 %v2721, %v2795
        %v2797 = vpop.f32.mrf.mxu0
        %2798 = vdwg.mxu0
        %2799 = vmatprep.subr.mxu0 0.0
        %2800 = vmatpush1.msra.mxu0 %v1687
        %2801 = vmatprep.subr.mxu0 0.0
        %2802 = vmatpush1.msra.mxu0 %v1686
        %2803 = vmatprep.subr.mxu0 0.0
        %2804 = vmatpush1.msra.mxu0 %v1685
        %2805 = vmatprep.subr.mxu0 0.0
        %2806 = vmatpush1.msra.mxu0 %v1684
        %2807 = vmatprep.subr.mxu0 0.0
        %2808 = vmatpush1.msra.mxu0 %v1683
        %2809 = vmatprep.subr.mxu0 0.0
        %2810 = vmatpush1.msra.mxu0 %v1682
        %2811 = vmatprep.subr.mxu0 0.0
        %2812 = vmatpush1.msra.mxu0 %v1681
        %2813 = vmatprep.subr.mxu0 0.0
        %2814 = vmatpush1.msra.mxu0 %v1680
        %2815 = vmatprep.subr.mxu0 0.0
        %2816 = vmatpush1.msra.mxu0 %v1679
        %2817 = vmatprep.subr.mxu0 0.0
        %2818 = vmatpush1.msra.mxu0 %v1678
        %2819 = vmatprep.subr.mxu0 0.0
        %2820 = vmatpush1.msra.mxu0 %v1677
        %2821 = vmatprep.subr.mxu0 0.0
        %2822 = vmatpush1.msra.mxu0 %v1676
        %2823 = vmatprep.subr.mxu0 0.0
        %2824 = vmatpush1.msra.mxu0 %v1675
        %2825 = vmatprep.subr.mxu0 0.0
        %2826 = vmatpush1.msra.mxu0 %v1674
        %2827 = vmatprep.subr.mxu0 0.0
        %2828 = vmatpush1.msra.mxu0 %v1673
        %2829 = vmatprep.subr.mxu0 0.0
        %2830 = vmatpush1.msra.mxu0 %v1672
        %2831 = vmatprep.subr.mxu0 0.0
        %2832 = vmatpush2.msra.mxu0 %v1703
        %2833 = vmatprep.subr.mxu0 0.0
        %2834 = vmatpush2.msra.mxu0 %v1702
        %2835 = vmatprep.subr.mxu0 0.0
        %2836 = vmatpush2.msra.mxu0 %v1701
        %2837 = vmatprep.subr.mxu0 0.0
        %2838 = vmatpush2.msra.mxu0 %v1700
        %2839 = vmatprep.subr.mxu0 0.0
        %2840 = vmatpush2.msra.mxu0 %v1699
        %2841 = vmatprep.subr.mxu0 0.0
        %2842 = vmatpush2.msra.mxu0 %v1698
        %2843 = vmatprep.subr.mxu0 0.0
        %2844 = vmatpush2.msra.mxu0 %v1697
        %2845 = vmatprep.subr.mxu0 0.0
        %2846 = vmatpush2.msra.mxu0 %v1696
        %2847 = vmatprep.subr.mxu0 0.0
        %2848 = vmatpush2.msra.mxu0 %v1695
        %2849 = vmatprep.subr.mxu0 0.0
        %2850 = vmatpush2.msra.mxu0 %v1694
        %2851 = vmatprep.subr.mxu0 0.0
        %2852 = vmatpush2.msra.mxu0 %v1693
        %2853 = vmatprep.subr.mxu0 0.0
        %2854 = vmatpush2.msra.mxu0 %v1692
        %2855 = vmatprep.subr.mxu0 0.0
        %2856 = vmatpush2.msra.mxu0 %v1691
        %2857 = vmatprep.subr.mxu0 0.0
        %2858 = vmatpush2.msra.mxu0 %v1690
        %2859 = vmatprep.subr.mxu0 0.0
        %2860 = vmatpush2.msra.mxu0 %v1689
        %2861 = vmatprep.subr.mxu0 0.0
        %2862 = vmatpush2.msra.mxu0 %v1688
        %2863 = vmatprep.mubr.f32.mxu0 %v2545
        %2864 = vmatmul.mubr.f32.gmra.mxu0 %v2544
        %v2865 = vpop.f32.mrf.mxu0
        %v2866 = vadd.f32 %v2791, %v2865
        %v2867 = vpop.f32.mrf.mxu0
        %2868 = vmatprep.mubr.f32.mxu0 %v2561
        %2869 = vmatmul.mubr.f32.gmra.mxu0 %v2560
        %v2870 = vpop.f32.mrf.mxu0
        %v2871 = vadd.f32 %v2796, %v2870
        %v2872 = vpop.f32.mrf.mxu0
        %2873 = vdwg.mxu0
        %2874 = vmatprep.subr.mxu0 0.0
        %2875 = vmatpush1.msra.mxu0 %v1719
        %2876 = vmatprep.subr.mxu0 0.0
        %2877 = vmatpush1.msra.mxu0 %v1718
        %2878 = vmatprep.subr.mxu0 0.0
        %2879 = vmatpush1.msra.mxu0 %v1717
        %2880 = vmatprep.subr.mxu0 0.0
        %2881 = vmatpush1.msra.mxu0 %v1716
        %2882 = vmatprep.subr.mxu0 0.0
        %2883 = vmatpush1.msra.mxu0 %v1715
        %2884 = vmatprep.subr.mxu0 0.0
        %2885 = vmatpush1.msra.mxu0 %v1714
        %2886 = vmatprep.subr.mxu0 0.0
        %2887 = vmatpush1.msra.mxu0 %v1713
        %2888 = vmatprep.subr.mxu0 0.0
        %2889 = vmatpush1.msra.mxu0 %v1712
        %2890 = vmatprep.subr.mxu0 0.0
        %2891 = vmatpush1.msra.mxu0 %v1711
        %2892 = vmatprep.subr.mxu0 0.0
        %2893 = vmatpush1.msra.mxu0 %v1710
        %2894 = vmatprep.subr.mxu0 0.0
        %2895 = vmatpush1.msra.mxu0 %v1709
        %2896 = vmatprep.subr.mxu0 0.0
        %2897 = vmatpush1.msra.mxu0 %v1708
        %2898 = vmatprep.subr.mxu0 0.0
        %2899 = vmatpush1.msra.mxu0 %v1707
        %2900 = vmatprep.subr.mxu0 0.0
        %2901 = vmatpush1.msra.mxu0 %v1706
        %2902 = vmatprep.subr.mxu0 0.0
        %2903 = vmatpush1.msra.mxu0 %v1705
        %2904 = vmatprep.subr.mxu0 0.0
        %2905 = vmatpush1.msra.mxu0 %v1704
        %2906 = vmatprep.subr.mxu0 0.0
        %2907 = vmatpush2.msra.mxu0 %v1735
        %2908 = vmatprep.subr.mxu0 0.0
        %2909 = vmatpush2.msra.mxu0 %v1734
        %2910 = vmatprep.subr.mxu0 0.0
        %2911 = vmatpush2.msra.mxu0 %v1733
        %2912 = vmatprep.subr.mxu0 0.0
        %2913 = vmatpush2.msra.mxu0 %v1732
        %2914 = vmatprep.subr.mxu0 0.0
        %2915 = vmatpush2.msra.mxu0 %v1731
        %2916 = vmatprep.subr.mxu0 0.0
        %2917 = vmatpush2.msra.mxu0 %v1730
        %2918 = vmatprep.subr.mxu0 0.0
        %2919 = vmatpush2.msra.mxu0 %v1729
        %2920 = vmatprep.subr.mxu0 0.0
        %2921 = vmatpush2.msra.mxu0 %v1728
        %2922 = vmatprep.subr.mxu0 0.0
        %2923 = vmatpush2.msra.mxu0 %v1727
        %2924 = vmatprep.subr.mxu0 0.0
        %2925 = vmatpush2.msra.mxu0 %v1726
        %2926 = vmatprep.subr.mxu0 0.0
        %2927 = vmatpush2.msra.mxu0 %v1725
        %2928 = vmatprep.subr.mxu0 0.0
        %2929 = vmatpush2.msra.mxu0 %v1724
        %2930 = vmatprep.subr.mxu0 0.0
        %2931 = vmatpush2.msra.mxu0 %v1723
        %2932 = vmatprep.subr.mxu0 0.0
        %2933 = vmatpush2.msra.mxu0 %v1722
        %2934 = vmatprep.subr.mxu0 0.0
        %2935 = vmatpush2.msra.mxu0 %v1721
        %2936 = vmatprep.subr.mxu0 0.0
        %2937 = vmatpush2.msra.mxu0 %v1720
        %2938 = vmatprep.mubr.f32.mxu0 %v2547
        %2939 = vmatmul.mubr.f32.gmra.mxu0 %v2546
        %v2940 = vpop.f32.mrf.mxu0
        %v2941 = vadd.f32 %v2866, %v2940
        %v2942 = vpop.f32.mrf.mxu0
        %2943 = vmatprep.mubr.f32.mxu0 %v2563
        %2944 = vmatmul.mubr.f32.gmra.mxu0 %v2562
        %v2945 = vpop.f32.mrf.mxu0
        %v2946 = vadd.f32 %v2871, %v2945
        %v2947 = vpop.f32.mrf.mxu0
        %2948 = vdwg.mxu0
        %2949 = vmatprep.subr.mxu0 0.0
        %2950 = vmatpush1.msra.mxu0 %v1751
        %2951 = vmatprep.subr.mxu0 0.0
        %2952 = vmatpush1.msra.mxu0 %v1750
        %2953 = vmatprep.subr.mxu0 0.0
        %2954 = vmatpush1.msra.mxu0 %v1749
        %2955 = vmatprep.subr.mxu0 0.0
        %2956 = vmatpush1.msra.mxu0 %v1748
        %2957 = vmatprep.subr.mxu0 0.0
        %2958 = vmatpush1.msra.mxu0 %v1747
        %2959 = vmatprep.subr.mxu0 0.0
        %2960 = vmatpush1.msra.mxu0 %v1746
        %2961 = vmatprep.subr.mxu0 0.0
        %2962 = vmatpush1.msra.mxu0 %v1745
        %2963 = vmatprep.subr.mxu0 0.0
        %2964 = vmatpush1.msra.mxu0 %v1744
        %2965 = vmatprep.subr.mxu0 0.0
        %2966 = vmatpush1.msra.mxu0 %v1743
        %2967 = vmatprep.subr.mxu0 0.0
        %2968 = vmatpush1.msra.mxu0 %v1742
        %2969 = vmatprep.subr.mxu0 0.0
        %2970 = vmatpush1.msra.mxu0 %v1741
        %2971 = vmatprep.subr.mxu0 0.0
        %2972 = vmatpush1.msra.mxu0 %v1740
        %2973 = vmatprep.subr.mxu0 0.0
        %2974 = vmatpush1.msra.mxu0 %v1739
        %2975 = vmatprep.subr.mxu0 0.0
        %2976 = vmatpush1.msra.mxu0 %v1738
        %2977 = vmatprep.subr.mxu0 0.0
        %2978 = vmatpush1.msra.mxu0 %v1737
        %2979 = vmatprep.subr.mxu0 0.0
        %2980 = vmatpush1.msra.mxu0 %v1736
        %2981 = vmatprep.subr.mxu0 0.0
        %2982 = vmatpush2.msra.mxu0 %v1767
        %2983 = vmatprep.subr.mxu0 0.0
        %2984 = vmatpush2.msra.mxu0 %v1766
        %2985 = vmatprep.subr.mxu0 0.0
        %2986 = vmatpush2.msra.mxu0 %v1765
        %2987 = vmatprep.subr.mxu0 0.0
        %2988 = vmatpush2.msra.mxu0 %v1764
        %2989 = vmatprep.subr.mxu0 0.0
        %2990 = vmatpush2.msra.mxu0 %v1763
        %2991 = vmatprep.subr.mxu0 0.0
        %2992 = vmatpush2.msra.mxu0 %v1762
        %2993 = vmatprep.subr.mxu0 0.0
        %2994 = vmatpush2.msra.mxu0 %v1761
        %2995 = vmatprep.subr.mxu0 0.0
        %2996 = vmatpush2.msra.mxu0 %v1760
        %2997 = vmatprep.subr.mxu0 0.0
        %2998 = vmatpush2.msra.mxu0 %v1759
        %2999 = vmatprep.subr.mxu0 0.0
        %3000 = vmatpush2.msra.mxu0 %v1758
        %3001 = vmatprep.subr.mxu0 0.0
        %3002 = vmatpush2.msra.mxu0 %v1757
        %3003 = vmatprep.subr.mxu0 0.0
        %3004 = vmatpush2.msra.mxu0 %v1756
        %3005 = vmatprep.subr.mxu0 0.0
        %3006 = vmatpush2.msra.mxu0 %v1755
        %3007 = vmatprep.subr.mxu0 0.0
        %3008 = vmatpush2.msra.mxu0 %v1754
        %3009 = vmatprep.subr.mxu0 0.0
        %3010 = vmatpush2.msra.mxu0 %v1753
        %3011 = vmatprep.subr.mxu0 0.0
        %3012 = vmatpush2.msra.mxu0 %v1752
        %3013 = vmatprep.mubr.f32.mxu0 %v2549
        %3014 = vmatmul.mubr.f32.gmra.mxu0 %v2548
        %v3015 = vpop.f32.mrf.mxu0
        %v3016 = vadd.f32 %v2941, %v3015
        %v3017 = vpop.f32.mrf.mxu0
        %3018 = vmatprep.mubr.f32.mxu0 %v2565
        %3019 = vmatmul.mubr.f32.gmra.mxu0 %v2564
        %v3020 = vpop.f32.mrf.mxu0
        %v3021 = vadd.f32 %v2946, %v3020
        %v3022 = vpop.f32.mrf.mxu0
        %3023 = vdwg.mxu0
        %3024 = vmatprep.subr.mxu0 0.0
        %3025 = vmatpush1.msra.mxu0 %v1783
        %3026 = vmatprep.subr.mxu0 0.0
        %3027 = vmatpush1.msra.mxu0 %v1782
        %3028 = vmatprep.subr.mxu0 0.0
        %3029 = vmatpush1.msra.mxu0 %v1781
        %3030 = vmatprep.subr.mxu0 0.0
        %3031 = vmatpush1.msra.mxu0 %v1780
        %3032 = vmatprep.subr.mxu0 0.0
        %3033 = vmatpush1.msra.mxu0 %v1779
        %3034 = vmatprep.subr.mxu0 0.0
        %3035 = vmatpush1.msra.mxu0 %v1778
        %3036 = vmatprep.subr.mxu0 0.0
        %3037 = vmatpush1.msra.mxu0 %v1777
        %3038 = vmatprep.subr.mxu0 0.0
        %3039 = vmatpush1.msra.mxu0 %v1776
        %3040 = vmatprep.subr.mxu0 0.0
        %3041 = vmatpush1.msra.mxu0 %v1775
        %3042 = vmatprep.subr.mxu0 0.0
        %3043 = vmatpush1.msra.mxu0 %v1774
        %3044 = vmatprep.subr.mxu0 0.0
        %3045 = vmatpush1.msra.mxu0 %v1773
        %3046 = vmatprep.subr.mxu0 0.0
        %3047 = vmatpush1.msra.mxu0 %v1772
        %3048 = vmatprep.subr.mxu0 0.0
        %3049 = vmatpush1.msra.mxu0 %v1771
        %3050 = vmatprep.subr.mxu0 0.0
        %3051 = vmatpush1.msra.mxu0 %v1770
        %3052 = vmatprep.subr.mxu0 0.0
        %3053 = vmatpush1.msra.mxu0 %v1769
        %3054 = vmatprep.subr.mxu0 0.0
        %3055 = vmatpush1.msra.mxu0 %v1768
        %3056 = vmatprep.subr.mxu0 0.0
        %3057 = vmatpush2.msra.mxu0 %v1799
        %3058 = vmatprep.subr.mxu0 0.0
        %3059 = vmatpush2.msra.mxu0 %v1798
        %3060 = vmatprep.subr.mxu0 0.0
        %3061 = vmatpush2.msra.mxu0 %v1797
        %3062 = vmatprep.subr.mxu0 0.0
        %3063 = vmatpush2.msra.mxu0 %v1796
        %3064 = vmatprep.subr.mxu0 0.0
        %3065 = vmatpush2.msra.mxu0 %v1795
        %3066 = vmatprep.subr.mxu0 0.0
        %3067 = vmatpush2.msra.mxu0 %v1794
        %3068 = vmatprep.subr.mxu0 0.0
        %3069 = vmatpush2.msra.mxu0 %v1793
        %3070 = vmatprep.subr.mxu0 0.0
        %3071 = vmatpush2.msra.mxu0 %v1792
        %3072 = vmatprep.subr.mxu0 0.0
        %3073 = vmatpush2.msra.mxu0 %v1791
        %3074 = vmatprep.subr.mxu0 0.0
        %3075 = vmatpush2.msra.mxu0 %v1790
        %3076 = vmatprep.subr.mxu0 0.0
        %3077 = vmatpush2.msra.mxu0 %v1789
        %3078 = vmatprep.subr.mxu0 0.0
        %3079 = vmatpush2.msra.mxu0 %v1788
        %3080 = vmatprep.subr.mxu0 0.0
        %3081 = vmatpush2.msra.mxu0 %v1787
        %3082 = vmatprep.subr.mxu0 0.0
        %3083 = vmatpush2.msra.mxu0 %v1786
        %3084 = vmatprep.subr.mxu0 0.0
        %3085 = vmatpush2.msra.mxu0 %v1785
        %3086 = vmatprep.subr.mxu0 0.0
        %3087 = vmatpush2.msra.mxu0 %v1784
        %3088 = vmatprep.mubr.f32.mxu0 %v2551
        %3089 = vmatmul.mubr.f32.gmra.mxu0 %v2550
        %v3090 = vpop.f32.mrf.mxu0
        %v3091 = vadd.f32 %v3016, %v3090
        %v3092 = vpop.f32.mrf.mxu0
        %3093 = vmatprep.mubr.f32.mxu0 %v2567
        %3094 = vmatmul.mubr.f32.gmra.mxu0 %v2566
        %v3095 = vpop.f32.mrf.mxu0
        %v3096 = vadd.f32 %v3021, %v3095
        %v3097 = vpop.f32.mrf.mxu0
        %3098 = vdwg.mxu0
        %3099 = vmatprep.subr.mxu0 0.0
        %3100 = vmatpush1.msra.mxu0 %v1815
        %3101 = vmatprep.subr.mxu0 0.0
        %3102 = vmatpush1.msra.mxu0 %v1814
        %3103 = vmatprep.subr.mxu0 0.0
        %3104 = vmatpush1.msra.mxu0 %v1813
        %3105 = vmatprep.subr.mxu0 0.0
        %3106 = vmatpush1.msra.mxu0 %v1812
        %3107 = vmatprep.subr.mxu0 0.0
        %3108 = vmatpush1.msra.mxu0 %v1811
        %3109 = vmatprep.subr.mxu0 0.0
        %3110 = vmatpush1.msra.mxu0 %v1810
        %3111 = vmatprep.subr.mxu0 0.0
        %3112 = vmatpush1.msra.mxu0 %v1809
        %3113 = vmatprep.subr.mxu0 0.0
        %3114 = vmatpush1.msra.mxu0 %v1808
        %3115 = vmatprep.subr.mxu0 0.0
        %3116 = vmatpush1.msra.mxu0 %v1807
        %3117 = vmatprep.subr.mxu0 0.0
        %3118 = vmatpush1.msra.mxu0 %v1806
        %3119 = vmatprep.subr.mxu0 0.0
        %3120 = vmatpush1.msra.mxu0 %v1805
        %3121 = vmatprep.subr.mxu0 0.0
        %3122 = vmatpush1.msra.mxu0 %v1804
        %3123 = vmatprep.subr.mxu0 0.0
        %3124 = vmatpush1.msra.mxu0 %v1803
        %3125 = vmatprep.subr.mxu0 0.0
        %3126 = vmatpush1.msra.mxu0 %v1802
        %3127 = vmatprep.subr.mxu0 0.0
        %3128 = vmatpush1.msra.mxu0 %v1801
        %3129 = vmatprep.subr.mxu0 0.0
        %3130 = vmatpush1.msra.mxu0 %v1800
        %3131 = vmatprep.subr.mxu0 0.0
        %3132 = vmatpush2.msra.mxu0 %v1831
        %3133 = vmatprep.subr.mxu0 0.0
        %3134 = vmatpush2.msra.mxu0 %v1830
        %3135 = vmatprep.subr.mxu0 0.0
        %3136 = vmatpush2.msra.mxu0 %v1829
        %3137 = vmatprep.subr.mxu0 0.0
        %3138 = vmatpush2.msra.mxu0 %v1828
        %3139 = vmatprep.subr.mxu0 0.0
        %3140 = vmatpush2.msra.mxu0 %v1827
        %3141 = vmatprep.subr.mxu0 0.0
        %3142 = vmatpush2.msra.mxu0 %v1826
        %3143 = vmatprep.subr.mxu0 0.0
        %3144 = vmatpush2.msra.mxu0 %v1825
        %3145 = vmatprep.subr.mxu0 0.0
        %3146 = vmatpush2.msra.mxu0 %v1824
        %3147 = vmatprep.subr.mxu0 0.0
        %3148 = vmatpush2.msra.mxu0 %v1823
        %3149 = vmatprep.subr.mxu0 0.0
        %3150 = vmatpush2.msra.mxu0 %v1822
        %3151 = vmatprep.subr.mxu0 0.0
        %3152 = vmatpush2.msra.mxu0 %v1821
        %3153 = vmatprep.subr.mxu0 0.0
        %3154 = vmatpush2.msra.mxu0 %v1820
        %3155 = vmatprep.subr.mxu0 0.0
        %3156 = vmatpush2.msra.mxu0 %v1819
        %3157 = vmatprep.subr.mxu0 0.0
        %3158 = vmatpush2.msra.mxu0 %v1818
        %3159 = vmatprep.subr.mxu0 0.0
        %3160 = vmatpush2.msra.mxu0 %v1817
        %3161 = vmatprep.subr.mxu0 0.0
        %3162 = vmatpush2.msra.mxu0 %v1816
        %3163 = vmatprep.mubr.f32.mxu0 %v2553
        %3164 = vmatmul.mubr.f32.gmra.mxu0 %v2552
        %v3165 = vpop.f32.mrf.mxu0
        %v3166 = vadd.f32 %v3091, %v3165
        %v3167 = vpop.f32.mrf.mxu0
        %3168 = vmatprep.mubr.f32.mxu0 %v2569
        %3169 = vmatmul.mubr.f32.gmra.mxu0 %v2568
        %v3170 = vpop.f32.mrf.mxu0
        %v3171 = vadd.f32 %v3096, %v3170
        %v3172 = vpop.f32.mrf.mxu0
        %3173 = vdwg.mxu0
        %v3174 = vadd.f32 %v1510, %v3166
        %v3175 = vadd.f32 %v1511, %v3171
        %v3176 = vsel %vm829, %v3174, 0.0
        %3177 = vadd.xlane.f32.xlu0 %v3176
        %v3178 = vpop.xlane.xlu0 %3177
        %v3179 = vsel %vm829, %v3175, 0.0
        %3180 = vadd.xlane.f32.xlu0 %v3179
        %v3181 = vpop.xlane.xlu0 %3180
        %v3182 = vmul.f32 %v3178, %v1479
        %v3183 = vmul.f32 %v3181, %v1479
        %v3184 = vsub.f32 %v3174, %v3182
        %v3185 = vsub.f32 %v3175, %v3183
        %v3186 = vmul.f32 %v3184, %v3184
        %v3187 = vmul.f32 %v3185, %v3185
        %v3188 = vsel %vm829, %v3186, 0.0
        %3189 = vadd.xlane.f32.xlu0 %v3188
        %v3190 = vpop.xlane.xlu0 %3189
        %v3191 = vsel %vm829, %v3187, 0.0
        %3192 = vadd.xlane.f32.xlu0 %v3191
        %v3193 = vpop.xlane.xlu0 %3192
        %v3194 = vmul.f32 %v3190, %v1479
        %v3195 = vmul.f32 %v3193, %v1479
        %v3196 = vadd.f32 %v3194, 1e-05
        %v3197 = vadd.f32 %v3195, 1e-05
        %v3198 = vrsqrt.pop %v3196
        %v3199 = vrsqrt.pop %v3197
        %v3200 = vmul.f32 %v3184, %v3198
        %v3201 = vmul.f32 %v3185, %v3199
        %v3202 = vlaneseq
        %v3203 = vshrl.u32 %v3202, 7
        %v3204 = vsub.s32 4, %v3203
        %v3205 = vrot.slane %v1118, %v3204
        %v3206 = vmul.f32 %v3200, %v3205
        %v3207 = vmul.f32 %v3201, %v3205
        %v3208 = vlaneseq
        %v3209 = vshrl.u32 %v3208, 7
        %v3210 = vsub.s32 5, %v3209
        %v3211 = vrot.slane %v1118, %v3210
        %v3212 = vadd.f32 %v3206, %v3211
        %v3213 = vadd.f32 %v3207, %v3211
        %3214 = vst.msk [vmem:[#allocation2] sm:$0xff] %vm829, %v3212
        %3215 = vst.msk [vmem:[#allocation2 + $0x8] sm:$0xff] %vm829, %v3213
        %p3216 = scmp.eq.s32.totalorder %s34, 2
        // Predicated region
        $region105: #{attn_a2c_forward.1} parent=99 // pred_check
          %p3217 = pneg %p3216
        $region106: #{attn_a2c_forward.1} parent=99 // pred_check_branch
          %3219 = sbr.rel (%p3217) target = $region108
        $region107: #{attn_a2c_forward.1} parent=99 // pred_region
          %v3220 = vlaneseq
          %v3221 = vshrl.u32 %v3220, 7
          %v3222 = vlaneseq
          %v3223 = vand.u32 %v3222, 127
          %v3224 = vmul.u32 %v3221, 8
          %v3225 = vadd.s32 %v3224, 7
          %vm3226 = vcmp.eq.s32.totalorder %v3223, %v3225
          %v3227 = vsel %vm3226, 1, 0
          %v3228 = vcvt.s32.f32 %v3227
          %v3230 = vsel %vm1219, %v3228, 0
          %3232 = vmatprep.subr.mxu0 0.0
          %3233 = vmatpush1.msra.mxu0 0.0
          %3234 = vmatprep.subr.mxu0 0.0
          %3235 = vmatpush1.msra.mxu0 0.0
          %3236 = vmatprep.subr.mxu0 0.0
          %3237 = vmatpush1.msra.mxu0 0.0
          %3238 = vmatprep.subr.mxu0 0.0
          %3239 = vmatpush1.msra.mxu0 0.0
          %3240 = vmatprep.subr.mxu0 0.0
          %3241 = vmatpush1.msra.mxu0 0.0
          %3242 = vmatprep.subr.mxu0 0.0
          %3243 = vmatpush1.msra.mxu0 0.0
          %3244 = vmatprep.subr.mxu0 0.0
          %3245 = vmatpush1.msra.mxu0 0.0
          %3246 = vmatprep.subr.mxu0 0.0
          %3247 = vmatpush1.msra.mxu0 0.0
          %3248 = vmatprep.subr.mxu0 0.0
          %3249 = vmatpush1.msra.mxu0 0.0
          %3250 = vmatprep.subr.mxu0 0.0
          %3251 = vmatpush1.msra.mxu0 0.0
          %3252 = vmatprep.subr.mxu0 0.0
          %3253 = vmatpush1.msra.mxu0 0.0
          %3254 = vmatprep.subr.mxu0 0.0
          %3255 = vmatpush1.msra.mxu0 0.0
          %3256 = vmatprep.subr.mxu0 0.0
          %3257 = vmatpush1.msra.mxu0 0.0
          %3258 = vmatprep.subr.mxu0 0.0
          %3259 = vmatpush1.msra.mxu0 0.0
          %3260 = vmatprep.subr.mxu0 0.0
          %3261 = vmatpush1.msra.mxu0 %v3213
          %3262 = vmatprep.subr.mxu0 0.0
          %3263 = vmatpush1.msra.mxu0 %v3212
          %3264 = vmatprep.subr.mxu0 0.0
          %3265 = vmatpush2.msra.mxu0 0.0
          %3266 = vmatprep.subr.mxu0 0.0
          %3267 = vmatpush2.msra.mxu0 0.0
          %3268 = vmatprep.subr.mxu0 0.0
          %3269 = vmatpush2.msra.mxu0 0.0
          %3270 = vmatprep.subr.mxu0 0.0
          %3271 = vmatpush2.msra.mxu0 0.0
          %3272 = vmatprep.subr.mxu0 0.0
          %3273 = vmatpush2.msra.mxu0 0.0
          %3274 = vmatprep.subr.mxu0 0.0
          %3275 = vmatpush2.msra.mxu0 0.0
          %3276 = vmatprep.subr.mxu0 0.0
          %3277 = vmatpush2.msra.mxu0 0.0
          %3278 = vmatprep.subr.mxu0 0.0
          %3279 = vmatpush2.msra.mxu0 0.0
          %3280 = vmatprep.subr.mxu0 0.0
          %3281 = vmatpush2.msra.mxu0 0.0
          %3282 = vmatprep.subr.mxu0 0.0
          %3283 = vmatpush2.msra.mxu0 0.0
          %3284 = vmatprep.subr.mxu0 0.0
          %3285 = vmatpush2.msra.mxu0 0.0
          %3286 = vmatprep.subr.mxu0 0.0
          %3287 = vmatpush2.msra.mxu0 0.0
          %3288 = vmatprep.subr.mxu0 0.0
          %3289 = vmatpush2.msra.mxu0 0.0
          %3290 = vmatprep.subr.mxu0 0.0
          %3291 = vmatpush2.msra.mxu0 0.0
          %3292 = vmatprep.subr.mxu0 0.0
          %3293 = vmatpush2.msra.mxu0 0.0
          %3294 = vmatprep.subr.mxu0 0.0
          %3295 = vmatpush2.msra.mxu0 0.0
          %3296 = vmatprep.mubr.f32.mxu0 0.0
          %3297 = vmatmul.mubr.f32.gmra.mxu0 %v3230
          %v3298 = vpop.f32.mrf.mxu0
          %v3299 = vadd.f32 0.0, %v3298
          %v3300 = vpop.f32.mrf.mxu0
          %3301 = vdwg.mxu0
          %v3302 = vld [vmem:[%s1] sm:$0x3]
          %v3303 = vld [vmem:[%s2] sm:$0x3]
          %v3304 = vld [vmem:[%s19] sm:$0x3f]
          %v3305 = vld [vmem:[%s13] sm:$0xff]
          %v3306 = vld [vmem:[%s13 + $0x8] sm:$0xff]
          %v3307 = vld [vmem:[%s13 + $0x10] sm:$0xff]
          %v3308 = vld [vmem:[%s13 + $0x18] sm:$0xff]
          %v3309 = vld [vmem:[%s14] sm:$0xff]
          %v3310 = vld [vmem:[%s14 + $0x8] sm:$0xff]
          %v3311 = vld [vmem:[%s14 + $0x10] sm:$0xff]
          %v3312 = vld [vmem:[%s14 + $0x18] sm:$0xff]
          %v3313 = vld [vmem:[%s14 + $0x20] sm:$0xff]
          %v3314 = vld [vmem:[%s14 + $0x28] sm:$0xff]
          %v3315 = vld [vmem:[%s14 + $0x30] sm:$0xff]
          %v3316 = vld [vmem:[%s14 + $0x38] sm:$0xff]
          %v3317 = vld [vmem:[%s14 + $0x40] sm:$0xff]
          %v3318 = vld [vmem:[%s14 + $0x48] sm:$0xff]
          %v3319 = vld [vmem:[%s14 + $0x50] sm:$0xff]
          %v3320 = vld [vmem:[%s14 + $0x58] sm:$0xff]
          %v3321 = vld [vmem:[%s14 + $0x60] sm:$0xff]
          %v3322 = vld [vmem:[%s14 + $0x68] sm:$0xff]
          %v3323 = vld [vmem:[%s14 + $0x70] sm:$0xff]
          %v3324 = vld [vmem:[%s14 + $0x78] sm:$0xff]
          %v3325 = vld [vmem:[%s15] sm:$0xff]
          %v3326 = vld [vmem:[%s15 + $0x8] sm:$0xff]
          %v3327 = vld [vmem:[%s15 + $0x10] sm:$0xff]
          %v3328 = vld [vmem:[%s15 + $0x18] sm:$0xff]
          %v3329 = vld [vmem:[%s16] sm:$0xff]
          %v3330 = vld [vmem:[%s16 + $0x8] sm:$0xff]
          %v3331 = vld [vmem:[%s16 + $0x10] sm:$0xff]
          %v3332 = vld [vmem:[%s16 + $0x18] sm:$0xff]
          %v3333 = vld [vmem:[%s16 + $0x20] sm:$0xff]
          %v3334 = vld [vmem:[%s17] sm:$0xff]
          %v3335 = vld [vmem:[%s17 + $0x8] sm:$0xff]
          %v3336 = vld [vmem:[%s17 + $0x10] sm:$0xff]
          %v3337 = vld [vmem:[%s17 + $0x18] sm:$0xff]
          %v3338 = vld [vmem:[%s17 + $0x20] sm:$0xff]
          %v3339 = vld [vmem:[%s17 + $0x28] sm:$0xff]
          %v3340 = vld [vmem:[%s17 + $0x30] sm:$0xff]
          %v3341 = vld [vmem:[%s17 + $0x38] sm:$0xff]
          %v3342 = vld [vmem:[%s18] sm:$0xff]
          %v3343 = vlaneseq
          %v3344 = vshrl.u32 %v3343, 7
          %v3345 = vsub.s32 0, %v3344
          %v3346 = vrot.slane %v3304, %v3345
          %v3348 = vsel %vm829, %v3299, 0
          %3350 = vmatprep.subr.mxu0 0.0
          %3351 = vmatpush1.msra.mxu0 0.0
          %3352 = vmatprep.subr.mxu0 0.0
          %3353 = vmatpush1.msra.mxu0 0.0
          %3354 = vmatprep.subr.mxu0 0.0
          %3355 = vmatpush1.msra.mxu0 0.0
          %3356 = vmatprep.subr.mxu0 0.0
          %3357 = vmatpush1.msra.mxu0 0.0
          %3358 = vmatprep.subr.mxu0 0.0
          %3359 = vmatpush1.msra.mxu0 0.0
          %3360 = vmatprep.subr.mxu0 0.0
          %3361 = vmatpush1.msra.mxu0 0.0
          %3362 = vmatprep.subr.mxu0 0.0
          %3363 = vmatpush1.msra.mxu0 0.0
          %3364 = vmatprep.subr.mxu0 0.0
          %3365 = vmatpush1.msra.mxu0 0.0
          %3366 = vmatprep.subr.mxu0 0.0
          %3367 = vmatpush1.msra.mxu0 0.0
          %3368 = vmatprep.subr.mxu0 0.0
          %3369 = vmatpush1.msra.mxu0 0.0
          %3370 = vmatprep.subr.mxu0 0.0
          %3371 = vmatpush1.msra.mxu0 0.0
          %3372 = vmatprep.subr.mxu0 0.0
          %3373 = vmatpush1.msra.mxu0 0.0
          %3374 = vmatprep.subr.mxu0 0.0
          %3375 = vmatpush1.msra.mxu0 %v3308
          %3376 = vmatprep.subr.mxu0 0.0
          %3377 = vmatpush1.msra.mxu0 %v3307
          %3378 = vmatprep.subr.mxu0 0.0
          %3379 = vmatpush1.msra.mxu0 %v3306
          %3380 = vmatprep.subr.mxu0 0.0
          %3381 = vmatpush1.msra.mxu0 %v3305
          %3382 = vmatprep.subr.mxu0 0.0
          %3383 = vmatpush2.msra.mxu0 0.0
          %3384 = vmatprep.subr.mxu0 0.0
          %3385 = vmatpush2.msra.mxu0 0.0
          %3386 = vmatprep.subr.mxu0 0.0
          %3387 = vmatpush2.msra.mxu0 0.0
          %3388 = vmatprep.subr.mxu0 0.0
          %3389 = vmatpush2.msra.mxu0 0.0
          %3390 = vmatprep.subr.mxu0 0.0
          %3391 = vmatpush2.msra.mxu0 0.0
          %3392 = vmatprep.subr.mxu0 0.0
          %3393 = vmatpush2.msra.mxu0 0.0
          %3394 = vmatprep.subr.mxu0 0.0
          %3395 = vmatpush2.msra.mxu0 0.0
          %3396 = vmatprep.subr.mxu0 0.0
          %3397 = vmatpush2.msra.mxu0 0.0
          %3398 = vmatprep.subr.mxu0 0.0
          %3399 = vmatpush2.msra.mxu0 0.0
          %3400 = vmatprep.subr.mxu0 0.0
          %3401 = vmatpush2.msra.mxu0 0.0
          %3402 = vmatprep.subr.mxu0 0.0
          %3403 = vmatpush2.msra.mxu0 0.0
          %3404 = vmatprep.subr.mxu0 0.0
          %3405 = vmatpush2.msra.mxu0 0.0
          %3406 = vmatprep.subr.mxu0 0.0
          %3407 = vmatpush2.msra.mxu0 0.0
          %3408 = vmatprep.subr.mxu0 0.0
          %3409 = vmatpush2.msra.mxu0 0.0
          %3410 = vmatprep.subr.mxu0 0.0
          %3411 = vmatpush2.msra.mxu0 0.0
          %3412 = vmatprep.subr.mxu0 0.0
          %3413 = vmatpush2.msra.mxu0 0.0
          %3414 = vmatprep.mubr.f32.mxu0 0.0
          %3415 = vmatmul.mubr.f32.gmra.mxu0 %v3348
          %v3416 = vpop.f32.mrf.mxu0
          %v3417 = vadd.f32 %v3346, %v3416
          %v3418 = vpop.f32.mrf.mxu0
          %3419 = vdwg.mxu0
          %v3420 = vmul.f32 %v3417, 0.01
          %v3421 = vmax.f32 %v3417, %v3420
          %v3422 = vlaneseq
          %v3423 = vshrl.u32 %v3422, 7
          %v3424 = vsub.s32 1, %v3423
          %v3425 = vrot.slane %v3304, %v3424
          %3426 = vmatprep.subr.mxu0 0.0
          %3427 = vmatpush1.msra.mxu0 %v3324
          %3428 = vmatprep.subr.mxu0 0.0
          %3429 = vmatpush1.msra.mxu0 %v3323
          %3430 = vmatprep.subr.mxu0 0.0
          %3431 = vmatpush1.msra.mxu0 %v3322
          %3432 = vmatprep.subr.mxu0 0.0
          %3433 = vmatpush1.msra.mxu0 %v3321
          %3434 = vmatprep.subr.mxu0 0.0
          %3435 = vmatpush1.msra.mxu0 %v3320
          %3436 = vmatprep.subr.mxu0 0.0
          %3437 = vmatpush1.msra.mxu0 %v3319
          %3438 = vmatprep.subr.mxu0 0.0
          %3439 = vmatpush1.msra.mxu0 %v3318
          %3440 = vmatprep.subr.mxu0 0.0
          %3441 = vmatpush1.msra.mxu0 %v3317
          %3442 = vmatprep.subr.mxu0 0.0
          %3443 = vmatpush1.msra.mxu0 %v3316
          %3444 = vmatprep.subr.mxu0 0.0
          %3445 = vmatpush1.msra.mxu0 %v3315
          %3446 = vmatprep.subr.mxu0 0.0
          %3447 = vmatpush1.msra.mxu0 %v3314
          %3448 = vmatprep.subr.mxu0 0.0
          %3449 = vmatpush1.msra.mxu0 %v3313
          %3450 = vmatprep.subr.mxu0 0.0
          %3451 = vmatpush1.msra.mxu0 %v3312
          %3452 = vmatprep.subr.mxu0 0.0
          %3453 = vmatpush1.msra.mxu0 %v3311
          %3454 = vmatprep.subr.mxu0 0.0
          %3455 = vmatpush1.msra.mxu0 %v3310
          %3456 = vmatprep.subr.mxu0 0.0
          %3457 = vmatpush1.msra.mxu0 %v3309
          %3458 = vmatprep.subr.mxu0 0.0
          %3459 = vmatpush2.msra.mxu0 0.0
          %3460 = vmatprep.subr.mxu0 0.0
          %3461 = vmatpush2.msra.mxu0 0.0
          %3462 = vmatprep.subr.mxu0 0.0
          %3463 = vmatpush2.msra.mxu0 0.0
          %3464 = vmatprep.subr.mxu0 0.0
          %3465 = vmatpush2.msra.mxu0 0.0
          %3466 = vmatprep.subr.mxu0 0.0
          %3467 = vmatpush2.msra.mxu0 0.0
          %3468 = vmatprep.subr.mxu0 0.0
          %3469 = vmatpush2.msra.mxu0 0.0
          %3470 = vmatprep.subr.mxu0 0.0
          %3471 = vmatpush2.msra.mxu0 0.0
          %3472 = vmatprep.subr.mxu0 0.0
          %3473 = vmatpush2.msra.mxu0 0.0
          %3474 = vmatprep.subr.mxu0 0.0
          %3475 = vmatpush2.msra.mxu0 0.0
          %3476 = vmatprep.subr.mxu0 0.0
          %3477 = vmatpush2.msra.mxu0 0.0
          %3478 = vmatprep.subr.mxu0 0.0
          %3479 = vmatpush2.msra.mxu0 0.0
          %3480 = vmatprep.subr.mxu0 0.0
          %3481 = vmatpush2.msra.mxu0 0.0
          %3482 = vmatprep.subr.mxu0 0.0
          %3483 = vmatpush2.msra.mxu0 0.0
          %3484 = vmatprep.subr.mxu0 0.0
          %3485 = vmatpush2.msra.mxu0 0.0
          %3486 = vmatprep.subr.mxu0 0.0
          %3487 = vmatpush2.msra.mxu0 0.0
          %3488 = vmatprep.subr.mxu0 0.0
          %3489 = vmatpush2.msra.mxu0 0.0
          %3490 = vmatprep.mubr.f32.mxu0 0.0
          %3491 = vmatmul.mubr.f32.gmra.mxu0 %v3421
          %v3492 = vpop.f32.mrf.mxu0
          %v3493 = vadd.f32 %v3425, %v3492
          %v3494 = vpop.f32.mrf.mxu0
          %3495 = vdwg.mxu0
          %v3496 = vmul.f32 %v3493, 0.01
          %v3497 = vmax.f32 %v3493, %v3496
          %v3498 = vlaneseq
          %v3499 = vshrl.u32 %v3498, 7
          %v3500 = vsub.s32 2, %v3499
          %v3501 = vrot.slane %v3304, %v3500
          %v3503 = vsel %vm829, %v3497, 0
          %3505 = vmatprep.subr.mxu0 0.0
          %3506 = vmatpush1.msra.mxu0 0.0
          %3507 = vmatprep.subr.mxu0 0.0
          %3508 = vmatpush1.msra.mxu0 0.0
          %3509 = vmatprep.subr.mxu0 0.0
          %3510 = vmatpush1.msra.mxu0 0.0
          %3511 = vmatprep.subr.mxu0 0.0
          %3512 = vmatpush1.msra.mxu0 0.0
          %3513 = vmatprep.subr.mxu0 0.0
          %3514 = vmatpush1.msra.mxu0 0.0
          %3515 = vmatprep.subr.mxu0 0.0
          %3516 = vmatpush1.msra.mxu0 0.0
          %3517 = vmatprep.subr.mxu0 0.0
          %3518 = vmatpush1.msra.mxu0 0.0
          %3519 = vmatprep.subr.mxu0 0.0
          %3520 = vmatpush1.msra.mxu0 0.0
          %3521 = vmatprep.subr.mxu0 0.0
          %3522 = vmatpush1.msra.mxu0 0.0
          %3523 = vmatprep.subr.mxu0 0.0
          %3524 = vmatpush1.msra.mxu0 0.0
          %3525 = vmatprep.subr.mxu0 0.0
          %3526 = vmatpush1.msra.mxu0 0.0
          %3527 = vmatprep.subr.mxu0 0.0
          %3528 = vmatpush1.msra.mxu0 0.0
          %3529 = vmatprep.subr.mxu0 0.0
          %3530 = vmatpush1.msra.mxu0 %v3328
          %3531 = vmatprep.subr.mxu0 0.0
          %3532 = vmatpush1.msra.mxu0 %v3327
          %3533 = vmatprep.subr.mxu0 0.0
          %3534 = vmatpush1.msra.mxu0 %v3326
          %3535 = vmatprep.subr.mxu0 0.0
          %3536 = vmatpush1.msra.mxu0 %v3325
          %3537 = vmatprep.subr.mxu0 0.0
          %3538 = vmatpush2.msra.mxu0 0.0
          %3539 = vmatprep.subr.mxu0 0.0
          %3540 = vmatpush2.msra.mxu0 0.0
          %3541 = vmatprep.subr.mxu0 0.0
          %3542 = vmatpush2.msra.mxu0 0.0
          %3543 = vmatprep.subr.mxu0 0.0
          %3544 = vmatpush2.msra.mxu0 0.0
          %3545 = vmatprep.subr.mxu0 0.0
          %3546 = vmatpush2.msra.mxu0 0.0
          %3547 = vmatprep.subr.mxu0 0.0
          %3548 = vmatpush2.msra.mxu0 0.0
          %3549 = vmatprep.subr.mxu0 0.0
          %3550 = vmatpush2.msra.mxu0 0.0
          %3551 = vmatprep.subr.mxu0 0.0
          %3552 = vmatpush2.msra.mxu0 0.0
          %3553 = vmatprep.subr.mxu0 0.0
          %3554 = vmatpush2.msra.mxu0 0.0
          %3555 = vmatprep.subr.mxu0 0.0
          %3556 = vmatpush2.msra.mxu0 0.0
          %3557 = vmatprep.subr.mxu0 0.0
          %3558 = vmatpush2.msra.mxu0 0.0
          %3559 = vmatprep.subr.mxu0 0.0
          %3560 = vmatpush2.msra.mxu0 0.0
          %3561 = vmatprep.subr.mxu0 0.0
          %3562 = vmatpush2.msra.mxu0 0.0
          %3563 = vmatprep.subr.mxu0 0.0
          %3564 = vmatpush2.msra.mxu0 0.0
          %3565 = vmatprep.subr.mxu0 0.0
          %3566 = vmatpush2.msra.mxu0 0.0
          %3567 = vmatprep.subr.mxu0 0.0
          %3568 = vmatpush2.msra.mxu0 0.0
          %3569 = vmatprep.mubr.f32.mxu0 0.0
          %3570 = vmatmul.mubr.f32.gmra.mxu0 %v3503
          %v3571 = vpop.f32.mrf.mxu0
          %v3572 = vadd.f32 %v3501, %v3571
          %v3573 = vpop.f32.mrf.mxu0
          %3574 = vdwg.mxu0
          %v3575 = vtanh.pop %v3572
          %v3576 = vxor.u32 %v3572, 2147483648
          %v3577 = vmul.f32 %v3576, 1.442695
          %v3578 = vpow.pop %v3577
          %v3579 = vadd.f32 %v3578, 1.0
          %v3580 = vrcp.pop %v3579
          %v3581 = vmul.f32 1.0, %v3580
          %v3582 = vsub.f32 1.0, %v3581
          %3584 = vrot.lane.b32.xlu0 %v3582, 124
          %v3585 = vpop.permute.xlu0 %3584
          %v3587 = vmul.f32 %v3575, %v3585
          %3589 = vrot.lane.b32.xlu0 %v3302, 4
          %v3590 = vpop.permute.xlu0 %3589
          %v3592 = vmul.f32 %v3581, %v3590
          %3594 = vrot.lane.b32.xlu0 %v3592, 124
          %v3595 = vpop.permute.xlu0 %3594
          %v3597 = vadd.f32 %v3587, %v3595
          %vm3598 = vcmask 25600
          %v3599 = vsel %vm3598, %v3597, -inf
          %3600 = vmax.xlane.f32.xlu0 %v3599
          %v3601 = vpop.xlane.xlu0 %3600
          %v3602 = vsub.f32 %v3597, %v3601
          %v3603 = vmul.f32 %v3602, 1.442695
          %v3604 = vpow.pop %v3603
          %v3605 = vsel %vm3598, %v3604, 0.0
          %3606 = vadd.xlane.f32.xlu0 %v3605
          %v3607 = vpop.xlane.xlu0 %3606
          %v3608 = vrcp.pop %v3607
          %v3609 = vmul.f32 %v3604, %v3608
          %3610 = vst.msk [vmem:[#allocation3] sm:$0x3] %vm3598, %v3609
          %3611 = vrot.lane.b32.xlu0 %v3302, 32
          %v3612 = vpop.permute.xlu0 %3611
          %3615 = vrot.lane.b32.xlu0 %v3303, 36
          %v3616 = vpop.permute.xlu0 %3615
          %v3618 = vsel %vm829, %v3299, %v3612
          %vm3619 = vcmask 293888
          %v3620 = vsel %vm3619, %v3618, %v3616
          %v3621 = vlaneseq
          %v3622 = vshrl.u32 %v3621, 7
          %v3623 = vsub.s32 3, %v3622
          %v3624 = vrot.slane %v3304, %v3623
          %vm3625 = vcmask 326656
          %v3627 = vsel %vm3625, %v3620, 0
          %3629 = vmatprep.subr.mxu0 0.0
          %3630 = vmatpush1.msra.mxu0 0.0
          %3631 = vmatprep.subr.mxu0 0.0
          %3632 = vmatpush1.msra.mxu0 0.0
          %3633 = vmatprep.subr.mxu0 0.0
          %3634 = vmatpush1.msra.mxu0 0.0
          %3635 = vmatprep.subr.mxu0 0.0
          %3636 = vmatpush1.msra.mxu0 0.0
          %3637 = vmatprep.subr.mxu0 0.0
          %3638 = vmatpush1.msra.mxu0 0.0
          %3639 = vmatprep.subr.mxu0 0.0
          %3640 = vmatpush1.msra.mxu0 0.0
          %3641 = vmatprep.subr.mxu0 0.0
          %3642 = vmatpush1.msra.mxu0 0.0
          %3643 = vmatprep.subr.mxu0 0.0
          %3644 = vmatpush1.msra.mxu0 0.0
          %3645 = vmatprep.subr.mxu0 0.0
          %3646 = vmatpush1.msra.mxu0 0.0
          %3647 = vmatprep.subr.mxu0 0.0
          %3648 = vmatpush1.msra.mxu0 0.0
          %3649 = vmatprep.subr.mxu0 0.0
          %3650 = vmatpush1.msra.mxu0 0.0
          %3651 = vmatprep.subr.mxu0 0.0
          %3652 = vmatpush1.msra.mxu0 %v3333
          %3653 = vmatprep.subr.mxu0 0.0
          %3654 = vmatpush1.msra.mxu0 %v3332
          %3655 = vmatprep.subr.mxu0 0.0
          %3656 = vmatpush1.msra.mxu0 %v3331
          %3657 = vmatprep.subr.mxu0 0.0
          %3658 = vmatpush1.msra.mxu0 %v3330
          %3659 = vmatprep.subr.mxu0 0.0
          %3660 = vmatpush1.msra.mxu0 %v3329
          %3661 = vmatprep.subr.mxu0 0.0
          %3662 = vmatpush2.msra.mxu0 0.0
          %3663 = vmatprep.subr.mxu0 0.0
          %3664 = vmatpush2.msra.mxu0 0.0
          %3665 = vmatprep.subr.mxu0 0.0
          %3666 = vmatpush2.msra.mxu0 0.0
          %3667 = vmatprep.subr.mxu0 0.0
          %3668 = vmatpush2.msra.mxu0 0.0
          %3669 = vmatprep.subr.mxu0 0.0
          %3670 = vmatpush2.msra.mxu0 0.0
          %3671 = vmatprep.subr.mxu0 0.0
          %3672 = vmatpush2.msra.mxu0 0.0
          %3673 = vmatprep.subr.mxu0 0.0
          %3674 = vmatpush2.msra.mxu0 0.0
          %3675 = vmatprep.subr.mxu0 0.0
          %3676 = vmatpush2.msra.mxu0 0.0
          %3677 = vmatprep.subr.mxu0 0.0
          %3678 = vmatpush2.msra.mxu0 0.0
          %3679 = vmatprep.subr.mxu0 0.0
          %3680 = vmatpush2.msra.mxu0 0.0
          %3681 = vmatprep.subr.mxu0 0.0
          %3682 = vmatpush2.msra.mxu0 0.0
          %3683 = vmatprep.subr.mxu0 0.0
          %3684 = vmatpush2.msra.mxu0 0.0
          %3685 = vmatprep.subr.mxu0 0.0
          %3686 = vmatpush2.msra.mxu0 0.0
          %3687 = vmatprep.subr.mxu0 0.0
          %3688 = vmatpush2.msra.mxu0 0.0
          %3689 = vmatprep.subr.mxu0 0.0
          %3690 = vmatpush2.msra.mxu0 0.0
          %3691 = vmatprep.subr.mxu0 0.0
          %3692 = vmatpush2.msra.mxu0 0.0
          %3693 = vmatprep.mubr.f32.mxu0 0.0
          %3694 = vmatmul.mubr.f32.gmra.mxu0 %v3627
          %v3695 = vpop.f32.mrf.mxu0
          %v3696 = vadd.f32 %v3624, %v3695
          %v3697 = vpop.f32.mrf.mxu0
          %3698 = vdwg.mxu0
          %v3699 = vmul.f32 %v3696, 0.01
          %v3700 = vmax.f32 %v3696, %v3699
          %v3701 = vlaneseq
          %v3702 = vshrl.u32 %v3701, 7
          %v3703 = vsub.s32 4, %v3702
          %v3704 = vrot.slane %v3304, %v3703
          %vm3705 = vcmask 523264
          %v3707 = vsel %vm3705, %v3700, 0
          %3709 = vmatprep.subr.mxu0 0.0
          %3710 = vmatpush1.msra.mxu0 0.0
          %3711 = vmatprep.subr.mxu0 0.0
          %3712 = vmatpush1.msra.mxu0 0.0
          %3713 = vmatprep.subr.mxu0 0.0
          %3714 = vmatpush1.msra.mxu0 0.0
          %3715 = vmatprep.subr.mxu0 0.0
          %3716 = vmatpush1.msra.mxu0 0.0
          %3717 = vmatprep.subr.mxu0 0.0
          %3718 = vmatpush1.msra.mxu0 0.0
          %3719 = vmatprep.subr.mxu0 0.0
          %3720 = vmatpush1.msra.mxu0 0.0
          %3721 = vmatprep.subr.mxu0 0.0
          %3722 = vmatpush1.msra.mxu0 0.0
          %3723 = vmatprep.subr.mxu0 0.0
          %3724 = vmatpush1.msra.mxu0 0.0
          %3725 = vmatprep.subr.mxu0 0.0
          %3726 = vmatpush1.msra.mxu0 %v3341
          %3727 = vmatprep.subr.mxu0 0.0
          %3728 = vmatpush1.msra.mxu0 %v3340
          %3729 = vmatprep.subr.mxu0 0.0
          %3730 = vmatpush1.msra.mxu0 %v3339
          %3731 = vmatprep.subr.mxu0 0.0
          %3732 = vmatpush1.msra.mxu0 %v3338
          %3733 = vmatprep.subr.mxu0 0.0
          %3734 = vmatpush1.msra.mxu0 %v3337
          %3735 = vmatprep.subr.mxu0 0.0
          %3736 = vmatpush1.msra.mxu0 %v3336
          %3737 = vmatprep.subr.mxu0 0.0
          %3738 = vmatpush1.msra.mxu0 %v3335
          %3739 = vmatprep.subr.mxu0 0.0
          %3740 = vmatpush1.msra.mxu0 %v3334
          %3741 = vmatprep.subr.mxu0 0.0
          %3742 = vmatpush2.msra.mxu0 0.0
          %3743 = vmatprep.subr.mxu0 0.0
          %3744 = vmatpush2.msra.mxu0 0.0
          %3745 = vmatprep.subr.mxu0 0.0
          %3746 = vmatpush2.msra.mxu0 0.0
          %3747 = vmatprep.subr.mxu0 0.0
          %3748 = vmatpush2.msra.mxu0 0.0
          %3749 = vmatprep.subr.mxu0 0.0
          %3750 = vmatpush2.msra.mxu0 0.0
          %3751 = vmatprep.subr.mxu0 0.0
          %3752 = vmatpush2.msra.mxu0 0.0
          %3753 = vmatprep.subr.mxu0 0.0
          %3754 = vmatpush2.msra.mxu0 0.0
          %3755 = vmatprep.subr.mxu0 0.0
          %3756 = vmatpush2.msra.mxu0 0.0
          %3757 = vmatprep.subr.mxu0 0.0
          %3758 = vmatpush2.msra.mxu0 0.0
          %3759 = vmatprep.subr.mxu0 0.0
          %3760 = vmatpush2.msra.mxu0 0.0
          %3761 = vmatprep.subr.mxu0 0.0
          %3762 = vmatpush2.msra.mxu0 0.0
          %3763 = vmatprep.subr.mxu0 0.0
          %3764 = vmatpush2.msra.mxu0 0.0
          %3765 = vmatprep.subr.mxu0 0.0
          %3766 = vmatpush2.msra.mxu0 0.0
          %3767 = vmatprep.subr.mxu0 0.0
          %3768 = vmatpush2.msra.mxu0 0.0
          %3769 = vmatprep.subr.mxu0 0.0
          %3770 = vmatpush2.msra.mxu0 0.0
          %3771 = vmatprep.subr.mxu0 0.0
          %3772 = vmatpush2.msra.mxu0 0.0
          %3773 = vmatprep.mubr.f32.mxu0 0.0
          %3774 = vmatmul.mubr.f32.gmra.mxu0 %v3707
          %v3775 = vpop.f32.mrf.mxu0
          %v3776 = vadd.f32 %v3704, %v3775
          %v3777 = vpop.f32.mrf.mxu0
          %3778 = vdwg.mxu0
          %v3779 = vmul.f32 %v3776, 0.01
          %v3780 = vmax.f32 %v3776, %v3779
          %v3781 = vlaneseq
          %v3782 = vshrl.u32 %v3781, 7
          %v3783 = vsub.s32 5, %v3782
          %v3784 = vrot.slane %v3304, %v3783
          %vm3785 = vcmask 64512
          %v3787 = vsel %vm3785, %v3780, 0
          %3789 = vmatprep.subr.mxu0 0.0
          %3790 = vmatpush1.msra.mxu0 0.0
          %3791 = vmatprep.subr.mxu0 0.0
          %3792 = vmatpush1.msra.mxu0 0.0
          %3793 = vmatprep.subr.mxu0 0.0
          %3794 = vmatpush1.msra.mxu0 0.0
          %3795 = vmatprep.subr.mxu0 0.0
          %3796 = vmatpush1.msra.mxu0 0.0
          %3797 = vmatprep.subr.mxu0 0.0
          %3798 = vmatpush1.msra.mxu0 0.0
          %3799 = vmatprep.subr.mxu0 0.0
          %3800 = vmatpush1.msra.mxu0 0.0
          %3801 = vmatprep.subr.mxu0 0.0
          %3802 = vmatpush1.msra.mxu0 0.0
          %3803 = vmatprep.subr.mxu0 0.0
          %3804 = vmatpush1.msra.mxu0 0.0
          %3805 = vmatprep.subr.mxu0 0.0
          %3806 = vmatpush1.msra.mxu0 0.0
          %3807 = vmatprep.subr.mxu0 0.0
          %3808 = vmatpush1.msra.mxu0 0.0
          %3809 = vmatprep.subr.mxu0 0.0
          %3810 = vmatpush1.msra.mxu0 0.0
          %3811 = vmatprep.subr.mxu0 0.0
          %3812 = vmatpush1.msra.mxu0 0.0
          %3813 = vmatprep.subr.mxu0 0.0
          %3814 = vmatpush1.msra.mxu0 0.0
          %3815 = vmatprep.subr.mxu0 0.0
          %3816 = vmatpush1.msra.mxu0 0.0
          %3817 = vmatprep.subr.mxu0 0.0
          %3818 = vmatpush1.msra.mxu0 0.0
          %3819 = vmatprep.subr.mxu0 0.0
          %3820 = vmatpush1.msra.mxu0 %v3342
          %3821 = vmatprep.subr.mxu0 0.0
          %3822 = vmatpush2.msra.mxu0 0.0
          %3823 = vmatprep.subr.mxu0 0.0
          %3824 = vmatpush2.msra.mxu0 0.0
          %3825 = vmatprep.subr.mxu0 0.0
          %3826 = vmatpush2.msra.mxu0 0.0
          %3827 = vmatprep.subr.mxu0 0.0
          %3828 = vmatpush2.msra.mxu0 0.0
          %3829 = vmatprep.subr.mxu0 0.0
          %3830 = vmatpush2.msra.mxu0 0.0
          %3831 = vmatprep.subr.mxu0 0.0
          %3832 = vmatpush2.msra.mxu0 0.0
          %3833 = vmatprep.subr.mxu0 0.0
          %3834 = vmatpush2.msra.mxu0 0.0
          %3835 = vmatprep.subr.mxu0 0.0
          %3836 = vmatpush2.msra.mxu0 0.0
          %3837 = vmatprep.subr.mxu0 0.0
          %3838 = vmatpush2.msra.mxu0 0.0
          %3839 = vmatprep.subr.mxu0 0.0
          %3840 = vmatpush2.msra.mxu0 0.0
          %3841 = vmatprep.subr.mxu0 0.0
          %3842 = vmatpush2.msra.mxu0 0.0
          %3843 = vmatprep.subr.mxu0 0.0
          %3844 = vmatpush2.msra.mxu0 0.0
          %3845 = vmatprep.subr.mxu0 0.0
          %3846 = vmatpush2.msra.mxu0 0.0
          %3847 = vmatprep.subr.mxu0 0.0
          %3848 = vmatpush2.msra.mxu0 0.0
          %3849 = vmatprep.subr.mxu0 0.0
          %3850 = vmatpush2.msra.mxu0 0.0
          %3851 = vmatprep.subr.mxu0 0.0
          %3852 = vmatpush2.msra.mxu0 0.0
          %3853 = vmatprep.mubr.f32.mxu0 0.0
          %3854 = vmatmul.mubr.f32.gmra.mxu0 %v3787
          %v3855 = vpop.f32.mrf.mxu0
          %v3856 = vadd.f32 %v3784, %v3855
          %v3857 = vpop.f32.mrf.mxu0
          %3858 = vdwg.mxu0
          %vm3859 = vcmask 1024
          %3860 = vst.msk [vmem:[%s21] sm:$0x3] %vm3859, %v3856
        $region108: #{attn_a2c_forward.1} parent=99 // pred_fallthru
          _
        // Predicated region
        $region109: #{attn_a2c_forward.1} parent=99 // pred_check
          %p3861 = pneg %p517
        $region110: #{attn_a2c_forward.1} parent=99 // pred_check_branch
          %3863 = sbr.rel (%p3861) target = $region112
        $region111: #{attn_a2c_forward.1} parent=99 // pred_region
          %s3865 = ssub.s32 32, 32
          %3866 = vsyncadd [#allocation4], %s3865
          %s3868 = sshll.u32 [#allocation3], 4
          %s3869 = int_to_ptr.vmem [resolvable:$true] %s3868
          %3871 = dma.vmem_to_hbm [thread:$0]  %s3869, 32, %s20, [#allocation4]
        $region112: #{attn_a2c_forward.1} parent=99 // pred_fallthru
          _
        // Predicated region
        $region113: #{attn_a2c_forward.1} parent=99 // pred_check
          %p3872 = pneg %p538
        $region114: #{attn_a2c_forward.1} parent=99 // pred_check_branch
          %3874 = sbr.rel (%p3872) target = $region116
        $region115: #{attn_a2c_forward.1} parent=99 // pred_region
          _
        $region116: #{attn_a2c_forward.1} parent=99 // pred_fallthru
          _
        // Predicated region
        $region117: #{attn_a2c_forward.1} parent=99 // pred_check
          %p3875 = pneg %p517
        $region118: #{attn_a2c_forward.1} parent=99 // pred_check_branch
          %3877 = sbr.rel (%p3875) target = $region120
        $region119: #{attn_a2c_forward.1} parent=99 // pred_region
          %3878 = dma.done [#allocation4], 32
        $region120: #{attn_a2c_forward.1} parent=99 // pred_fallthru
          _
        // Predicated region
        $region121: #{attn_a2c_forward.1} parent=99 // pred_check
          %p3879 = pneg %p538
        $region122: #{attn_a2c_forward.1} parent=99 // pred_check_branch
          %3881 = sbr.rel (%p3879) target = $region124
        $region123: #{attn_a2c_forward.1} parent=99 // pred_region
          _
        $region124: #{attn_a2c_forward.1} parent=99 // pred_fallthru
          _
      $region100: #{attn_a2c_forward.1} parent=5 // pred_fallthru
        _
      %p3882 = scmp.le.s32.totalorder 2, %s29
      // Predicated region
      $region125: #{attn_a2c_forward.1} parent=5 // pred_check
        %p3883 = pneg %p3882
      $region126: #{attn_a2c_forward.1} parent=5 // pred_check_branch
        %3885 = sbr.rel (%p3883) target = $region128
      $region127: #{attn_a2c_forward.1} parent=5 // pred_region
        %s3886 = ssub.s32 %s29, 2
      $region128: #{attn_a2c_forward.1} parent=5 // pred_fallthru
        _
    $region6: #{attn_a2c_forward.1} parent=1 // loop_footer
      %s33 = sadd.s32 1, %s29
    $region7: #{attn_a2c_forward.1} parent=1 // loop_footer_branch
      %28 = sbr.rel target = $region3
    $region8: #{attn_a2c_forward.1} parent=1 // loop_exit
      _
    %3887 = vsyncpa [#allocation4], 1
    %s3888 = scalar_lea.sflag [#allocation4], 1
    %3889 = vsyncpa %s3888, 1

</llo_original>
